<compile_context>
chip_gen: v7x
topology: tpu7x:2x2x1
jax: 0.10.0
libtpu: 0.0.40
codegen_flags: <defaults>
</compile_context>

<pallas_src>
import functools

import jax
import jax.numpy as jnp
from jax.experimental import pallas as pl
from jax.experimental.pallas import tpu as pltpu

LEAKY_SLOPE = 0.01
BN_EPS = 1e-5


def _round_up(x, m):
    return (x + m - 1) // m * m


# ------------------------------------------------------------------
# Pallas kernel 1: matmul + bias, weights/bias resident in VMEM
#   (used for the 4x4/s2 downsample conv via im2col and the 1x1 fft convs)
# ------------------------------------------------------------------
def _matmul_bias_kernel(a_ref, b_ref, bias_ref, o_ref):
    acc = jnp.dot(a_ref[...], b_ref[...], preferred_element_type=jnp.float32)
    o_ref[...] = (acc + bias_ref[...]).astype(o_ref.dtype)


def matmul_bias(a, b, bias, *, out_dtype=jnp.float32, tm=512):
    """a: (M, K), b: (K, N), bias: (N,) -> a @ b + bias, (M, N) out_dtype.

    bf16 operands, f32 accumulate. K and N are kept at full extent (weights are small and
    stay VMEM-resident); only M is tiled/streamed."""
    M, K = a.shape
    K2, N = b.shape
    assert K2 == K
    a = a.astype(jnp.bfloat16)
    b = b.astype(jnp.bfloat16)
    bias = bias.astype(jnp.float32).reshape(1, N)

    tm_eff = min(tm, _round_up(M, 8))
    Mp = _round_up(M, tm_eff)
    if Mp != M:
        a = jnp.pad(a, ((0, Mp - M), (0, 0)))

    out = pl.pallas_call(
        _matmul_bias_kernel,
        out_shape=jax.ShapeDtypeStruct((Mp, N), out_dtype),
        grid_spec=pltpu.PrefetchScalarGridSpec(
            num_scalar_prefetch=0,
            grid=(Mp // tm_eff,),
            in_specs=[
                pl.BlockSpec((tm_eff, K), lambda i: (i, 0)),   # streamed A
                pl.BlockSpec((K, N), lambda i: (0, 0)),        # resident weights
                pl.BlockSpec((1, N), lambda i: (0, 0)),        # resident bias
            ],
            out_specs=pl.BlockSpec((tm_eff, N), lambda i: (i, 0)),
        ),
        compiler_params=pltpu.CompilerParams(dimension_semantics=("parallel",)),
    )(a, b, bias)
    if Mp != M:
        out = out[:M]
    return out


# ------------------------------------------------------------------
# Pallas kernel 2: 3x3 conv (pad=1, stride=1) with im2col fused in-kernel
#   9 shifted dots over a spatially pre-padded NHWC block; weights resident.
# ------------------------------------------------------------------
def _conv3x3_kernel(x_ref, w_ref, b_ref, o_ref, *, H, W):
    # x_ref: (H+2, W+2, C) bf16 ; w_ref: (9, C, Cout) bf16 ; b_ref: (1, Cout) f32
    cout = w_ref.shape[-1]
    c = x_ref.shape[-1]
    acc = jnp.zeros((H * W, cout), jnp.float32)
    for di in range(3):
        for dj in range(3):
            patch = x_ref[pl.ds(di, H), pl.ds(dj, W), :]           # (H, W, C)
            acc = acc + jnp.dot(patch.reshape(H * W, c),
                                w_ref[di * 3 + dj],
                                preferred_element_type=jnp.float32)
    acc = acc + b_ref[...]
    o_ref[...] = acc.reshape(H, W, cout).astype(o_ref.dtype)


def conv3x3(x_nhwc, w, b, *, out_dtype=jnp.bfloat16):
    """x: (N, H, W, C); w: (9, C, Cout); b: (Cout,) -> (N, H, W, Cout)."""
    N, H, W, C = x_nhwc.shape
    Cout = w.shape[-1]
    x_pad = jnp.pad(x_nhwc, ((0, 0), (1, 1), (1, 1), (0, 0))).astype(jnp.bfloat16)
    kern = functools.partial(_conv3x3_kernel, H=H, W=W)
    return pl.pallas_call(
        kern,
        out_shape=jax.ShapeDtypeStruct((N, H, W, Cout), out_dtype),
        grid_spec=pltpu.PrefetchScalarGridSpec(
            num_scalar_prefetch=0,
            grid=(N,),
            in_specs=[
                pl.BlockSpec((None, H + 2, W + 2, C), lambda n: (n, 0, 0, 0)),
                pl.BlockSpec((9, C, Cout), lambda n: (0, 0, 0)),    # resident weights
                pl.BlockSpec((1, Cout), lambda n: (0, 0)),          # resident bias
            ],
            out_specs=pl.BlockSpec((None, H, W, Cout), lambda n: (n, 0, 0, 0)),
        ),
        compiler_params=pltpu.CompilerParams(dimension_semantics=("parallel",)),
    )(x_pad, w.astype(jnp.bfloat16), b.astype(jnp.float32).reshape(1, Cout))


# ------------------------------------------------------------------
# Pallas kernel 3: fused per-channel affine (BN) + LeakyReLU, lane-dense layout
# ------------------------------------------------------------------
def _affine_leaky_kernel(x_ref, s_ref, b_ref, o_ref):
    y = x_ref[...].astype(jnp.float32) * s_ref[...] + b_ref[...]
    o_ref[...] = jnp.where(y > 0, y, LEAKY_SLOPE * y).astype(o_ref.dtype)


def affine_leaky(x, scale, shift, *, out_dtype=jnp.bfloat16, tm=512):
    """x: (M, C); scale/shift: (C,) -> leaky_relu(x * scale + shift) as out_dtype."""
    M, C = x.shape
    # Lane-dense view: fold r rows into the lane axis so the minor dim is 128-wide.
    r = 1
    if 128 % C == 0 and M % (128 // C) == 0:
        r = 128 // C
    Mr, Cr = M // r, C * r
    xr = x.reshape(Mr, Cr)
    s = jnp.tile(scale.astype(jnp.float32), r).reshape(1, Cr)
    b = jnp.tile(shift.astype(jnp.float32), r).reshape(1, Cr)

    tm_eff = min(tm, _round_up(Mr, 8))
    Mp = _round_up(Mr, tm_eff)
    if Mp != Mr:
        xr = jnp.pad(xr, ((0, Mp - Mr), (0, 0)))

    out = pl.pallas_call(
        _affine_leaky_kernel,
        out_shape=jax.ShapeDtypeStruct((Mp, Cr), out_dtype),
        grid_spec=pltpu.PrefetchScalarGridSpec(
            num_scalar_prefetch=0,
            grid=(Mp // tm_eff,),
            in_specs=[
                pl.BlockSpec((tm_eff, Cr), lambda i: (i, 0)),
                pl.BlockSpec((1, Cr), lambda i: (0, 0)),
                pl.BlockSpec((1, Cr), lambda i: (0, 0)),
            ],
            out_specs=pl.BlockSpec((tm_eff, Cr), lambda i: (i, 0)),
        ),
        compiler_params=pltpu.CompilerParams(dimension_semantics=("parallel",)),
    )(xr, s, b)
    if Mp != Mr:
        out = out[:Mr]
    return out.reshape(M, C)


# ------------------------------------------------------------------
# Glue: im2col (downsample conv only), BN stats, FFT branch
# ------------------------------------------------------------------
def im2col(x_nhwc, kh, kw, stride, pad):
    """Extract conv patches; returns ((N*Ho*Wo, kh*kw*C), (N, Ho, Wo))."""
    N, H, W, C = x_nhwc.shape
    x_p = jnp.pad(x_nhwc, ((0, 0), (pad, pad), (pad, pad), (0, 0)))
    Ho = (H + 2 * pad - kh) // stride + 1
    Wo = (W + 2 * pad - kw) // stride + 1
    cols = []
    for i in range(kh):
        for j in range(kw):
            cols.append(x_p[:, i:i + stride * Ho:stride, j:j + stride * Wo:stride, :])
    patches = jnp.stack(cols, axis=3)                 # (N, Ho, Wo, kh*kw, C)
    return patches.reshape(N * Ho * Wo, kh * kw * C), (N, Ho, Wo)


def bn_leaky(flat, gamma, beta, *, out_dtype):
    """flat: (rows, C). Training-mode BN (batch stats) + LeakyReLU (Pallas kernel)."""
    xf = flat.astype(jnp.float32)
    mean = jnp.mean(xf, axis=0)
    var = jnp.var(xf, axis=0)                         # biased, matches PyTorch training norm
    s = gamma / jnp.sqrt(var + BN_EPS)
    sh = beta - mean * s
    return affine_leaky(flat, s, sh, out_dtype=out_dtype)


# ------------------------------------------------------------------
# Down.forward
# ------------------------------------------------------------------
def down_forward(x_nchw, p):
    x = jnp.transpose(x_nchw, (0, 2, 3, 1)).astype(jnp.float32)   # -> NHWC

    # --- downsample: Conv2d(Cin, Cin, k=4, s=2, pad=1), no activation ---
    cols, (N, H2, W2) = im2col(x.astype(jnp.bfloat16), 4, 4, 2, 1)
    x_d = matmul_bias(cols, p["down_w"], p["down_b"],
                      out_dtype=jnp.float32).reshape(N, H2, W2, -1)

    # --- DoubleConv spatial branch: (conv3x3 -> BN -> LeakyReLU) x 2 ---
    h = conv3x3(x_d, p["c1_w"], p["c1_b"], out_dtype=jnp.bfloat16)
    cmid = h.shape[-1]
    h = bn_leaky(h.reshape(-1, cmid), p["bn1_g"], p["bn1_b"], out_dtype=jnp.bfloat16)
    h = h.reshape(N, H2, W2, cmid)
    h = conv3x3(h, p["c2_w"], p["c2_b"], out_dtype=jnp.bfloat16)
    c_sp = h.shape[-1]
    m = bn_leaky(h.reshape(-1, c_sp), p["bn2_g"], p["bn2_b"],
                 out_dtype=jnp.float32).reshape(N, H2, W2, c_sp)

    # --- DoubleConv FFT branch (1x1 convs are plain matmuls) ---
    yf = jnp.fft.rfft2(x_d, axes=(1, 2), norm="ortho")            # (N, H2, Wf, Cin) complex
    y_cat = jnp.concatenate([yf.real, yf.imag], axis=-1)          # channels: [real | imag]
    Nn, Hf, Wf, C2 = y_cat.shape

    f = matmul_bias(y_cat.reshape(Nn * Hf * Wf, C2), p["f1_w"], p["f1_b"],
                    out_dtype=jnp.bfloat16)
    f = bn_leaky(f, p["fbn1_g"], p["fbn1_b"], out_dtype=jnp.bfloat16)
    f = matmul_bias(f, p["f2_w"], p["f2_b"], out_dtype=jnp.bfloat16)
    f = bn_leaky(f, p["fbn2_g"], p["fbn2_b"], out_dtype=jnp.float32)
    f = f.reshape(Nn, Hf, Wf, -1)

    c_out = f.shape[-1] // 2
    y_cplx = f[..., :c_out] + 1j * f[..., c_out:]
    y_sp = jnp.fft.irfft2(y_cplx, s=(H2, W2), axes=(1, 2), norm="ortho")

    out = m + y_sp.astype(jnp.float32)
    return jnp.transpose(out, (0, 3, 1, 2))                       # back to NCHW


# ------------------------------------------------------------------
# Deterministic parameter init
# ------------------------------------------------------------------
def init_params(key, cin, cout):
    cmid = cout
    ks = jax.random.split(key, 10)

    def mat_w(k, kin, co):                 # (K, Cout) matmul layout
        return 0.1 * jax.random.normal(k, (kin, co), jnp.float32)

    def conv3_w(k, ci, co):                # (9, Cin, Cout) fused-im2col layout
        return 0.1 * jax.random.normal(k, (9, ci, co), jnp.float32)

    def bias(k, co):
        return 0.1 * jax.random.normal(k, (co,), jnp.float32)

    return {
        "down_w": mat_w(ks[0], 4 * 4 * cin, cin), "down_b": bias(ks[1], cin),
        "c1_w": conv3_w(ks[2], cin, cmid), "c1_b": bias(ks[3], cmid),
        "bn1_g": jnp.ones((cmid,), jnp.float32), "bn1_b": jnp.zeros((cmid,), jnp.float32),
        "c2_w": conv3_w(ks[4], cmid, cout), "c2_b": bias(ks[5], cout),
        "bn2_g": jnp.ones((cout,), jnp.float32), "bn2_b": jnp.zeros((cout,), jnp.float32),
        "f1_w": mat_w(ks[6], 2 * cin, 2 * cmid), "f1_b": bias(ks[7], 2 * cmid),
        "fbn1_g": jnp.ones((2 * cmid,), jnp.float32), "fbn1_b": jnp.zeros((2 * cmid,), jnp.float32),
        "f2_w": mat_w(ks[8], 2 * cmid, 2 * cout), "f2_b": bias(ks[9], 2 * cout),
        "fbn2_g": jnp.ones((2 * cout,), jnp.float32), "fbn2_b": jnp.zeros((2 * cout,), jnp.float32),
    }


if __name__ == "__main__":
    key = jax.random.PRNGKey(0)
    k_x, k_p = jax.random.split(key)

    batch, cin, cout, hw = 2, 4, 8, 16
    x = jax.random.normal(k_x, (batch, cin, hw, hw), jnp.float32)   # NCHW, like PyTorch
    params = init_params(k_p, cin, cout)

    fwd = jax.jit(down_forward)
    out = fwd(x, params)
    jax.block_until_ready(out)

    assert out.shape == (batch, cout, hw // 2, hw // 2), out.shape
    assert out.dtype == jnp.float32
    print("KERNEL_OK")
</pallas_src>

<mosaic_0001>
module attributes {stable_mosaic.version = 11 : i64} {
  func.func @_matmul_bias_kernel(%arg0: i32, %arg1: memref<128x64xbf16, #tpu.memory_space<vmem>>, %arg2: memref<64x4xbf16, #tpu.memory_space<vmem>>, %arg3: memref<1x4xf32, #tpu.memory_space<vmem>>, %arg4: memref<128x4xf32, #tpu.memory_space<vmem>>) attributes {dimension_semantics = [#tpu.dimension_semantics<parallel>], iteration_bounds = array<i64: 1>, scalar_prefetch = 0 : i64, scratch_operands = 0 : i64, tpu.core_type = #tpu.core_type<tc>, window_params = [{transform_indices = @transform_0, window_bounds = array<i64: 128, 64>}, {pipeline_mode = #tpu.pipeline_mode<synchronous>, transform_indices = @transform_1, window_bounds = array<i64: 64, 4>}, {pipeline_mode = #tpu.pipeline_mode<synchronous>, transform_indices = @transform_2, window_bounds = array<i64: 1, 4>}, {transform_indices = @transform_3, window_bounds = array<i64: 128, 4>}]} {
    %c0 = arith.constant 0 : index
    %c0_0 = arith.constant 0 : index
    %0 = vector.load %arg1[%c0, %c0_0] : memref<128x64xbf16, #tpu.memory_space<vmem>>, vector<128x64xbf16>
    %c0_1 = arith.constant 0 : index
    %c0_2 = arith.constant 0 : index
    %1 = vector.load %arg2[%c0_1, %c0_2] : memref<64x4xbf16, #tpu.memory_space<vmem>>, vector<64x4xbf16>
    %cst = arith.constant dense<0.000000e+00> : vector<128x4xf32>
    %2 = tpu.matmul %0, %1, %cst {dimension_numbers = #tpu.dot_dimension_numbers<[1], [0], [0], [1], [0, 0, 1, 1], [], []>} : vector<128x64xbf16>, vector<64x4xbf16>, vector<128x4xf32> -> vector<128x4xf32>
    %c0_3 = arith.constant 0 : index
    %c0_4 = arith.constant 0 : index
    %3 = vector.load %arg3[%c0_3, %c0_4] : memref<1x4xf32, #tpu.memory_space<vmem>>, vector<1x4xf32>
    %4 = vector.broadcast %3 : vector<1x4xf32> to vector<128x4xf32>
    %5 = arith.addf %2, %4 : vector<128x4xf32>
    %c0_5 = arith.constant 0 : index
    %c0_6 = arith.constant 0 : index
    %6 = vector.load %arg4[%c0_5, %c0_6] : memref<128x4xf32, #tpu.memory_space<vmem>>, vector<128x4xf32>
    tpu.vector_store %arg4[%c0_5, %c0_6], %5 {strides = array<i32>} : memref<128x4xf32, #tpu.memory_space<vmem>>, vector<128x4xf32>,
    return
  }
  func.func @transform_0(%arg0: i32) -> (i32, i32) {
    %c0_i32 = arith.constant 0 : i32
    %c0_i32_0 = arith.constant 0 : i32
    return %arg0, %c0_i32 : i32, i32
  }
  func.func @transform_1(%arg0: i32) -> (i32, i32) {
    %c0_i32 = arith.constant 0 : i32
    %c0_i32_0 = arith.constant 0 : i32
    %c0_i32_1 = arith.constant 0 : i32
    return %c0_i32, %c0_i32_0 : i32, i32
  }
  func.func @transform_2(%arg0: i32) -> (i32, i32) {
    %c0_i32 = arith.constant 0 : i32
    %c0_i32_0 = arith.constant 0 : i32
    %c0_i32_1 = arith.constant 0 : i32
    return %c0_i32, %c0_i32_0 : i32, i32
  }
  func.func @transform_3(%arg0: i32) -> (i32, i32) {
    %c0_i32 = arith.constant 0 : i32
    %c0_i32_0 = arith.constant 0 : i32
    return %arg0, %c0_i32 : i32, i32
  }
}

module attributes {stable_mosaic.version = 11 : i64} {
  func.func @_matmul_bias_kernel(%arg0: i32, %arg1: memref<80x8xbf16, #tpu.memory_space<vmem>>, %arg2: memref<8x16xbf16, #tpu.memory_space<vmem>>, %arg3: memref<1x16xf32, #tpu.memory_space<vmem>>, %arg4: memref<80x16xbf16, #tpu.memory_space<vmem>>) attributes {dimension_semantics = [#tpu.dimension_semantics<parallel>], iteration_bounds = array<i64: 1>, scalar_prefetch = 0 : i64, scratch_operands = 0 : i64, tpu.core_type = #tpu.core_type<tc>, window_params = [{transform_indices = @transform_0, window_bounds = array<i64: 80, 8>}, {pipeline_mode = #tpu.pipeline_mode<synchronous>, transform_indices = @transform_1, window_bounds = array<i64: 8, 16>}, {pipeline_mode = #tpu.pipeline_mode<synchronous>, transform_indices = @transform_2, window_bounds = array<i64: 1, 16>}, {transform_indices = @transform_3, window_bounds = array<i64: 80, 16>}]} {
    %c0 = arith.constant 0 : index
    %c0_0 = arith.constant 0 : index
    %0 = vector.load %arg1[%c0, %c0_0] : memref<80x8xbf16, #tpu.memory_space<vmem>>, vector<80x8xbf16>
    %c0_1 = arith.constant 0 : index
    %c0_2 = arith.constant 0 : index
    %1 = vector.load %arg2[%c0_1, %c0_2] : memref<8x16xbf16, #tpu.memory_space<vmem>>, vector<8x16xbf16>
    %cst = arith.constant dense<0.000000e+00> : vector<80x16xf32>
    %2 = tpu.matmul %0, %1, %cst {dimension_numbers = #tpu.dot_dimension_numbers<[1], [0], [0], [1], [0, 0, 1, 1], [], []>} : vector<80x8xbf16>, vector<8x16xbf16>, vector<80x16xf32> -> vector<80x16xf32>
    %c0_3 = arith.constant 0 : index
    %c0_4 = arith.constant 0 : index
    %3 = vector.load %arg3[%c0_3, %c0_4] : memref<1x16xf32, #tpu.memory_space<vmem>>, vector<1x16xf32>
    %4 = vector.broadcast %3 : vector<1x16xf32> to vector<80x16xf32>
    %5 = arith.addf %2, %4 : vector<80x16xf32>
    %6 = arith.truncf %5 : vector<80x16xf32> to vector<80x16xbf16>
    %c0_5 = arith.constant 0 : index
    %c0_6 = arith.constant 0 : index
    %7 = vector.load %arg4[%c0_5, %c0_6] : memref<80x16xbf16, #tpu.memory_space<vmem>>, vector<80x16xbf16>
    tpu.vector_store %arg4[%c0_5, %c0_6], %6 {strides = array<i32>} : memref<80x16xbf16, #tpu.memory_space<vmem>>, vector<80x16xbf16>,
    return
  }
  func.func @transform_0(%arg0: i32) -> (i32, i32) {
    %c0_i32 = arith.constant 0 : i32
    %c0_i32_0 = arith.constant 0 : i32
    return %arg0, %c0_i32 : i32, i32
  }
  func.func @transform_1(%arg0: i32) -> (i32, i32) {
    %c0_i32 = arith.constant 0 : i32
    %c0_i32_0 = arith.constant 0 : i32
    %c0_i32_1 = arith.constant 0 : i32
    return %c0_i32, %c0_i32_0 : i32, i32
  }
  func.func @transform_2(%arg0: i32) -> (i32, i32) {
    %c0_i32 = arith.constant 0 : i32
    %c0_i32_0 = arith.constant 0 : i32
    %c0_i32_1 = arith.constant 0 : i32
    return %c0_i32, %c0_i32_0 : i32, i32
  }
  func.func @transform_3(%arg0: i32) -> (i32, i32) {
    %c0_i32 = arith.constant 0 : i32
    %c0_i32_0 = arith.constant 0 : i32
    return %arg0, %c0_i32 : i32, i32
  }
}

module attributes {stable_mosaic.version = 11 : i64} {
  func.func @_affine_leaky_kernel(%arg0: i32, %arg1: memref<16x128xbf16, #tpu.memory_space<vmem>>, %arg2: memref<1x128xf32, #tpu.memory_space<vmem>>, %arg3: memref<1x128xf32, #tpu.memory_space<vmem>>, %arg4: memref<16x128xbf16, #tpu.memory_space<vmem>>) attributes {dimension_semantics = [#tpu.dimension_semantics<parallel>], iteration_bounds = array<i64: 1>, scalar_prefetch = 0 : i64, scratch_operands = 0 : i64, tpu.core_type = #tpu.core_type<tc>, window_params = [{transform_indices = @transform_0, window_bounds = array<i64: 16, 128>}, {pipeline_mode = #tpu.pipeline_mode<synchronous>, transform_indices = @transform_1, window_bounds = array<i64: 1, 128>}, {pipeline_mode = #tpu.pipeline_mode<synchronous>, transform_indices = @transform_2, window_bounds = array<i64: 1, 128>}, {transform_indices = @transform_3, window_bounds = array<i64: 16, 128>}]} {
    %c0 = arith.constant 0 : index
    %c0_0 = arith.constant 0 : index
    %0 = vector.load %arg1[%c0, %c0_0] : memref<16x128xbf16, #tpu.memory_space<vmem>>, vector<16x128xbf16>
    %1 = arith.extf %0 : vector<16x128xbf16> to vector<16x128xf32>
    %c0_1 = arith.constant 0 : index
    %c0_2 = arith.constant 0 : index
    %2 = vector.load %arg2[%c0_1, %c0_2] : memref<1x128xf32, #tpu.memory_space<vmem>>, vector<1x128xf32>
    %3 = vector.broadcast %2 : vector<1x128xf32> to vector<16x128xf32>
    %4 = arith.mulf %1, %3 : vector<16x128xf32>
    %c0_3 = arith.constant 0 : index
    %c0_4 = arith.constant 0 : index
    %5 = vector.load %arg3[%c0_3, %c0_4] : memref<1x128xf32, #tpu.memory_space<vmem>>, vector<1x128xf32>
    %6 = vector.broadcast %5 : vector<1x128xf32> to vector<16x128xf32>
    %7 = arith.addf %4, %6 : vector<16x128xf32>
    %cst = arith.constant 0.000000e+00 : f32
    %8 = vector.broadcast %cst : f32 to vector<16x128xf32>
    %9 = arith.cmpf ogt, %7, %8 : vector<16x128xf32>
    %cst_5 = arith.constant 0.00999999977 : f32
    %10 = vector.broadcast %cst_5 : f32 to vector<16x128xf32>
    %11 = arith.mulf %10, %7 : vector<16x128xf32>
    %12 = arith.select %9, %7, %11 : vector<16x128xi1>, vector<16x128xf32>
    %13 = arith.truncf %12 : vector<16x128xf32> to vector<16x128xbf16>
    %c0_6 = arith.constant 0 : index
    %c0_7 = arith.constant 0 : index
    %14 = vector.load %arg4[%c0_6, %c0_7] : memref<16x128xbf16, #tpu.memory_space<vmem>>, vector<16x128xbf16>
    tpu.vector_store %arg4[%c0_6, %c0_7], %13 {strides = array<i32>} : memref<16x128xbf16, #tpu.memory_space<vmem>>, vector<16x128xbf16>,
    return
  }
  func.func @transform_0(%arg0: i32) -> (i32, i32) {
    %c0_i32 = arith.constant 0 : i32
    %c0_i32_0 = arith.constant 0 : i32
    return %arg0, %c0_i32 : i32, i32
  }
  func.func @transform_1(%arg0: i32) -> (i32, i32) {
    %c0_i32 = arith.constant 0 : i32
    %c0_i32_0 = arith.constant 0 : i32
    %c0_i32_1 = arith.constant 0 : i32
    return %c0_i32, %c0_i32_0 : i32, i32
  }
  func.func @transform_2(%arg0: i32) -> (i32, i32) {
    %c0_i32 = arith.constant 0 : i32
    %c0_i32_0 = arith.constant 0 : i32
    %c0_i32_1 = arith.constant 0 : i32
    return %c0_i32, %c0_i32_0 : i32, i32
  }
  func.func @transform_3(%arg0: i32) -> (i32, i32) {
    %c0_i32 = arith.constant 0 : i32
    %c0_i32_0 = arith.constant 0 : i32
    return %arg0, %c0_i32 : i32, i32
  }
}

module attributes {stable_mosaic.version = 11 : i64} {
  func.func @_affine_leaky_kernel(%arg0: i32, %arg1: memref<16x128xbf16, #tpu.memory_space<vmem>>, %arg2: memref<1x128xf32, #tpu.memory_space<vmem>>, %arg3: memref<1x128xf32, #tpu.memory_space<vmem>>, %arg4: memref<16x128xf32, #tpu.memory_space<vmem>>) attributes {dimension_semantics = [#tpu.dimension_semantics<parallel>], iteration_bounds = array<i64: 1>, scalar_prefetch = 0 : i64, scratch_operands = 0 : i64, tpu.core_type = #tpu.core_type<tc>, window_params = [{transform_indices = @transform_0, window_bounds = array<i64: 16, 128>}, {pipeline_mode = #tpu.pipeline_mode<synchronous>, transform_indices = @transform_1, window_bounds = array<i64: 1, 128>}, {pipeline_mode = #tpu.pipeline_mode<synchronous>, transform_indices = @transform_2, window_bounds = array<i64: 1, 128>}, {transform_indices = @transform_3, window_bounds = array<i64: 16, 128>}]} {
    %c0 = arith.constant 0 : index
    %c0_0 = arith.constant 0 : index
    %0 = vector.load %arg1[%c0, %c0_0] : memref<16x128xbf16, #tpu.memory_space<vmem>>, vector<16x128xbf16>
    %1 = arith.extf %0 : vector<16x128xbf16> to vector<16x128xf32>
    %c0_1 = arith.constant 0 : index
    %c0_2 = arith.constant 0 : index
    %2 = vector.load %arg2[%c0_1, %c0_2] : memref<1x128xf32, #tpu.memory_space<vmem>>, vector<1x128xf32>
    %3 = vector.broadcast %2 : vector<1x128xf32> to vector<16x128xf32>
    %4 = arith.mulf %1, %3 : vector<16x128xf32>
    %c0_3 = arith.constant 0 : index
    %c0_4 = arith.constant 0 : index
    %5 = vector.load %arg3[%c0_3, %c0_4] : memref<1x128xf32, #tpu.memory_space<vmem>>, vector<1x128xf32>
    %6 = vector.broadcast %5 : vector<1x128xf32> to vector<16x128xf32>
    %7 = arith.addf %4, %6 : vector<16x128xf32>
    %cst = arith.constant 0.000000e+00 : f32
    %8 = vector.broadcast %cst : f32 to vector<16x128xf32>
    %9 = arith.cmpf ogt, %7, %8 : vector<16x128xf32>
    %cst_5 = arith.constant 0.00999999977 : f32
    %10 = vector.broadcast %cst_5 : f32 to vector<16x128xf32>
    %11 = arith.mulf %10, %7 : vector<16x128xf32>
    %12 = arith.select %9, %7, %11 : vector<16x128xi1>, vector<16x128xf32>
    %c0_6 = arith.constant 0 : index
    %c0_7 = arith.constant 0 : index
    %13 = vector.load %arg4[%c0_6, %c0_7] : memref<16x128xf32, #tpu.memory_space<vmem>>, vector<16x128xf32>
    tpu.vector_store %arg4[%c0_6, %c0_7], %12 {strides = array<i32>} : memref<16x128xf32, #tpu.memory_space<vmem>>, vector<16x128xf32>,
    return
  }
  func.func @transform_0(%arg0: i32) -> (i32, i32) {
    %c0_i32 = arith.constant 0 : i32
    %c0_i32_0 = arith.constant 0 : i32
    return %arg0, %c0_i32 : i32, i32
  }
  func.func @transform_1(%arg0: i32) -> (i32, i32) {
    %c0_i32 = arith.constant 0 : i32
    %c0_i32_0 = arith.constant 0 : i32
    %c0_i32_1 = arith.constant 0 : i32
    return %c0_i32, %c0_i32_0 : i32, i32
  }
  func.func @transform_2(%arg0: i32) -> (i32, i32) {
    %c0_i32 = arith.constant 0 : i32
    %c0_i32_0 = arith.constant 0 : i32
    %c0_i32_1 = arith.constant 0 : i32
    return %c0_i32, %c0_i32_0 : i32, i32
  }
  func.func @transform_3(%arg0: i32) -> (i32, i32) {
    %c0_i32 = arith.constant 0 : i32
    %c0_i32_0 = arith.constant 0 : i32
    return %arg0, %c0_i32 : i32, i32
  }
}

module attributes {stable_mosaic.version = 11 : i64} {
  func.func @_matmul_bias_kernel(%arg0: i32, %arg1: memref<80x16xbf16, #tpu.memory_space<vmem>>, %arg2: memref<16x16xbf16, #tpu.memory_space<vmem>>, %arg3: memref<1x16xf32, #tpu.memory_space<vmem>>, %arg4: memref<80x16xbf16, #tpu.memory_space<vmem>>) attributes {dimension_semantics = [#tpu.dimension_semantics<parallel>], iteration_bounds = array<i64: 1>, scalar_prefetch = 0 : i64, scratch_operands = 0 : i64, tpu.core_type = #tpu.core_type<tc>, window_params = [{transform_indices = @transform_0, window_bounds = array<i64: 80, 16>}, {pipeline_mode = #tpu.pipeline_mode<synchronous>, transform_indices = @transform_1, window_bounds = array<i64: 16, 16>}, {pipeline_mode = #tpu.pipeline_mode<synchronous>, transform_indices = @transform_2, window_bounds = array<i64: 1, 16>}, {transform_indices = @transform_3, window_bounds = array<i64: 80, 16>}]} {
    %c0 = arith.constant 0 : index
    %c0_0 = arith.constant 0 : index
    %0 = vector.load %arg1[%c0, %c0_0] : memref<80x16xbf16, #tpu.memory_space<vmem>>, vector<80x16xbf16>
    %c0_1 = arith.constant 0 : index
    %c0_2 = arith.constant 0 : index
    %1 = vector.load %arg2[%c0_1, %c0_2] : memref<16x16xbf16, #tpu.memory_space<vmem>>, vector<16x16xbf16>
    %cst = arith.constant dense<0.000000e+00> : vector<80x16xf32>
    %2 = tpu.matmul %0, %1, %cst {dimension_numbers = #tpu.dot_dimension_numbers<[1], [0], [0], [1], [0, 0, 1, 1], [], []>} : vector<80x16xbf16>, vector<16x16xbf16>, vector<80x16xf32> -> vector<80x16xf32>
    %c0_3 = arith.constant 0 : index
    %c0_4 = arith.constant 0 : index
    %3 = vector.load %arg3[%c0_3, %c0_4] : memref<1x16xf32, #tpu.memory_space<vmem>>, vector<1x16xf32>
    %4 = vector.broadcast %3 : vector<1x16xf32> to vector<80x16xf32>
    %5 = arith.addf %2, %4 : vector<80x16xf32>
    %6 = arith.truncf %5 : vector<80x16xf32> to vector<80x16xbf16>
    %c0_5 = arith.constant 0 : index
    %c0_6 = arith.constant 0 : index
    %7 = vector.load %arg4[%c0_5, %c0_6] : memref<80x16xbf16, #tpu.memory_space<vmem>>, vector<80x16xbf16>
    tpu.vector_store %arg4[%c0_5, %c0_6], %6 {strides = array<i32>} : memref<80x16xbf16, #tpu.memory_space<vmem>>, vector<80x16xbf16>,
    return
  }
  func.func @transform_0(%arg0: i32) -> (i32, i32) {
    %c0_i32 = arith.constant 0 : i32
    %c0_i32_0 = arith.constant 0 : i32
    return %arg0, %c0_i32 : i32, i32
  }
  func.func @transform_1(%arg0: i32) -> (i32, i32) {
    %c0_i32 = arith.constant 0 : i32
    %c0_i32_0 = arith.constant 0 : i32
    %c0_i32_1 = arith.constant 0 : i32
    return %c0_i32, %c0_i32_0 : i32, i32
  }
  func.func @transform_2(%arg0: i32) -> (i32, i32) {
    %c0_i32 = arith.constant 0 : i32
    %c0_i32_0 = arith.constant 0 : i32
    %c0_i32_1 = arith.constant 0 : i32
    return %c0_i32, %c0_i32_0 : i32, i32
  }
  func.func @transform_3(%arg0: i32) -> (i32, i32) {
    %c0_i32 = arith.constant 0 : i32
    %c0_i32_0 = arith.constant 0 : i32
    return %arg0, %c0_i32 : i32, i32
  }
}

module attributes {stable_mosaic.version = 11 : i64} {
  func.func @_conv3x3_kernel(%arg0: i32, %arg1: memref<1x10x10x4xbf16, #tpu.memory_space<vmem>>, %arg2: memref<9x4x8xbf16, #tpu.memory_space<vmem>>, %arg3: memref<1x8xf32, #tpu.memory_space<vmem>>, %arg4: memref<1x8x8x8xbf16, #tpu.memory_space<vmem>>) attributes {dimension_semantics = [#tpu.dimension_semantics<parallel>], iteration_bounds = array<i64: 2>, scalar_prefetch = 0 : i64, scratch_operands = 0 : i64, tpu.core_type = #tpu.core_type<tc>, window_params = [{transform_indices = @transform_0, window_bounds = array<i64: 1, 10, 10, 4>}, {pipeline_mode = #tpu.pipeline_mode<synchronous>, transform_indices = @transform_1, window_bounds = array<i64: 9, 4, 8>}, {pipeline_mode = #tpu.pipeline_mode<synchronous>, transform_indices = @transform_2, window_bounds = array<i64: 1, 8>}, {transform_indices = @transform_3, window_bounds = array<i64: 1, 8, 8, 8>}]} {
    %cst = arith.constant 0.000000e+00 : f32
    %0 = vector.broadcast %cst : f32 to vector<64x8xf32>
    %c0 = arith.constant 0 : index
    %c0_0 = arith.constant 0 : index
    %c0_1 = arith.constant 0 : index
    %c0_2 = arith.constant 0 : index
    %1 = vector.load %arg1[%c0, %c0_0, %c0_1, %c0_2] : memref<1x10x10x4xbf16, #tpu.memory_space<vmem>>, vector<1x8x8x4xbf16>
    %2 = vector.shape_cast %1 : vector<1x8x8x4xbf16> to vector<8x8x4xbf16>
    %3 = vector.shape_cast %2 : vector<8x8x4xbf16> to vector<64x4xbf16>
    %c0_3 = arith.constant 0 : index
    %c0_4 = arith.constant 0 : index
    %c0_5 = arith.constant 0 : index
    %4 = vector.load %arg2[%c0_3, %c0_4, %c0_5] : memref<9x4x8xbf16, #tpu.memory_space<vmem>>, vector<1x4x8xbf16>
    %5 = vector.shape_cast %4 : vector<1x4x8xbf16> to vector<4x8xbf16>
    %cst_6 = arith.constant dense<0.000000e+00> : vector<64x8xf32>
    %6 = tpu.matmul %3, %5, %cst_6 {dimension_numbers = #tpu.dot_dimension_numbers<[1], [0], [0], [1], [0, 0, 1, 1], [], []>} : vector<64x4xbf16>, vector<4x8xbf16>, vector<64x8xf32> -> vector<64x8xf32>
    %7 = arith.addf %0, %6 : vector<64x8xf32>
    %c0_7 = arith.constant 0 : index
    %c0_8 = arith.constant 0 : index
    %c1 = arith.constant 1 : index
    %c0_9 = arith.constant 0 : index
    %8 = vector.load %arg1[%c0_7, %c0_8, %c1, %c0_9] : memref<1x10x10x4xbf16, #tpu.memory_space<vmem>>, vector<1x8x8x4xbf16>
    %9 = vector.shape_cast %8 : vector<1x8x8x4xbf16> to vector<8x8x4xbf16>
    %10 = vector.shape_cast %9 : vector<8x8x4xbf16> to vector<64x4xbf16>
    %c1_10 = arith.constant 1 : index
    %c0_11 = arith.constant 0 : index
    %c0_12 = arith.constant 0 : index
    %11 = vector.load %arg2[%c1_10, %c0_11, %c0_12] : memref<9x4x8xbf16, #tpu.memory_space<vmem>>, vector<1x4x8xbf16>
    %12 = vector.shape_cast %11 : vector<1x4x8xbf16> to vector<4x8xbf16>
    %cst_13 = arith.constant dense<0.000000e+00> : vector<64x8xf32>
    %13 = tpu.matmul %10, %12, %cst_13 {dimension_numbers = #tpu.dot_dimension_numbers<[1], [0], [0], [1], [0, 0, 1, 1], [], []>} : vector<64x4xbf16>, vector<4x8xbf16>, vector<64x8xf32> -> vector<64x8xf32>
    %14 = arith.addf %7, %13 : vector<64x8xf32>
    %c0_14 = arith.constant 0 : index
    %c0_15 = arith.constant 0 : index
    %c2 = arith.constant 2 : index
    %c0_16 = arith.constant 0 : index
    %15 = vector.load %arg1[%c0_14, %c0_15, %c2, %c0_16] : memref<1x10x10x4xbf16, #tpu.memory_space<vmem>>, vector<1x8x8x4xbf16>
    %16 = vector.shape_cast %15 : vector<1x8x8x4xbf16> to vector<8x8x4xbf16>
    %17 = vector.shape_cast %16 : vector<8x8x4xbf16> to vector<64x4xbf16>
    %c2_17 = arith.constant 2 : index
    %c0_18 = arith.constant 0 : index
    %c0_19 = arith.constant 0 : index
    %18 = vector.load %arg2[%c2_17, %c0_18, %c0_19] : memref<9x4x8xbf16, #tpu.memory_space<vmem>>, vector<1x4x8xbf16>
    %19 = vector.shape_cast %18 : vector<1x4x8xbf16> to vector<4x8xbf16>
    %cst_20 = arith.constant dense<0.000000e+00> : vector<64x8xf32>
    %20 = tpu.matmul %17, %19, %cst_20 {dimension_numbers = #tpu.dot_dimension_numbers<[1], [0], [0], [1], [0, 0, 1, 1], [], []>} : vector<64x4xbf16>, vector<4x8xbf16>, vector<64x8xf32> -> vector<64x8xf32>
    %21 = arith.addf %14, %20 : vector<64x8xf32>
    %c0_21 = arith.constant 0 : index
    %c1_22 = arith.constant 1 : index
    %c0_23 = arith.constant 0 : index
    %c0_24 = arith.constant 0 : index
    %22 = vector.load %arg1[%c0_21, %c1_22, %c0_23, %c0_24] : memref<1x10x10x4xbf16, #tpu.memory_space<vmem>>, vector<1x8x8x4xbf16>
    %23 = vector.shape_cast %22 : vector<1x8x8x4xbf16> to vector<8x8x4xbf16>
    %24 = vector.shape_cast %23 : vector<8x8x4xbf16> to vector<64x4xbf16>
    %c3 = arith.constant 3 : index
    %c0_25 = arith.constant 0 : index
    %c0_26 = arith.constant 0 : index
    %25 = vector.load %arg2[%c3, %c0_25, %c0_26] : memref<9x4x8xbf16, #tpu.memory_space<vmem>>, vector<1x4x8xbf16>
    %26 = vector.shape_cast %25 : vector<1x4x8xbf16> to vector<4x8xbf16>
    %cst_27 = arith.constant dense<0.000000e+00> : vector<64x8xf32>
    %27 = tpu.matmul %24, %26, %cst_27 {dimension_numbers = #tpu.dot_dimension_numbers<[1], [0], [0], [1], [0, 0, 1, 1], [], []>} : vector<64x4xbf16>, vector<4x8xbf16>, vector<64x8xf32> -> vector<64x8xf32>
    %28 = arith.addf %21, %27 : vector<64x8xf32>
    %c0_28 = arith.constant 0 : index
    %c1_29 = arith.constant 1 : index
    %c1_30 = arith.constant 1 : index
    %c0_31 = arith.constant 0 : index
    %29 = vector.load %arg1[%c0_28, %c1_29, %c1_30, %c0_31] : memref<1x10x10x4xbf16, #tpu.memory_space<vmem>>, vector<1x8x8x4xbf16>
    %30 = vector.shape_cast %29 : vector<1x8x8x4xbf16> to vector<8x8x4xbf16>
    %31 = vector.shape_cast %30 : vector<8x8x4xbf16> to vector<64x4xbf16>
    %c4 = arith.constant 4 : index
    %c0_32 = arith.constant 0 : index
    %c0_33 = arith.constant 0 : index
    %32 = vector.load %arg2[%c4, %c0_32, %c0_33] : memref<9x4x8xbf16, #tpu.memory_space<vmem>>, vector<1x4x8xbf16>
    %33 = vector.shape_cast %32 : vector<1x4x8xbf16> to vector<4x8xbf16>
    %cst_34 = arith.constant dense<0.000000e+00> : vector<64x8xf32>
    %34 = tpu.matmul %31, %33, %cst_34 {dimension_numbers = #tpu.dot_dimension_numbers<[1], [0], [0], [1], [0, 0, 1, 1], [], []>} : vector<64x4xbf16>, vector<4x8xbf16>, vector<64x8xf32> -> vector<64x8xf32>
    %35 = arith.addf %28, %34 : vector<64x8xf32>
    %c0_35 = arith.constant 0 : index
    %c1_36 = arith.constant 1 : index
    %c2_37 = arith.constant 2 : index
    %c0_38 = arith.constant 0 : index
    %36 = vector.load %arg1[%c0_35, %c1_36, %c2_37, %c0_38] : memref<1x10x10x4xbf16, #tpu.memory_space<vmem>>, vector<1x8x8x4xbf16>
    %37 = vector.shape_cast %36 : vector<1x8x8x4xbf16> to vector<8x8x4xbf16>
    %38 = vector.shape_cast %37 : vector<8x8x4xbf16> to vector<64x4xbf16>
    %c5 = arith.constant 5 : index
    %c0_39 = arith.constant 0 : index
    %c0_40 = arith.constant 0 : index
    %39 = vector.load %arg2[%c5, %c0_39, %c0_40] : memref<9x4x8xbf16, #tpu.memory_space<vmem>>, vector<1x4x8xbf16>
    %40 = vector.shape_cast %39 : vector<1x4x8xbf16> to vector<4x8xbf16>
    %cst_41 = arith.constant dense<0.000000e+00> : vector<64x8xf32>
    %41 = tpu.matmul %38, %40, %cst_41 {dimension_numbers = #tpu.dot_dimension_numbers<[1], [0], [0], [1], [0, 0, 1, 1], [], []>} : vector<64x4xbf16>, vector<4x8xbf16>, vector<64x8xf32> -> vector<64x8xf32>
    %42 = arith.addf %35, %41 : vector<64x8xf32>
    %c0_42 = arith.constant 0 : index
    %c2_43 = arith.constant 2 : index
    %c0_44 = arith.constant 0 : index
    %c0_45 = arith.constant 0 : index
    %43 = vector.load %arg1[%c0_42, %c2_43, %c0_44, %c0_45] : memref<1x10x10x4xbf16, #tpu.memory_space<vmem>>, vector<1x8x8x4xbf16>
    %44 = vector.shape_cast %43 : vector<1x8x8x4xbf16> to vector<8x8x4xbf16>
    %45 = vector.shape_cast %44 : vector<8x8x4xbf16> to vector<64x4xbf16>
    %c6 = arith.constant 6 : index
    %c0_46 = arith.constant 0 : index
    %c0_47 = arith.constant 0 : index
    %46 = vector.load %arg2[%c6, %c0_46, %c0_47] : memref<9x4x8xbf16, #tpu.memory_space<vmem>>, vector<1x4x8xbf16>
    %47 = vector.shape_cast %46 : vector<1x4x8xbf16> to vector<4x8xbf16>
    %cst_48 = arith.constant dense<0.000000e+00> : vector<64x8xf32>
    %48 = tpu.matmul %45, %47, %cst_48 {dimension_numbers = #tpu.dot_dimension_numbers<[1], [0], [0], [1], [0, 0, 1, 1], [], []>} : vector<64x4xbf16>, vector<4x8xbf16>, vector<64x8xf32> -> vector<64x8xf32>
    %49 = arith.addf %42, %48 : vector<64x8xf32>
    %c0_49 = arith.constant 0 : index
    %c2_50 = arith.constant 2 : index
    %c1_51 = arith.constant 1 : index
    %c0_52 = arith.constant 0 : index
    %50 = vector.load %arg1[%c0_49, %c2_50, %c1_51, %c0_52] : memref<1x10x10x4xbf16, #tpu.memory_space<vmem>>, vector<1x8x8x4xbf16>
    %51 = vector.shape_cast %50 : vector<1x8x8x4xbf16> to vector<8x8x4xbf16>
    %52 = vector.shape_cast %51 : vector<8x8x4xbf16> to vector<64x4xbf16>
    %c7 = arith.constant 7 : index
    %c0_53 = arith.constant 0 : index
    %c0_54 = arith.constant 0 : index
    %53 = vector.load %arg2[%c7, %c0_53, %c0_54] : memref<9x4x8xbf16, #tpu.memory_space<vmem>>, vector<1x4x8xbf16>
    %54 = vector.shape_cast %53 : vector<1x4x8xbf16> to vector<4x8xbf16>
    %cst_55 = arith.constant dense<0.000000e+00> : vector<64x8xf32>
    %55 = tpu.matmul %52, %54, %cst_55 {dimension_numbers = #tpu.dot_dimension_numbers<[1], [0], [0], [1], [0, 0, 1, 1], [], []>} : vector<64x4xbf16>, vector<4x8xbf16>, vector<64x8xf32> -> vector<64x8xf32>
    %56 = arith.addf %49, %55 : vector<64x8xf32>
    %c0_56 = arith.constant 0 : index
    %c2_57 = arith.constant 2 : index
    %c2_58 = arith.constant 2 : index
    %c0_59 = arith.constant 0 : index
    %57 = vector.load %arg1[%c0_56, %c2_57, %c2_58, %c0_59] : memref<1x10x10x4xbf16, #tpu.memory_space<vmem>>, vector<1x8x8x4xbf16>
    %58 = vector.shape_cast %57 : vector<1x8x8x4xbf16> to vector<8x8x4xbf16>
    %59 = vector.shape_cast %58 : vector<8x8x4xbf16> to vector<64x4xbf16>
    %c8 = arith.constant 8 : index
    %c0_60 = arith.constant 0 : index
    %c0_61 = arith.constant 0 : index
    %60 = vector.load %arg2[%c8, %c0_60, %c0_61] : memref<9x4x8xbf16, #tpu.memory_space<vmem>>, vector<1x4x8xbf16>
    %61 = vector.shape_cast %60 : vector<1x4x8xbf16> to vector<4x8xbf16>
    %cst_62 = arith.constant dense<0.000000e+00> : vector<64x8xf32>
    %62 = tpu.matmul %59, %61, %cst_62 {dimension_numbers = #tpu.dot_dimension_numbers<[1], [0], [0], [1], [0, 0, 1, 1], [], []>} : vector<64x4xbf16>, vector<4x8xbf16>, vector<64x8xf32> -> vector<64x8xf32>
    %63 = arith.addf %56, %62 : vector<64x8xf32>
    %c0_63 = arith.constant 0 : index
    %c0_64 = arith.constant 0 : index
    %64 = vector.load %arg3[%c0_63, %c0_64] : memref<1x8xf32, #tpu.memory_space<vmem>>, vector<1x8xf32>
    %65 = vector.broadcast %64 : vector<1x8xf32> to vector<64x8xf32>
    %66 = arith.addf %63, %65 : vector<64x8xf32>
    %67 = vector.shape_cast %66 : vector<64x8xf32> to vector<8x8x8xf32>
    %68 = arith.truncf %67 : vector<8x8x8xf32> to vector<8x8x8xbf16>
    %c0_65 = arith.constant 0 : index
    %c0_66 = arith.constant 0 : index
    %c0_67 = arith.constant 0 : index
    %c0_68 = arith.constant 0 : index
    %69 = vector.load %arg4[%c0_65, %c0_66, %c0_67, %c0_68] : memref<1x8x8x8xbf16, #tpu.memory_space<vmem>>, vector<1x8x8x8xbf16>
    %70 = vector.shape_cast %69 : vector<1x8x8x8xbf16> to vector<8x8x8xbf16>
    %71 = vector.shape_cast %68 : vector<8x8x8xbf16> to vector<1x8x8x8xbf16>
    tpu.vector_store %arg4[%c0_65, %c0_66, %c0_67, %c0_68], %71 {strides = array<i32>} : memref<1x8x8x8xbf16, #tpu.memory_space<vmem>>, vector<1x8x8x8xbf16>,
    return
  }
  func.func @transform_0(%arg0: i32) -> (i32, i32, i32, i32) {
    %c0_i32 = arith.constant 0 : i32
    %c0_i32_0 = arith.constant 0 : i32
    %c0_i32_1 = arith.constant 0 : i32
    %c0_i32_2 = arith.constant 0 : i32
    return %arg0, %c0_i32, %c0_i32_0, %c0_i32_1 : i32, i32, i32, i32
  }
  func.func @transform_1(%arg0: i32) -> (i32, i32, i32) {
    %c0_i32 = arith.constant 0 : i32
    %c0_i32_0 = arith.constant 0 : i32
    %c0_i32_1 = arith.constant 0 : i32
    %c0_i32_2 = arith.constant 0 : i32
    return %c0_i32, %c0_i32_0, %c0_i32_1 : i32, i32, i32
  }
  func.func @transform_2(%arg0: i32) -> (i32, i32) {
    %c0_i32 = arith.constant 0 : i32
    %c0_i32_0 = arith.constant 0 : i32
    %c0_i32_1 = arith.constant 0 : i32
    return %c0_i32, %c0_i32_0 : i32, i32
  }
  func.func @transform_3(%arg0: i32) -> (i32, i32, i32, i32) {
    %c0_i32 = arith.constant 0 : i32
    %c0_i32_0 = arith.constant 0 : i32
    %c0_i32_1 = arith.constant 0 : i32
    %c0_i32_2 = arith.constant 0 : i32
    return %arg0, %c0_i32, %c0_i32_0, %c0_i32_1 : i32, i32, i32, i32
  }
}

module attributes {stable_mosaic.version = 11 : i64} {
  func.func @_affine_leaky_kernel(%arg0: i32, %arg1: memref<8x128xbf16, #tpu.memory_space<vmem>>, %arg2: memref<1x128xf32, #tpu.memory_space<vmem>>, %arg3: memref<1x128xf32, #tpu.memory_space<vmem>>, %arg4: memref<8x128xbf16, #tpu.memory_space<vmem>>) attributes {dimension_semantics = [#tpu.dimension_semantics<parallel>], iteration_bounds = array<i64: 1>, scalar_prefetch = 0 : i64, scratch_operands = 0 : i64, tpu.core_type = #tpu.core_type<tc>, window_params = [{transform_indices = @transform_0, window_bounds = array<i64: 8, 128>}, {pipeline_mode = #tpu.pipeline_mode<synchronous>, transform_indices = @transform_1, window_bounds = array<i64: 1, 128>}, {pipeline_mode = #tpu.pipeline_mode<synchronous>, transform_indices = @transform_2, window_bounds = array<i64: 1, 128>}, {transform_indices = @transform_3, window_bounds = array<i64: 8, 128>}]} {
    %c0 = arith.constant 0 : index
    %c0_0 = arith.constant 0 : index
    %0 = vector.load %arg1[%c0, %c0_0] : memref<8x128xbf16, #tpu.memory_space<vmem>>, vector<8x128xbf16>
    %1 = arith.extf %0 : vector<8x128xbf16> to vector<8x128xf32>
    %c0_1 = arith.constant 0 : index
    %c0_2 = arith.constant 0 : index
    %2 = vector.load %arg2[%c0_1, %c0_2] : memref<1x128xf32, #tpu.memory_space<vmem>>, vector<1x128xf32>
    %3 = vector.broadcast %2 : vector<1x128xf32> to vector<8x128xf32>
    %4 = arith.mulf %1, %3 : vector<8x128xf32>
    %c0_3 = arith.constant 0 : index
    %c0_4 = arith.constant 0 : index
    %5 = vector.load %arg3[%c0_3, %c0_4] : memref<1x128xf32, #tpu.memory_space<vmem>>, vector<1x128xf32>
    %6 = vector.broadcast %5 : vector<1x128xf32> to vector<8x128xf32>
    %7 = arith.addf %4, %6 : vector<8x128xf32>
    %cst = arith.constant 0.000000e+00 : f32
    %8 = vector.broadcast %cst : f32 to vector<8x128xf32>
    %9 = arith.cmpf ogt, %7, %8 : vector<8x128xf32>
    %cst_5 = arith.constant 0.00999999977 : f32
    %10 = vector.broadcast %cst_5 : f32 to vector<8x128xf32>
    %11 = arith.mulf %10, %7 : vector<8x128xf32>
    %12 = arith.select %9, %7, %11 : vector<8x128xi1>, vector<8x128xf32>
    %13 = arith.truncf %12 : vector<8x128xf32> to vector<8x128xbf16>
    %c0_6 = arith.constant 0 : index
    %c0_7 = arith.constant 0 : index
    %14 = vector.load %arg4[%c0_6, %c0_7] : memref<8x128xbf16, #tpu.memory_space<vmem>>, vector<8x128xbf16>
    tpu.vector_store %arg4[%c0_6, %c0_7], %13 {strides = array<i32>} : memref<8x128xbf16, #tpu.memory_space<vmem>>, vector<8x128xbf16>,
    return
  }
  func.func @transform_0(%arg0: i32) -> (i32, i32) {
    %c0_i32 = arith.constant 0 : i32
    %c0_i32_0 = arith.constant 0 : i32
    return %arg0, %c0_i32 : i32, i32
  }
  func.func @transform_1(%arg0: i32) -> (i32, i32) {
    %c0_i32 = arith.constant 0 : i32
    %c0_i32_0 = arith.constant 0 : i32
    %c0_i32_1 = arith.constant 0 : i32
    return %c0_i32, %c0_i32_0 : i32, i32
  }
  func.func @transform_2(%arg0: i32) -> (i32, i32) {
    %c0_i32 = arith.constant 0 : i32
    %c0_i32_0 = arith.constant 0 : i32
    %c0_i32_1 = arith.constant 0 : i32
    return %c0_i32, %c0_i32_0 : i32, i32
  }
  func.func @transform_3(%arg0: i32) -> (i32, i32) {
    %c0_i32 = arith.constant 0 : i32
    %c0_i32_0 = arith.constant 0 : i32
    return %arg0, %c0_i32 : i32, i32
  }
}

module attributes {stable_mosaic.version = 11 : i64} {
  func.func @_conv3x3_kernel(%arg0: i32, %arg1: memref<1x10x10x8xbf16, #tpu.memory_space<vmem>>, %arg2: memref<9x8x8xbf16, #tpu.memory_space<vmem>>, %arg3: memref<1x8xf32, #tpu.memory_space<vmem>>, %arg4: memref<1x8x8x8xbf16, #tpu.memory_space<vmem>>) attributes {dimension_semantics = [#tpu.dimension_semantics<parallel>], iteration_bounds = array<i64: 2>, scalar_prefetch = 0 : i64, scratch_operands = 0 : i64, tpu.core_type = #tpu.core_type<tc>, window_params = [{transform_indices = @transform_0, window_bounds = array<i64: 1, 10, 10, 8>}, {pipeline_mode = #tpu.pipeline_mode<synchronous>, transform_indices = @transform_1, window_bounds = array<i64: 9, 8, 8>}, {pipeline_mode = #tpu.pipeline_mode<synchronous>, transform_indices = @transform_2, window_bounds = array<i64: 1, 8>}, {transform_indices = @transform_3, window_bounds = array<i64: 1, 8, 8, 8>}]} {
    %cst = arith.constant 0.000000e+00 : f32
    %0 = vector.broadcast %cst : f32 to vector<64x8xf32>
    %c0 = arith.constant 0 : index
    %c0_0 = arith.constant 0 : index
    %c0_1 = arith.constant 0 : index
    %c0_2 = arith.constant 0 : index
    %1 = vector.load %arg1[%c0, %c0_0, %c0_1, %c0_2] : memref<1x10x10x8xbf16, #tpu.memory_space<vmem>>, vector<1x8x8x8xbf16>
    %2 = vector.shape_cast %1 : vector<1x8x8x8xbf16> to vector<8x8x8xbf16>
    %3 = vector.shape_cast %2 : vector<8x8x8xbf16> to vector<64x8xbf16>
    %c0_3 = arith.constant 0 : index
    %c0_4 = arith.constant 0 : index
    %c0_5 = arith.constant 0 : index
    %4 = vector.load %arg2[%c0_3, %c0_4, %c0_5] : memref<9x8x8xbf16, #tpu.memory_space<vmem>>, vector<1x8x8xbf16>
    %5 = vector.shape_cast %4 : vector<1x8x8xbf16> to vector<8x8xbf16>
    %cst_6 = arith.constant dense<0.000000e+00> : vector<64x8xf32>
    %6 = tpu.matmul %3, %5, %cst_6 {dimension_numbers = #tpu.dot_dimension_numbers<[1], [0], [0], [1], [0, 0, 1, 1], [], []>} : vector<64x8xbf16>, vector<8x8xbf16>, vector<64x8xf32> -> vector<64x8xf32>
    %7 = arith.addf %0, %6 : vector<64x8xf32>
    %c0_7 = arith.constant 0 : index
    %c0_8 = arith.constant 0 : index
    %c1 = arith.constant 1 : index
    %c0_9 = arith.constant 0 : index
    %8 = vector.load %arg1[%c0_7, %c0_8, %c1, %c0_9] : memref<1x10x10x8xbf16, #tpu.memory_space<vmem>>, vector<1x8x8x8xbf16>
    %9 = vector.shape_cast %8 : vector<1x8x8x8xbf16> to vector<8x8x8xbf16>
    %10 = vector.shape_cast %9 : vector<8x8x8xbf16> to vector<64x8xbf16>
    %c1_10 = arith.constant 1 : index
    %c0_11 = arith.constant 0 : index
    %c0_12 = arith.constant 0 : index
    %11 = vector.load %arg2[%c1_10, %c0_11, %c0_12] : memref<9x8x8xbf16, #tpu.memory_space<vmem>>, vector<1x8x8xbf16>
    %12 = vector.shape_cast %11 : vector<1x8x8xbf16> to vector<8x8xbf16>
    %cst_13 = arith.constant dense<0.000000e+00> : vector<64x8xf32>
    %13 = tpu.matmul %10, %12, %cst_13 {dimension_numbers = #tpu.dot_dimension_numbers<[1], [0], [0], [1], [0, 0, 1, 1], [], []>} : vector<64x8xbf16>, vector<8x8xbf16>, vector<64x8xf32> -> vector<64x8xf32>
    %14 = arith.addf %7, %13 : vector<64x8xf32>
    %c0_14 = arith.constant 0 : index
    %c0_15 = arith.constant 0 : index
    %c2 = arith.constant 2 : index
    %c0_16 = arith.constant 0 : index
    %15 = vector.load %arg1[%c0_14, %c0_15, %c2, %c0_16] : memref<1x10x10x8xbf16, #tpu.memory_space<vmem>>, vector<1x8x8x8xbf16>
    %16 = vector.shape_cast %15 : vector<1x8x8x8xbf16> to vector<8x8x8xbf16>
    %17 = vector.shape_cast %16 : vector<8x8x8xbf16> to vector<64x8xbf16>
    %c2_17 = arith.constant 2 : index
    %c0_18 = arith.constant 0 : index
    %c0_19 = arith.constant 0 : index
    %18 = vector.load %arg2[%c2_17, %c0_18, %c0_19] : memref<9x8x8xbf16, #tpu.memory_space<vmem>>, vector<1x8x8xbf16>
    %19 = vector.shape_cast %18 : vector<1x8x8xbf16> to vector<8x8xbf16>
    %cst_20 = arith.constant dense<0.000000e+00> : vector<64x8xf32>
    %20 = tpu.matmul %17, %19, %cst_20 {dimension_numbers = #tpu.dot_dimension_numbers<[1], [0], [0], [1], [0, 0, 1, 1], [], []>} : vector<64x8xbf16>, vector<8x8xbf16>, vector<64x8xf32> -> vector<64x8xf32>
    %21 = arith.addf %14, %20 : vector<64x8xf32>
    %c0_21 = arith.constant 0 : index
    %c1_22 = arith.constant 1 : index
    %c0_23 = arith.constant 0 : index
    %c0_24 = arith.constant 0 : index
    %22 = vector.load %arg1[%c0_21, %c1_22, %c0_23, %c0_24] : memref<1x10x10x8xbf16, #tpu.memory_space<vmem>>, vector<1x8x8x8xbf16>
    %23 = vector.shape_cast %22 : vector<1x8x8x8xbf16> to vector<8x8x8xbf16>
    %24 = vector.shape_cast %23 : vector<8x8x8xbf16> to vector<64x8xbf16>
    %c3 = arith.constant 3 : index
    %c0_25 = arith.constant 0 : index
    %c0_26 = arith.constant 0 : index
    %25 = vector.load %arg2[%c3, %c0_25, %c0_26] : memref<9x8x8xbf16, #tpu.memory_space<vmem>>, vector<1x8x8xbf16>
    %26 = vector.shape_cast %25 : vector<1x8x8xbf16> to vector<8x8xbf16>
    %cst_27 = arith.constant dense<0.000000e+00> : vector<64x8xf32>
    %27 = tpu.matmul %24, %26, %cst_27 {dimension_numbers = #tpu.dot_dimension_numbers<[1], [0], [0], [1], [0, 0, 1, 1], [], []>} : vector<64x8xbf16>, vector<8x8xbf16>, vector<64x8xf32> -> vector<64x8xf32>
    %28 = arith.addf %21, %27 : vector<64x8xf32>
    %c0_28 = arith.constant 0 : index
    %c1_29 = arith.constant 1 : index
    %c1_30 = arith.constant 1 : index
    %c0_31 = arith.constant 0 : index
    %29 = vector.load %arg1[%c0_28, %c1_29, %c1_30, %c0_31] : memref<1x10x10x8xbf16, #tpu.memory_space<vmem>>, vector<1x8x8x8xbf16>
    %30 = vector.shape_cast %29 : vector<1x8x8x8xbf16> to vector<8x8x8xbf16>
    %31 = vector.shape_cast %30 : vector<8x8x8xbf16> to vector<64x8xbf16>
    %c4 = arith.constant 4 : index
    %c0_32 = arith.constant 0 : index
    %c0_33 = arith.constant 0 : index
    %32 = vector.load %arg2[%c4, %c0_32, %c0_33] : memref<9x8x8xbf16, #tpu.memory_space<vmem>>, vector<1x8x8xbf16>
    %33 = vector.shape_cast %32 : vector<1x8x8xbf16> to vector<8x8xbf16>
    %cst_34 = arith.constant dense<0.000000e+00> : vector<64x8xf32>
    %34 = tpu.matmul %31, %33, %cst_34 {dimension_numbers = #tpu.dot_dimension_numbers<[1], [0], [0], [1], [0, 0, 1, 1], [], []>} : vector<64x8xbf16>, vector<8x8xbf16>, vector<64x8xf32> -> vector<64x8xf32>
    %35 = arith.addf %28, %34 : vector<64x8xf32>
    %c0_35 = arith.constant 0 : index
    %c1_36 = arith.constant 1 : index
    %c2_37 = arith.constant 2 : index
    %c0_38 = arith.constant 0 : index
    %36 = vector.load %arg1[%c0_35, %c1_36, %c2_37, %c0_38] : memref<1x10x10x8xbf16, #tpu.memory_space<vmem>>, vector<1x8x8x8xbf16>
    %37 = vector.shape_cast %36 : vector<1x8x8x8xbf16> to vector<8x8x8xbf16>
    %38 = vector.shape_cast %37 : vector<8x8x8xbf16> to vector<64x8xbf16>
    %c5 = arith.constant 5 : index
    %c0_39 = arith.constant 0 : index
    %c0_40 = arith.constant 0 : index
    %39 = vector.load %arg2[%c5, %c0_39, %c0_40] : memref<9x8x8xbf16, #tpu.memory_space<vmem>>, vector<1x8x8xbf16>
    %40 = vector.shape_cast %39 : vector<1x8x8xbf16> to vector<8x8xbf16>
    %cst_41 = arith.constant dense<0.000000e+00> : vector<64x8xf32>
    %41 = tpu.matmul %38, %40, %cst_41 {dimension_numbers = #tpu.dot_dimension_numbers<[1], [0], [0], [1], [0, 0, 1, 1], [], []>} : vector<64x8xbf16>, vector<8x8xbf16>, vector<64x8xf32> -> vector<64x8xf32>
    %42 = arith.addf %35, %41 : vector<64x8xf32>
    %c0_42 = arith.constant 0 : index
    %c2_43 = arith.constant 2 : index
    %c0_44 = arith.constant 0 : index
    %c0_45 = arith.constant 0 : index
    %43 = vector.load %arg1[%c0_42, %c2_43, %c0_44, %c0_45] : memref<1x10x10x8xbf16, #tpu.memory_space<vmem>>, vector<1x8x8x8xbf16>
    %44 = vector.shape_cast %43 : vector<1x8x8x8xbf16> to vector<8x8x8xbf16>
    %45 = vector.shape_cast %44 : vector<8x8x8xbf16> to vector<64x8xbf16>
    %c6 = arith.constant 6 : index
    %c0_46 = arith.constant 0 : index
    %c0_47 = arith.constant 0 : index
    %46 = vector.load %arg2[%c6, %c0_46, %c0_47] : memref<9x8x8xbf16, #tpu.memory_space<vmem>>, vector<1x8x8xbf16>
    %47 = vector.shape_cast %46 : vector<1x8x8xbf16> to vector<8x8xbf16>
    %cst_48 = arith.constant dense<0.000000e+00> : vector<64x8xf32>
    %48 = tpu.matmul %45, %47, %cst_48 {dimension_numbers = #tpu.dot_dimension_numbers<[1], [0], [0], [1], [0, 0, 1, 1], [], []>} : vector<64x8xbf16>, vector<8x8xbf16>, vector<64x8xf32> -> vector<64x8xf32>
    %49 = arith.addf %42, %48 : vector<64x8xf32>
    %c0_49 = arith.constant 0 : index
    %c2_50 = arith.constant 2 : index
    %c1_51 = arith.constant 1 : index
    %c0_52 = arith.constant 0 : index
    %50 = vector.load %arg1[%c0_49, %c2_50, %c1_51, %c0_52] : memref<1x10x10x8xbf16, #tpu.memory_space<vmem>>, vector<1x8x8x8xbf16>
    %51 = vector.shape_cast %50 : vector<1x8x8x8xbf16> to vector<8x8x8xbf16>
    %52 = vector.shape_cast %51 : vector<8x8x8xbf16> to vector<64x8xbf16>
    %c7 = arith.constant 7 : index
    %c0_53 = arith.constant 0 : index
    %c0_54 = arith.constant 0 : index
    %53 = vector.load %arg2[%c7, %c0_53, %c0_54] : memref<9x8x8xbf16, #tpu.memory_space<vmem>>, vector<1x8x8xbf16>
    %54 = vector.shape_cast %53 : vector<1x8x8xbf16> to vector<8x8xbf16>
    %cst_55 = arith.constant dense<0.000000e+00> : vector<64x8xf32>
    %55 = tpu.matmul %52, %54, %cst_55 {dimension_numbers = #tpu.dot_dimension_numbers<[1], [0], [0], [1], [0, 0, 1, 1], [], []>} : vector<64x8xbf16>, vector<8x8xbf16>, vector<64x8xf32> -> vector<64x8xf32>
    %56 = arith.addf %49, %55 : vector<64x8xf32>
    %c0_56 = arith.constant 0 : index
    %c2_57 = arith.constant 2 : index
    %c2_58 = arith.constant 2 : index
    %c0_59 = arith.constant 0 : index
    %57 = vector.load %arg1[%c0_56, %c2_57, %c2_58, %c0_59] : memref<1x10x10x8xbf16, #tpu.memory_space<vmem>>, vector<1x8x8x8xbf16>
    %58 = vector.shape_cast %57 : vector<1x8x8x8xbf16> to vector<8x8x8xbf16>
    %59 = vector.shape_cast %58 : vector<8x8x8xbf16> to vector<64x8xbf16>
    %c8 = arith.constant 8 : index
    %c0_60 = arith.constant 0 : index
    %c0_61 = arith.constant 0 : index
    %60 = vector.load %arg2[%c8, %c0_60, %c0_61] : memref<9x8x8xbf16, #tpu.memory_space<vmem>>, vector<1x8x8xbf16>
    %61 = vector.shape_cast %60 : vector<1x8x8xbf16> to vector<8x8xbf16>
    %cst_62 = arith.constant dense<0.000000e+00> : vector<64x8xf32>
    %62 = tpu.matmul %59, %61, %cst_62 {dimension_numbers = #tpu.dot_dimension_numbers<[1], [0], [0], [1], [0, 0, 1, 1], [], []>} : vector<64x8xbf16>, vector<8x8xbf16>, vector<64x8xf32> -> vector<64x8xf32>
    %63 = arith.addf %56, %62 : vector<64x8xf32>
    %c0_63 = arith.constant 0 : index
    %c0_64 = arith.constant 0 : index
    %64 = vector.load %arg3[%c0_63, %c0_64] : memref<1x8xf32, #tpu.memory_space<vmem>>, vector<1x8xf32>
    %65 = vector.broadcast %64 : vector<1x8xf32> to vector<64x8xf32>
    %66 = arith.addf %63, %65 : vector<64x8xf32>
    %67 = vector.shape_cast %66 : vector<64x8xf32> to vector<8x8x8xf32>
    %68 = arith.truncf %67 : vector<8x8x8xf32> to vector<8x8x8xbf16>
    %c0_65 = arith.constant 0 : index
    %c0_66 = arith.constant 0 : index
    %c0_67 = arith.constant 0 : index
    %c0_68 = arith.constant 0 : index
    %69 = vector.load %arg4[%c0_65, %c0_66, %c0_67, %c0_68] : memref<1x8x8x8xbf16, #tpu.memory_space<vmem>>, vector<1x8x8x8xbf16>
    %70 = vector.shape_cast %69 : vector<1x8x8x8xbf16> to vector<8x8x8xbf16>
    %71 = vector.shape_cast %68 : vector<8x8x8xbf16> to vector<1x8x8x8xbf16>
    tpu.vector_store %arg4[%c0_65, %c0_66, %c0_67, %c0_68], %71 {strides = array<i32>} : memref<1x8x8x8xbf16, #tpu.memory_space<vmem>>, vector<1x8x8x8xbf16>,
    return
  }
  func.func @transform_0(%arg0: i32) -> (i32, i32, i32, i32) {
    %c0_i32 = arith.constant 0 : i32
    %c0_i32_0 = arith.constant 0 : i32
    %c0_i32_1 = arith.constant 0 : i32
    %c0_i32_2 = arith.constant 0 : i32
    return %arg0, %c0_i32, %c0_i32_0, %c0_i32_1 : i32, i32, i32, i32
  }
  func.func @transform_1(%arg0: i32) -> (i32, i32, i32) {
    %c0_i32 = arith.constant 0 : i32
    %c0_i32_0 = arith.constant 0 : i32
    %c0_i32_1 = arith.constant 0 : i32
    %c0_i32_2 = arith.constant 0 : i32
    return %c0_i32, %c0_i32_0, %c0_i32_1 : i32, i32, i32
  }
  func.func @transform_2(%arg0: i32) -> (i32, i32) {
    %c0_i32 = arith.constant 0 : i32
    %c0_i32_0 = arith.constant 0 : i32
    %c0_i32_1 = arith.constant 0 : i32
    return %c0_i32, %c0_i32_0 : i32, i32
  }
  func.func @transform_3(%arg0: i32) -> (i32, i32, i32, i32) {
    %c0_i32 = arith.constant 0 : i32
    %c0_i32_0 = arith.constant 0 : i32
    %c0_i32_1 = arith.constant 0 : i32
    %c0_i32_2 = arith.constant 0 : i32
    return %arg0, %c0_i32, %c0_i32_0, %c0_i32_1 : i32, i32, i32, i32
  }
}

module attributes {stable_mosaic.version = 11 : i64} {
  func.func @_affine_leaky_kernel(%arg0: i32, %arg1: memref<8x128xbf16, #tpu.memory_space<vmem>>, %arg2: memref<1x128xf32, #tpu.memory_space<vmem>>, %arg3: memref<1x128xf32, #tpu.memory_space<vmem>>, %arg4: memref<8x128xf32, #tpu.memory_space<vmem>>) attributes {dimension_semantics = [#tpu.dimension_semantics<parallel>], iteration_bounds = array<i64: 1>, scalar_prefetch = 0 : i64, scratch_operands = 0 : i64, tpu.core_type = #tpu.core_type<tc>, window_params = [{transform_indices = @transform_0, window_bounds = array<i64: 8, 128>}, {pipeline_mode = #tpu.pipeline_mode<synchronous>, transform_indices = @transform_1, window_bounds = array<i64: 1, 128>}, {pipeline_mode = #tpu.pipeline_mode<synchronous>, transform_indices = @transform_2, window_bounds = array<i64: 1, 128>}, {transform_indices = @transform_3, window_bounds = array<i64: 8, 128>}]} {
    %c0 = arith.constant 0 : index
    %c0_0 = arith.constant 0 : index
    %0 = vector.load %arg1[%c0, %c0_0] : memref<8x128xbf16, #tpu.memory_space<vmem>>, vector<8x128xbf16>
    %1 = arith.extf %0 : vector<8x128xbf16> to vector<8x128xf32>
    %c0_1 = arith.constant 0 : index
    %c0_2 = arith.constant 0 : index
    %2 = vector.load %arg2[%c0_1, %c0_2] : memref<1x128xf32, #tpu.memory_space<vmem>>, vector<1x128xf32>
    %3 = vector.broadcast %2 : vector<1x128xf32> to vector<8x128xf32>
    %4 = arith.mulf %1, %3 : vector<8x128xf32>
    %c0_3 = arith.constant 0 : index
    %c0_4 = arith.constant 0 : index
    %5 = vector.load %arg3[%c0_3, %c0_4] : memref<1x128xf32, #tpu.memory_space<vmem>>, vector<1x128xf32>
    %6 = vector.broadcast %5 : vector<1x128xf32> to vector<8x128xf32>
    %7 = arith.addf %4, %6 : vector<8x128xf32>
    %cst = arith.constant 0.000000e+00 : f32
    %8 = vector.broadcast %cst : f32 to vector<8x128xf32>
    %9 = arith.cmpf ogt, %7, %8 : vector<8x128xf32>
    %cst_5 = arith.constant 0.00999999977 : f32
    %10 = vector.broadcast %cst_5 : f32 to vector<8x128xf32>
    %11 = arith.mulf %10, %7 : vector<8x128xf32>
    %12 = arith.select %9, %7, %11 : vector<8x128xi1>, vector<8x128xf32>
    %c0_6 = arith.constant 0 : index
    %c0_7 = arith.constant 0 : index
    %13 = vector.load %arg4[%c0_6, %c0_7] : memref<8x128xf32, #tpu.memory_space<vmem>>, vector<8x128xf32>
    tpu.vector_store %arg4[%c0_6, %c0_7], %12 {strides = array<i32>} : memref<8x128xf32, #tpu.memory_space<vmem>>, vector<8x128xf32>,
    return
  }
  func.func @transform_0(%arg0: i32) -> (i32, i32) {
    %c0_i32 = arith.constant 0 : i32
    %c0_i32_0 = arith.constant 0 : i32
    return %arg0, %c0_i32 : i32, i32
  }
  func.func @transform_1(%arg0: i32) -> (i32, i32) {
    %c0_i32 = arith.constant 0 : i32
    %c0_i32_0 = arith.constant 0 : i32
    %c0_i32_1 = arith.constant 0 : i32
    return %c0_i32, %c0_i32_0 : i32, i32
  }
  func.func @transform_2(%arg0: i32) -> (i32, i32) {
    %c0_i32 = arith.constant 0 : i32
    %c0_i32_0 = arith.constant 0 : i32
    %c0_i32_1 = arith.constant 0 : i32
    return %c0_i32, %c0_i32_0 : i32, i32
  }
  func.func @transform_3(%arg0: i32) -> (i32, i32) {
    %c0_i32 = arith.constant 0 : i32
    %c0_i32_0 = arith.constant 0 : i32
    return %arg0, %c0_i32 : i32, i32
  }
}

</mosaic_0001>

<llo_original>
// kernel: down_forward.9
$region0: #{down_forward.9}
  #allocation0 [shape = 'u32[]', space=smem, size = 0x4, offset = 0x4, fixed_abs, tag = 'smem constant byte address 0x4 - core index']
  #allocation1 [shape = 'u32[144,128]{1,0:T(1,128)}', space=vmem, size = 0x12000, scoped, tag = 'internal scratch']
  %s0 = inlined_call_operand.vmem [shape: bf16[128,64], index: 0, kind: input, shape index: {}]
  %s1 = inlined_call_operand.vmem [shape: bf16[64,4], index: 1, kind: input, shape index: {}]
  %s2 = inlined_call_operand.vmem [shape: f32[1,4], index: 2, kind: input, shape index: {}]
  %s3 = inlined_call_operand.vmem [shape: f32[128,4], index: 3, kind: output, shape index: {}]
  %s4 = sld [smem:[#allocation0]]
  $region22: #{down_forward.9} parent=0
    _
  %s6 = ssub.s32 1, %s4
  %s7 = scalar_select 0, %s6, %s4
  // Predicated region
  $region2: #{down_forward.9} parent=0 // pred_check
    _
  $region3: #{down_forward.9} parent=0 // pred_check_branch
    %9 = sbr.rel (0) target = $region5
  $region4: #{down_forward.9} parent=0 // pred_region
    _
  $region5: #{down_forward.9} parent=0 // pred_fallthru
    _
  // Predicated region
  $region6: #{down_forward.9} parent=0 // pred_check
    _
  $region7: #{down_forward.9} parent=0 // pred_check_branch
    %11 = sbr.rel (0) target = $region9
  $region8: #{down_forward.9} parent=0 // pred_region
    _
  $region9: #{down_forward.9} parent=0 // pred_fallthru
    _
  // Predicated region
  $region10: #{down_forward.9} parent=0 // pred_check
    _
  $region11: #{down_forward.9} parent=0 // pred_check_branch
    %13 = sbr.rel (0) target = $region13
  $region12: #{down_forward.9} parent=0 // pred_region
    _
  $region13: #{down_forward.9} parent=0 // pred_fallthru
    _
  %v15 = vld [vmem:[%s0] sm:$0xf]
  %v16 = vld [vmem:[%s0 + $0x4] sm:$0xf]
  %v17 = vld [vmem:[%s0 + $0x8] sm:$0xf]
  %v18 = vld [vmem:[%s0 + $0xc] sm:$0xf]
  %v19 = vld [vmem:[%s0 + $0x10] sm:$0xf]
  %v20 = vld [vmem:[%s0 + $0x14] sm:$0xf]
  %v21 = vld [vmem:[%s0 + $0x18] sm:$0xf]
  %v22 = vld [vmem:[%s0 + $0x1c] sm:$0xf]
  %v23 = vld [vmem:[%s0 + $0x20] sm:$0xf]
  %v24 = vld [vmem:[%s0 + $0x24] sm:$0xf]
  %v25 = vld [vmem:[%s0 + $0x28] sm:$0xf]
  %v26 = vld [vmem:[%s0 + $0x2c] sm:$0xf]
  %v27 = vld [vmem:[%s0 + $0x30] sm:$0xf]
  %v28 = vld [vmem:[%s0 + $0x34] sm:$0xf]
  %v29 = vld [vmem:[%s0 + $0x38] sm:$0xf]
  %v30 = vld [vmem:[%s0 + $0x3c] sm:$0xf]
  %v31 = vld [vmem:[%s1] sm:$0xf]
  %v32 = vld [vmem:[%s1 + $0x4] sm:$0xf]
  %v33 = vld [vmem:[%s1 + $0x8] sm:$0xf]
  %v34 = vld [vmem:[%s1 + $0xc] sm:$0xf]
  %v35 = vld [vmem:[%s1 + $0x10] sm:$0xf]
  %v36 = vld [vmem:[%s1 + $0x14] sm:$0xf]
  %v37 = vld [vmem:[%s1 + $0x18] sm:$0xf]
  %v38 = vld [vmem:[%s1 + $0x1c] sm:$0xf]
  %v39 = vld [vmem:[%s2] sm:$0x1]
  %v41 = vlaneseq
  %v42 = vshrl.u32 %v41, 7
  %v43 = vsub.s32 0, %v42
  %v44 = vrot.slane %v39, %v43
  %v62 = vunpack.c.l.b16 %v15
  %v63 = vunpack.c.l.b16 %v16
  %v64 = vunpack.c.l.b16 %v17
  %v65 = vunpack.c.l.b16 %v18
  %v66 = vunpack.c.l.b16 %v19
  %v67 = vunpack.c.l.b16 %v20
  %v68 = vunpack.c.l.b16 %v21
  %v69 = vunpack.c.l.b16 %v22
  %v70 = vunpack.c.l.b16 %v23
  %v71 = vunpack.c.l.b16 %v24
  %v72 = vunpack.c.l.b16 %v25
  %v73 = vunpack.c.l.b16 %v26
  %v74 = vunpack.c.l.b16 %v27
  %v75 = vunpack.c.l.b16 %v28
  %v76 = vunpack.c.l.b16 %v29
  %v77 = vunpack.c.l.b16 %v30
  %v78 = vpack.c.b16 %v63, %v62
  %v79 = vpack.c.b16 %v65, %v64
  %v80 = vpack.c.b16 %v67, %v66
  %v81 = vpack.c.b16 %v69, %v68
  %v82 = vpack.c.b16 %v71, %v70
  %v83 = vpack.c.b16 %v73, %v72
  %v84 = vpack.c.b16 %v75, %v74
  %v85 = vpack.c.b16 %v77, %v76
  %v94 = vunpack.c.l.b16 %v31
  %v95 = vunpack.c.l.b16 %v32
  %v96 = vunpack.c.l.b16 %v33
  %v97 = vunpack.c.l.b16 %v34
  %v98 = vunpack.c.l.b16 %v35
  %v99 = vunpack.c.l.b16 %v36
  %v100 = vunpack.c.l.b16 %v37
  %v101 = vunpack.c.l.b16 %v38
  %v102 = vpack.c.b16 %v95, %v94
  %v103 = vpack.c.b16 %v97, %v96
  %v104 = vpack.c.b16 %v99, %v98
  %v105 = vpack.c.b16 %v101, %v100
  %vm110 = vcmask 523264
  %v112 = vsel %vm110, %v78, 0
  %v115 = vsel %vm110, %v79, 0
  %v118 = vsel %vm110, %v80, 0
  %v121 = vsel %vm110, %v81, 0
  %v124 = vsel %vm110, %v82, 0
  %v127 = vsel %vm110, %v83, 0
  %v130 = vsel %vm110, %v84, 0
  %v133 = vsel %vm110, %v85, 0
  %135 = vmatprep.subr.bf16.mxu0 0
  %136 = vmatpush1.bf16.msra.mxu0 %v102
  %137 = vmatprep.subr.bf16.mxu0 0
  %138 = vmatpush1.bf16.msra.mxu0 %v103
  %139 = vmatprep.subr.bf16.mxu0 0
  %140 = vmatpush1.bf16.msra.mxu0 %v104
  %141 = vmatprep.subr.bf16.mxu0 0
  %142 = vmatpush1.bf16.msra.mxu0 %v105
  %143 = vmatprep.subr.bf16.mxu0 0
  %144 = vmatpush1.bf16.msra.mxu0 0
  %145 = vmatprep.subr.bf16.mxu0 0
  %146 = vmatpush1.bf16.msra.mxu0 0
  %147 = vmatprep.subr.bf16.mxu0 0
  %148 = vmatpush1.bf16.msra.mxu0 0
  %149 = vmatprep.subr.bf16.mxu0 0
  %150 = vmatpush1.bf16.msra.mxu0 0
  %151 = vmatprep.subr.bf16.mxu0 0
  %152 = vmatpush1.bf16.msra.mxu0 0
  %153 = vmatprep.subr.bf16.mxu0 0
  %154 = vmatpush1.bf16.msra.mxu0 0
  %155 = vmatprep.subr.bf16.mxu0 0
  %156 = vmatpush1.bf16.msra.mxu0 0
  %157 = vmatprep.subr.bf16.mxu0 0
  %158 = vmatpush1.bf16.msra.mxu0 0
  %159 = vmatprep.subr.bf16.mxu0 0
  %160 = vmatpush1.bf16.msra.mxu0 0
  %161 = vmatprep.subr.bf16.mxu0 0
  %162 = vmatpush1.bf16.msra.mxu0 0
  %163 = vmatprep.subr.bf16.mxu0 0
  %164 = vmatpush1.bf16.msra.mxu0 0
  %165 = vmatprep.subr.bf16.mxu0 0
  %166 = vmatpush1.bf16.msra.mxu0 0
  %167 = vmatprep.mubr.bf16.mxu0 0
  %168 = vmatmul.mubr.bf16.gmra.mrb[0].mxu0 %v112
  %v169 = vpop.f32.mrb[0].mxu0
  %v170 = vadd.f32 %v44, %v169
  %v171 = vpop.f32.mrb[0].mxu0
  %v172 = vpop.f32.mrb[0].mxu0
  %v173 = vadd.f32 %v44, %v172
  %v174 = vpop.f32.mrb[0].mxu0
  %175 = vmatprep.mubr.bf16.mxu0 0
  %176 = vmatmul.mubr.bf16.gmra.mrb[0].mxu0 %v115
  %v177 = vpop.f32.mrb[0].mxu0
  %v178 = vadd.f32 %v44, %v177
  %v179 = vpop.f32.mrb[0].mxu0
  %v180 = vpop.f32.mrb[0].mxu0
  %v181 = vadd.f32 %v44, %v180
  %v182 = vpop.f32.mrb[0].mxu0
  %183 = vmatprep.mubr.bf16.mxu0 0
  %184 = vmatmul.mubr.bf16.gmra.mrb[0].mxu0 %v118
  %v185 = vpop.f32.mrb[0].mxu0
  %v186 = vadd.f32 %v44, %v185
  %v187 = vpop.f32.mrb[0].mxu0
  %v188 = vpop.f32.mrb[0].mxu0
  %v189 = vadd.f32 %v44, %v188
  %v190 = vpop.f32.mrb[0].mxu0
  %191 = vmatprep.mubr.bf16.mxu0 0
  %192 = vmatmul.mubr.bf16.gmra.mrb[0].mxu0 %v121
  %v193 = vpop.f32.mrb[0].mxu0
  %v194 = vadd.f32 %v44, %v193
  %v195 = vpop.f32.mrb[0].mxu0
  %v196 = vpop.f32.mrb[0].mxu0
  %v197 = vadd.f32 %v44, %v196
  %v198 = vpop.f32.mrb[0].mxu0
  %199 = vmatprep.mubr.bf16.mxu0 0
  %200 = vmatmul.mubr.bf16.gmra.mrb[0].mxu0 %v124
  %v201 = vpop.f32.mrb[0].mxu0
  %v202 = vadd.f32 %v44, %v201
  %v203 = vpop.f32.mrb[0].mxu0
  %v204 = vpop.f32.mrb[0].mxu0
  %v205 = vadd.f32 %v44, %v204
  %v206 = vpop.f32.mrb[0].mxu0
  %207 = vmatprep.mubr.bf16.mxu0 0
  %208 = vmatmul.mubr.bf16.gmra.mrb[0].mxu0 %v127
  %v209 = vpop.f32.mrb[0].mxu0
  %v210 = vadd.f32 %v44, %v209
  %v211 = vpop.f32.mrb[0].mxu0
  %v212 = vpop.f32.mrb[0].mxu0
  %v213 = vadd.f32 %v44, %v212
  %v214 = vpop.f32.mrb[0].mxu0
  %215 = vmatprep.mubr.bf16.mxu0 0
  %216 = vmatmul.mubr.bf16.gmra.mrb[0].mxu0 %v130
  %v217 = vpop.f32.mrb[0].mxu0
  %v218 = vadd.f32 %v44, %v217
  %v219 = vpop.f32.mrb[0].mxu0
  %v220 = vpop.f32.mrb[0].mxu0
  %v221 = vadd.f32 %v44, %v220
  %v222 = vpop.f32.mrb[0].mxu0
  %223 = vmatprep.mubr.bf16.mxu0 0
  %224 = vmatmul.mubr.bf16.gmra.mrb[0].mxu0 %v133
  %v225 = vpop.f32.mrb[0].mxu0
  %v226 = vadd.f32 %v44, %v225
  %v227 = vpop.f32.mrb[0].mxu0
  %v228 = vpop.f32.mrb[0].mxu0
  %v229 = vadd.f32 %v44, %v228
  %v230 = vpop.f32.mrb[0].mxu0
  %231 = vdwg.mxu0
  %vm232 = vcmask 31744
  %233 = vst.msk [vmem:[%s3] sm:$0xff] %vm232, %v170
  %234 = vst.msk [vmem:[%s3 + $0x8] sm:$0xff] %vm232, %v173
  %235 = vst.msk [vmem:[%s3 + $0x10] sm:$0xff] %vm232, %v178
  %236 = vst.msk [vmem:[%s3 + $0x18] sm:$0xff] %vm232, %v181
  %237 = vst.msk [vmem:[%s3 + $0x20] sm:$0xff] %vm232, %v186
  %238 = vst.msk [vmem:[%s3 + $0x28] sm:$0xff] %vm232, %v189
  %239 = vst.msk [vmem:[%s3 + $0x30] sm:$0xff] %vm232, %v194
  %240 = vst.msk [vmem:[%s3 + $0x38] sm:$0xff] %vm232, %v197
  %241 = vst.msk [vmem:[%s3 + $0x40] sm:$0xff] %vm232, %v202
  %242 = vst.msk [vmem:[%s3 + $0x48] sm:$0xff] %vm232, %v205
  %243 = vst.msk [vmem:[%s3 + $0x50] sm:$0xff] %vm232, %v210
  %244 = vst.msk [vmem:[%s3 + $0x58] sm:$0xff] %vm232, %v213
  %245 = vst.msk [vmem:[%s3 + $0x60] sm:$0xff] %vm232, %v218
  %246 = vst.msk [vmem:[%s3 + $0x68] sm:$0xff] %vm232, %v221
  %247 = vst.msk [vmem:[%s3 + $0x70] sm:$0xff] %vm232, %v226
  %248 = vst.msk [vmem:[%s3 + $0x78] sm:$0xff] %vm232, %v229
  // Predicated region
  $region14: #{down_forward.9} parent=0 // pred_check
    _
  $region15: #{down_forward.9} parent=0 // pred_check_branch
    %250 = sbr.rel (0) target = $region17
  $region16: #{down_forward.9} parent=0 // pred_region
    _
  $region17: #{down_forward.9} parent=0 // pred_fallthru
    _
  // Predicated region
  $region18: #{down_forward.9} parent=0 // pred_check
    _
  $region19: #{down_forward.9} parent=0 // pred_check_branch
    %252 = sbr.rel (0) target = $region21
  $region20: #{down_forward.9} parent=0 // pred_region
    _
  $region21: #{down_forward.9} parent=0 // pred_fallthru
    _

// kernel: tile.64
$region0: #{tile.64}
  %s0 = inlined_call_operand.vmem [shape: f32[8,16], index: 0, kind: input, shape index: {}]
  %s1 = inlined_call_operand.vmem [shape: f32[1,128], index: 1, kind: output, shape index: {}]
  $region1: #{tile.64} parent=0
    #allocation0 [shape = 'u8[4096]{0}', space=vmem, size = 0x1000, scoped, tag = 'scoped mem for output reshape']
    %v2 = vld [vmem:[%s0] sm:$0x1]
    %vm3 = vcmask 130048
    %4 = vst.msk [vmem:[#allocation0] sm:$0x1] %vm3, %v2
    %s5 = scalar_lea.vmem %s0, 7
    %v6 = vld [vmem:[%s5] sm:$0x1]
    %7 = vrot.lane.b32.xlu0 %v6, 112
    %v8 = vpop.permute.xlu0 %7
    %vm9 = vcmask 1048448
    %10 = vst.msk [vmem:[#allocation0] sm:$0x1] %vm9, %v8
    %s11 = scalar_lea.vmem %s0, 6
    %v12 = vld [vmem:[%s11] sm:$0x1]
    %13 = vrot.lane.b32.xlu0 %v12, 96
    %v14 = vpop.permute.xlu0 %13
    %vm15 = vcmask 917248
    %16 = vst.msk [vmem:[#allocation0] sm:$0x1] %vm15, %v14
    %s17 = scalar_lea.vmem %s0, 5
    %v18 = vld [vmem:[%s17] sm:$0x1]
    %19 = vrot.lane.b32.xlu0 %v18, 80
    %v20 = vpop.permute.xlu0 %19
    %vm21 = vcmask 786048
    %22 = vst.msk [vmem:[#allocation0] sm:$0x1] %vm21, %v20
    %s23 = scalar_lea.vmem %s0, 4
    %v24 = vld [vmem:[%s23] sm:$0x1]
    %25 = vrot.lane.b32.xlu0 %v24, 64
    %v26 = vpop.permute.xlu0 %25
    %vm27 = vcmask 654848
    %28 = vst.msk [vmem:[#allocation0] sm:$0x1] %vm27, %v26
    %s29 = scalar_lea.vmem %s0, 3
    %v30 = vld [vmem:[%s29] sm:$0x1]
    %31 = vrot.lane.b32.xlu0 %v30, 48
    %v32 = vpop.permute.xlu0 %31
    %vm33 = vcmask 523648
    %34 = vst.msk [vmem:[#allocation0] sm:$0x1] %vm33, %v32
    %s35 = scalar_lea.vmem %s0, 2
    %v36 = vld [vmem:[%s35] sm:$0x1]
    %37 = vrot.lane.b32.xlu0 %v36, 32
    %v38 = vpop.permute.xlu0 %37
    %vm39 = vcmask 392448
    %40 = vst.msk [vmem:[#allocation0] sm:$0x1] %vm39, %v38
    %s41 = scalar_lea.vmem %s0, 1
    %v42 = vld [vmem:[%s41] sm:$0x1]
    %43 = vrot.lane.b32.xlu0 %v42, 16
    %v44 = vpop.permute.xlu0 %43
    %vm45 = vcmask 261248
    %46 = vst.msk [vmem:[#allocation0] sm:$0x1] %vm45, %v44
    %s48 = sshllo.u32 0, 1
    %v50 = vld [vmem:[#allocation0] sm:%s48]
    %s51 = sshllo.u32 0, 1
    %52 = vst [vmem:[%s1] sm:%s51] %v50

// kernel: tile.63
$region0: #{tile.63}
  #allocation0 [shape = 's32[1]{0}', space=sflag, size = 0x4, scoped, tag = 'scoped memory for tile.63']
  %s0 = inlined_call_operand.vmem [shape: f32[16], index: 0, kind: input, shape index: {}]
  %s1 = inlined_call_operand.vmem [shape: f32[8,16], index: 1, kind: output, shape index: {}]
  // Predicated region
  $region2: #{tile.63} parent=0 // pred_check
    _
  $region3: #{tile.63} parent=0 // pred_check_branch
    %3 = sbr.rel (0) target = $region5
  $region4: #{tile.63} parent=0 // pred_region
    _
  $region5: #{tile.63} parent=0 // pred_fallthru
    _
  %v4 = vld [vmem:[%s0] ss:$0 sm:$0xff]
  %5 = vst [vmem:[%s1] sm:$0xff] %v4

// kernel: down_forward.15
$region0: #{down_forward.15}
  #allocation0 [shape = 'u32[]', space=smem, size = 0x4, offset = 0x4, fixed_abs, tag = 'smem constant byte address 0x4 - core index']
  #allocation1 [shape = 'u32[144,128]{1,0:T(1,128)}', space=vmem, size = 0x12000, scoped, tag = 'internal scratch']
  %s0 = inlined_call_operand.vmem [shape: bf16[16,128], index: 0, kind: input, shape index: {}]
  %s1 = inlined_call_operand.vmem [shape: f32[1,128], index: 1, kind: input, shape index: {}]
  %s2 = inlined_call_operand.vmem [shape: f32[1,128], index: 2, kind: input, shape index: {}]
  %s3 = inlined_call_operand.vmem [shape: bf16[16,128], index: 3, kind: output, shape index: {}]
  %s4 = sld [smem:[#allocation0]]
  $region22: #{down_forward.15} parent=0
    _
  %s6 = ssub.s32 1, %s4
  %s7 = scalar_select 0, %s6, %s4
  // Predicated region
  $region2: #{down_forward.15} parent=0 // pred_check
    _
  $region3: #{down_forward.15} parent=0 // pred_check_branch
    %9 = sbr.rel (0) target = $region5
  $region4: #{down_forward.15} parent=0 // pred_region
    _
  $region5: #{down_forward.15} parent=0 // pred_fallthru
    _
  // Predicated region
  $region6: #{down_forward.15} parent=0 // pred_check
    _
  $region7: #{down_forward.15} parent=0 // pred_check_branch
    %11 = sbr.rel (0) target = $region9
  $region8: #{down_forward.15} parent=0 // pred_region
    _
  $region9: #{down_forward.15} parent=0 // pred_fallthru
    _
  // Predicated region
  $region10: #{down_forward.15} parent=0 // pred_check
    _
  $region11: #{down_forward.15} parent=0 // pred_check_branch
    %13 = sbr.rel (0) target = $region13
  $region12: #{down_forward.15} parent=0 // pred_region
    _
  $region13: #{down_forward.15} parent=0 // pred_fallthru
    _
  %v14 = vld [vmem:[%s0] sm:$0xf]
  %v15 = vld [vmem:[%s0 + $0x4] sm:$0xf]
  %v16 = vunpack.c.l.bf16 %v14
  %v17 = vunpack.c.l.bf16 %v15
  %v18 = vld [vmem:[%s1] sm:$0x1]
  %v20 = vlaneseq
  %v21 = vshrl.u32 %v20, 7
  %v22 = vsub.s32 0, %v21
  %v23 = vrot.slane %v18, %v22
  %v25 = vmul.f32 %v16, %v23
  %v26 = vmul.f32 %v17, %v23
  %v27 = vld [vmem:[%s2] sm:$0x1]
  %v29 = vlaneseq
  %v30 = vshrl.u32 %v29, 7
  %v31 = vsub.s32 0, %v30
  %v32 = vrot.slane %v27, %v31
  %v34 = vadd.f32 %v25, %v32
  %v35 = vadd.f32 %v26, %v32
  %vm36 = vcmp.gt.f32.partialorder %v34, 0.0
  %vm37 = vcmp.gt.f32.partialorder %v35, 0.0
  %v38 = vmul.f32 %v34, 0.01
  %v39 = vmul.f32 %v35, 0.01
  %v40 = vsel %vm36, %v34, %v38
  %v41 = vsel %vm37, %v35, %v39
  %v42 = vpack.c.bf16 %v41, %v40
  %v44 = vunpack.c.l.b16 %v42
  %v45 = vunpack.c.h.b16 %v42
  %v46 = vpack.c.b16 %v44, %v44
  %v47 = vpack.c.b16 %v45, %v45
  %50 = vst [vmem:[%s3] sm:$0xf] %v46
  %51 = vst [vmem:[%s3 + $0x4] sm:$0xf] %v47
  // Predicated region
  $region14: #{down_forward.15} parent=0 // pred_check
    _
  $region15: #{down_forward.15} parent=0 // pred_check_branch
    %53 = sbr.rel (0) target = $region17
  $region16: #{down_forward.15} parent=0 // pred_region
    _
  $region17: #{down_forward.15} parent=0 // pred_fallthru
    _
  // Predicated region
  $region18: #{down_forward.15} parent=0 // pred_check
    _
  $region19: #{down_forward.15} parent=0 // pred_check_branch
    %55 = sbr.rel (0) target = $region21
  $region20: #{down_forward.15} parent=0 // pred_region
    _
  $region21: #{down_forward.15} parent=0 // pred_fallthru
    _

// kernel: down_forward.14
$region0: #{down_forward.14}
  #allocation0 [shape = 'u32[]', space=smem, size = 0x4, offset = 0x4, fixed_abs, tag = 'smem constant byte address 0x4 - core index']
  #allocation1 [shape = 'u32[144,128]{1,0:T(1,128)}', space=vmem, size = 0x12000, scoped, tag = 'internal scratch']
  %s0 = inlined_call_operand.vmem [shape: bf16[80,8], index: 0, kind: input, shape index: {}]
  %s1 = inlined_call_operand.vmem [shape: bf16[8,16], index: 1, kind: input, shape index: {}]
  %s2 = inlined_call_operand.vmem [shape: f32[1,16], index: 2, kind: input, shape index: {}]
  %s3 = inlined_call_operand.vmem [shape: bf16[80,16], index: 3, kind: output, shape index: {}]
  %s4 = sld [smem:[#allocation0]]
  $region22: #{down_forward.14} parent=0
    _
  %s6 = ssub.s32 1, %s4
  %s7 = scalar_select 0, %s6, %s4
  // Predicated region
  $region2: #{down_forward.14} parent=0 // pred_check
    _
  $region3: #{down_forward.14} parent=0 // pred_check_branch
    %9 = sbr.rel (0) target = $region5
  $region4: #{down_forward.14} parent=0 // pred_region
    _
  $region5: #{down_forward.14} parent=0 // pred_fallthru
    _
  // Predicated region
  $region6: #{down_forward.14} parent=0 // pred_check
    _
  $region7: #{down_forward.14} parent=0 // pred_check_branch
    %11 = sbr.rel (0) target = $region9
  $region8: #{down_forward.14} parent=0 // pred_region
    _
  $region9: #{down_forward.14} parent=0 // pred_fallthru
    _
  // Predicated region
  $region10: #{down_forward.14} parent=0 // pred_check
    _
  $region11: #{down_forward.14} parent=0 // pred_check_branch
    %13 = sbr.rel (0) target = $region13
  $region12: #{down_forward.14} parent=0 // pred_region
    _
  $region13: #{down_forward.14} parent=0 // pred_fallthru
    _
  %v15 = vld [vmem:[%s0] sm:$0xf]
  %v16 = vld [vmem:[%s0 + $0x4] sm:$0xf]
  %v17 = vld [vmem:[%s0 + $0x8] sm:$0xf]
  %v18 = vld [vmem:[%s0 + $0xc] sm:$0xf]
  %v19 = vld [vmem:[%s0 + $0x10] sm:$0xf]
  %v20 = vld [vmem:[%s0 + $0x14] sm:$0xf]
  %v21 = vld [vmem:[%s0 + $0x18] sm:$0xf]
  %v22 = vld [vmem:[%s0 + $0x1c] sm:$0xf]
  %v23 = vld [vmem:[%s0 + $0x20] sm:$0xf]
  %v24 = vld [vmem:[%s0 + $0x24] sm:$0xf]
  %v25 = vld [vmem:[%s1] sm:$0xf]
  %v26 = vld [vmem:[%s2] sm:$0x1]
  %v28 = vlaneseq
  %v29 = vshrl.u32 %v28, 7
  %v30 = vsub.s32 0, %v29
  %v31 = vrot.slane %v26, %v30
  %v43 = vunpack.c.l.b16 %v15
  %v44 = vunpack.c.l.b16 %v16
  %v45 = vunpack.c.l.b16 %v17
  %v46 = vunpack.c.l.b16 %v18
  %v47 = vunpack.c.l.b16 %v19
  %v48 = vunpack.c.l.b16 %v20
  %v49 = vunpack.c.l.b16 %v21
  %v50 = vunpack.c.l.b16 %v22
  %v51 = vunpack.c.l.b16 %v23
  %v52 = vunpack.c.l.b16 %v24
  %v53 = vpack.c.b16 %v44, %v43
  %v54 = vpack.c.b16 %v46, %v45
  %v55 = vpack.c.b16 %v48, %v47
  %v56 = vpack.c.b16 %v50, %v49
  %v57 = vpack.c.b16 %v52, %v51
  %vm58 = vcmask 64512
  %v60 = vsel %vm58, %v53, 0
  %v63 = vsel %vm58, %v54, 0
  %v66 = vsel %vm58, %v55, 0
  %v69 = vsel %vm58, %v56, 0
  %v72 = vsel %vm58, %v57, 0
  %vm74 = vcmask 1043456
  %v76 = vsel %vm74, %v25, 0
  %78 = vmatprep.subr.bf16.mxu0 0
  %79 = vmatpush1.bf16.msra.mxu0 %v76
  %80 = vmatprep.subr.bf16.mxu0 0
  %81 = vmatpush1.bf16.msra.mxu0 0
  %82 = vmatprep.subr.bf16.mxu0 0
  %83 = vmatpush1.bf16.msra.mxu0 0
  %84 = vmatprep.subr.bf16.mxu0 0
  %85 = vmatpush1.bf16.msra.mxu0 0
  %86 = vmatprep.subr.bf16.mxu0 0
  %87 = vmatpush1.bf16.msra.mxu0 0
  %88 = vmatprep.subr.bf16.mxu0 0
  %89 = vmatpush1.bf16.msra.mxu0 0
  %90 = vmatprep.subr.bf16.mxu0 0
  %91 = vmatpush1.bf16.msra.mxu0 0
  %92 = vmatprep.subr.bf16.mxu0 0
  %93 = vmatpush1.bf16.msra.mxu0 0
  %94 = vmatprep.subr.bf16.mxu0 0
  %95 = vmatpush1.bf16.msra.mxu0 0
  %96 = vmatprep.subr.bf16.mxu0 0
  %97 = vmatpush1.bf16.msra.mxu0 0
  %98 = vmatprep.subr.bf16.mxu0 0
  %99 = vmatpush1.bf16.msra.mxu0 0
  %100 = vmatprep.subr.bf16.mxu0 0
  %101 = vmatpush1.bf16.msra.mxu0 0
  %102 = vmatprep.subr.bf16.mxu0 0
  %103 = vmatpush1.bf16.msra.mxu0 0
  %104 = vmatprep.subr.bf16.mxu0 0
  %105 = vmatpush1.bf16.msra.mxu0 0
  %106 = vmatprep.subr.bf16.mxu0 0
  %107 = vmatpush1.bf16.msra.mxu0 0
  %108 = vmatprep.subr.bf16.mxu0 0
  %109 = vmatpush1.bf16.msra.mxu0 0
  %110 = vmatprep.mubr.bf16.mxu0 0
  %111 = vmatmul.mubr.bf16.gmra.mrb[0].mxu0 %v60
  %v112 = vpop.f32.mrb[0].mxu0
  %v113 = vadd.f32 %v31, %v112
  %v114 = vpop.f32.mrb[0].mxu0
  %v115 = vpop.f32.mrb[0].mxu0
  %v116 = vadd.f32 %v31, %v115
  %v117 = vpop.f32.mrb[0].mxu0
  %118 = vmatprep.mubr.bf16.mxu0 0
  %119 = vmatmul.mubr.bf16.gmra.mrb[0].mxu0 %v63
  %v120 = vpop.f32.mrb[0].mxu0
  %v121 = vadd.f32 %v31, %v120
  %v122 = vpop.f32.mrb[0].mxu0
  %v123 = vpop.f32.mrb[0].mxu0
  %v124 = vadd.f32 %v31, %v123
  %v125 = vpop.f32.mrb[0].mxu0
  %126 = vmatprep.mubr.bf16.mxu0 0
  %127 = vmatmul.mubr.bf16.gmra.mrb[0].mxu0 %v66
  %v128 = vpop.f32.mrb[0].mxu0
  %v129 = vadd.f32 %v31, %v128
  %v130 = vpop.f32.mrb[0].mxu0
  %v131 = vpop.f32.mrb[0].mxu0
  %v132 = vadd.f32 %v31, %v131
  %v133 = vpop.f32.mrb[0].mxu0
  %134 = vmatprep.mubr.bf16.mxu0 0
  %135 = vmatmul.mubr.bf16.gmra.mrb[0].mxu0 %v69
  %v136 = vpop.f32.mrb[0].mxu0
  %v137 = vadd.f32 %v31, %v136
  %v138 = vpop.f32.mrb[0].mxu0
  %v139 = vpop.f32.mrb[0].mxu0
  %v140 = vadd.f32 %v31, %v139
  %v141 = vpop.f32.mrb[0].mxu0
  %142 = vmatprep.mubr.bf16.mxu0 0
  %143 = vmatmul.mubr.bf16.gmra.mrb[0].mxu0 %v72
  %v144 = vpop.f32.mrb[0].mxu0
  %v145 = vadd.f32 %v31, %v144
  %v146 = vpop.f32.mrb[0].mxu0
  %v147 = vpop.f32.mrb[0].mxu0
  %v148 = vadd.f32 %v31, %v147
  %v149 = vpop.f32.mrb[0].mxu0
  %150 = vdwg.mxu0
  %v151 = vpack.c.bf16 %v116, %v113
  %v152 = vpack.c.bf16 %v124, %v121
  %v153 = vpack.c.bf16 %v132, %v129
  %v154 = vpack.c.bf16 %v140, %v137
  %v155 = vpack.c.bf16 %v148, %v145
  %v161 = vunpack.c.l.b16 %v151
  %v162 = vunpack.c.h.b16 %v151
  %v163 = vunpack.c.l.b16 %v152
  %v164 = vunpack.c.h.b16 %v152
  %v165 = vunpack.c.l.b16 %v153
  %v166 = vunpack.c.h.b16 %v153
  %v167 = vunpack.c.l.b16 %v154
  %v168 = vunpack.c.h.b16 %v154
  %v169 = vunpack.c.l.b16 %v155
  %v170 = vunpack.c.h.b16 %v155
  %v171 = vpack.c.b16 %v161, %v161
  %v172 = vpack.c.b16 %v162, %v162
  %v173 = vpack.c.b16 %v163, %v163
  %v174 = vpack.c.b16 %v164, %v164
  %v175 = vpack.c.b16 %v165, %v165
  %v176 = vpack.c.b16 %v166, %v166
  %v177 = vpack.c.b16 %v167, %v167
  %v178 = vpack.c.b16 %v168, %v168
  %v179 = vpack.c.b16 %v169, %v169
  %v180 = vpack.c.b16 %v170, %v170
  %vm191 = vcmask 125952
  %192 = vst.msk [vmem:[%s3] sm:$0xf] %vm191, %v171
  %193 = vst.msk [vmem:[%s3 + $0x4] sm:$0xf] %vm191, %v172
  %194 = vst.msk [vmem:[%s3 + $0x8] sm:$0xf] %vm191, %v173
  %195 = vst.msk [vmem:[%s3 + $0xc] sm:$0xf] %vm191, %v174
  %196 = vst.msk [vmem:[%s3 + $0x10] sm:$0xf] %vm191, %v175
  %197 = vst.msk [vmem:[%s3 + $0x14] sm:$0xf] %vm191, %v176
  %198 = vst.msk [vmem:[%s3 + $0x18] sm:$0xf] %vm191, %v177
  %199 = vst.msk [vmem:[%s3 + $0x1c] sm:$0xf] %vm191, %v178
  %200 = vst.msk [vmem:[%s3 + $0x20] sm:$0xf] %vm191, %v179
  %201 = vst.msk [vmem:[%s3 + $0x24] sm:$0xf] %vm191, %v180
  // Predicated region
  $region14: #{down_forward.14} parent=0 // pred_check
    _
  $region15: #{down_forward.14} parent=0 // pred_check_branch
    %203 = sbr.rel (0) target = $region17
  $region16: #{down_forward.14} parent=0 // pred_region
    _
  $region17: #{down_forward.14} parent=0 // pred_fallthru
    _
  // Predicated region
  $region18: #{down_forward.14} parent=0 // pred_check
    _
  $region19: #{down_forward.14} parent=0 // pred_check_branch
    %205 = sbr.rel (0) target = $region21
  $region20: #{down_forward.14} parent=0 // pred_region
    _
  $region21: #{down_forward.14} parent=0 // pred_fallthru
    _

// kernel: down_forward.17
$region0: #{down_forward.17}
  #allocation0 [shape = 'u32[]', space=smem, size = 0x4, offset = 0x4, fixed_abs, tag = 'smem constant byte address 0x4 - core index']
  #allocation1 [shape = 'u32[144,128]{1,0:T(1,128)}', space=vmem, size = 0x12000, scoped, tag = 'internal scratch']
  %s0 = inlined_call_operand.vmem [shape: bf16[16,128], index: 0, kind: input, shape index: {}]
  %s1 = inlined_call_operand.vmem [shape: f32[1,128], index: 1, kind: input, shape index: {}]
  %s2 = inlined_call_operand.vmem [shape: f32[1,128], index: 2, kind: input, shape index: {}]
  %s3 = inlined_call_operand.vmem [shape: f32[16,128], index: 3, kind: output, shape index: {}]
  %s4 = sld [smem:[#allocation0]]
  $region22: #{down_forward.17} parent=0
    _
  %s6 = ssub.s32 1, %s4
  %s7 = scalar_select 0, %s6, %s4
  // Predicated region
  $region2: #{down_forward.17} parent=0 // pred_check
    _
  $region3: #{down_forward.17} parent=0 // pred_check_branch
    %9 = sbr.rel (0) target = $region5
  $region4: #{down_forward.17} parent=0 // pred_region
    _
  $region5: #{down_forward.17} parent=0 // pred_fallthru
    _
  // Predicated region
  $region6: #{down_forward.17} parent=0 // pred_check
    _
  $region7: #{down_forward.17} parent=0 // pred_check_branch
    %11 = sbr.rel (0) target = $region9
  $region8: #{down_forward.17} parent=0 // pred_region
    _
  $region9: #{down_forward.17} parent=0 // pred_fallthru
    _
  // Predicated region
  $region10: #{down_forward.17} parent=0 // pred_check
    _
  $region11: #{down_forward.17} parent=0 // pred_check_branch
    %13 = sbr.rel (0) target = $region13
  $region12: #{down_forward.17} parent=0 // pred_region
    _
  $region13: #{down_forward.17} parent=0 // pred_fallthru
    _
  %v14 = vld [vmem:[%s0] sm:$0xf]
  %v15 = vld [vmem:[%s0 + $0x4] sm:$0xf]
  %v16 = vunpack.c.l.bf16 %v14
  %v17 = vunpack.c.l.bf16 %v15
  %v18 = vld [vmem:[%s1] sm:$0x1]
  %v20 = vlaneseq
  %v21 = vshrl.u32 %v20, 7
  %v22 = vsub.s32 0, %v21
  %v23 = vrot.slane %v18, %v22
  %v25 = vmul.f32 %v16, %v23
  %v26 = vmul.f32 %v17, %v23
  %v27 = vld [vmem:[%s2] sm:$0x1]
  %v29 = vlaneseq
  %v30 = vshrl.u32 %v29, 7
  %v31 = vsub.s32 0, %v30
  %v32 = vrot.slane %v27, %v31
  %v34 = vadd.f32 %v25, %v32
  %v35 = vadd.f32 %v26, %v32
  %vm36 = vcmp.gt.f32.partialorder %v34, 0.0
  %vm37 = vcmp.gt.f32.partialorder %v35, 0.0
  %v38 = vmul.f32 %v34, 0.01
  %v39 = vmul.f32 %v35, 0.01
  %v40 = vsel %vm36, %v34, %v38
  %v41 = vsel %vm37, %v35, %v39
  %42 = vst [vmem:[%s3] sm:$0xff] %v40
  %43 = vst [vmem:[%s3 + $0x8] sm:$0xff] %v41
  // Predicated region
  $region14: #{down_forward.17} parent=0 // pred_check
    _
  $region15: #{down_forward.17} parent=0 // pred_check_branch
    %45 = sbr.rel (0) target = $region17
  $region16: #{down_forward.17} parent=0 // pred_region
    _
  $region17: #{down_forward.17} parent=0 // pred_fallthru
    _
  // Predicated region
  $region18: #{down_forward.17} parent=0 // pred_check
    _
  $region19: #{down_forward.17} parent=0 // pred_check_branch
    %47 = sbr.rel (0) target = $region21
  $region20: #{down_forward.17} parent=0 // pred_region
    _
  $region21: #{down_forward.17} parent=0 // pred_fallthru
    _

// kernel: down_forward.16
$region0: #{down_forward.16}
  #allocation0 [shape = 'u32[]', space=smem, size = 0x4, offset = 0x4, fixed_abs, tag = 'smem constant byte address 0x4 - core index']
  #allocation1 [shape = 'u32[144,128]{1,0:T(1,128)}', space=vmem, size = 0x12000, scoped, tag = 'internal scratch']
  %s0 = inlined_call_operand.vmem [shape: bf16[80,16], index: 0, kind: input, shape index: {}]
  %s1 = inlined_call_operand.vmem [shape: bf16[16,16], index: 1, kind: input, shape index: {}]
  %s2 = inlined_call_operand.vmem [shape: f32[1,16], index: 2, kind: input, shape index: {}]
  %s3 = inlined_call_operand.vmem [shape: bf16[80,16], index: 3, kind: output, shape index: {}]
  %s4 = sld [smem:[#allocation0]]
  $region22: #{down_forward.16} parent=0
    _
  %s6 = ssub.s32 1, %s4
  %s7 = scalar_select 0, %s6, %s4
  // Predicated region
  $region2: #{down_forward.16} parent=0 // pred_check
    _
  $region3: #{down_forward.16} parent=0 // pred_check_branch
    %9 = sbr.rel (0) target = $region5
  $region4: #{down_forward.16} parent=0 // pred_region
    _
  $region5: #{down_forward.16} parent=0 // pred_fallthru
    _
  // Predicated region
  $region6: #{down_forward.16} parent=0 // pred_check
    _
  $region7: #{down_forward.16} parent=0 // pred_check_branch
    %11 = sbr.rel (0) target = $region9
  $region8: #{down_forward.16} parent=0 // pred_region
    _
  $region9: #{down_forward.16} parent=0 // pred_fallthru
    _
  // Predicated region
  $region10: #{down_forward.16} parent=0 // pred_check
    _
  $region11: #{down_forward.16} parent=0 // pred_check_branch
    %13 = sbr.rel (0) target = $region13
  $region12: #{down_forward.16} parent=0 // pred_region
    _
  $region13: #{down_forward.16} parent=0 // pred_fallthru
    _
  %v15 = vld [vmem:[%s0] sm:$0xf]
  %v16 = vld [vmem:[%s0 + $0x4] sm:$0xf]
  %v17 = vld [vmem:[%s0 + $0x8] sm:$0xf]
  %v18 = vld [vmem:[%s0 + $0xc] sm:$0xf]
  %v19 = vld [vmem:[%s0 + $0x10] sm:$0xf]
  %v20 = vld [vmem:[%s0 + $0x14] sm:$0xf]
  %v21 = vld [vmem:[%s0 + $0x18] sm:$0xf]
  %v22 = vld [vmem:[%s0 + $0x1c] sm:$0xf]
  %v23 = vld [vmem:[%s0 + $0x20] sm:$0xf]
  %v24 = vld [vmem:[%s0 + $0x24] sm:$0xf]
  %v25 = vld [vmem:[%s1] sm:$0xf]
  %v26 = vld [vmem:[%s1 + $0x4] sm:$0xf]
  %v27 = vld [vmem:[%s2] sm:$0x1]
  %v29 = vlaneseq
  %v30 = vshrl.u32 %v29, 7
  %v31 = vsub.s32 0, %v30
  %v32 = vrot.slane %v27, %v31
  %v44 = vunpack.c.l.b16 %v15
  %v45 = vunpack.c.l.b16 %v16
  %v46 = vunpack.c.l.b16 %v17
  %v47 = vunpack.c.l.b16 %v18
  %v48 = vunpack.c.l.b16 %v19
  %v49 = vunpack.c.l.b16 %v20
  %v50 = vunpack.c.l.b16 %v21
  %v51 = vunpack.c.l.b16 %v22
  %v52 = vunpack.c.l.b16 %v23
  %v53 = vunpack.c.l.b16 %v24
  %v54 = vpack.c.b16 %v45, %v44
  %v55 = vpack.c.b16 %v47, %v46
  %v56 = vpack.c.b16 %v49, %v48
  %v57 = vpack.c.b16 %v51, %v50
  %v58 = vpack.c.b16 %v53, %v52
  %v61 = vunpack.c.l.b16 %v25
  %v62 = vunpack.c.l.b16 %v26
  %v63 = vpack.c.b16 %v62, %v61
  %vm65 = vcmask 130048
  %v67 = vsel %vm65, %v54, 0
  %v70 = vsel %vm65, %v55, 0
  %v73 = vsel %vm65, %v56, 0
  %v76 = vsel %vm65, %v57, 0
  %v79 = vsel %vm65, %v58, 0
  %81 = vmatprep.subr.bf16.mxu0 0
  %82 = vmatpush1.bf16.msra.mxu0 %v63
  %83 = vmatprep.subr.bf16.mxu0 0
  %84 = vmatpush1.bf16.msra.mxu0 0
  %85 = vmatprep.subr.bf16.mxu0 0
  %86 = vmatpush1.bf16.msra.mxu0 0
  %87 = vmatprep.subr.bf16.mxu0 0
  %88 = vmatpush1.bf16.msra.mxu0 0
  %89 = vmatprep.subr.bf16.mxu0 0
  %90 = vmatpush1.bf16.msra.mxu0 0
  %91 = vmatprep.subr.bf16.mxu0 0
  %92 = vmatpush1.bf16.msra.mxu0 0
  %93 = vmatprep.subr.bf16.mxu0 0
  %94 = vmatpush1.bf16.msra.mxu0 0
  %95 = vmatprep.subr.bf16.mxu0 0
  %96 = vmatpush1.bf16.msra.mxu0 0
  %97 = vmatprep.subr.bf16.mxu0 0
  %98 = vmatpush1.bf16.msra.mxu0 0
  %99 = vmatprep.subr.bf16.mxu0 0
  %100 = vmatpush1.bf16.msra.mxu0 0
  %101 = vmatprep.subr.bf16.mxu0 0
  %102 = vmatpush1.bf16.msra.mxu0 0
  %103 = vmatprep.subr.bf16.mxu0 0
  %104 = vmatpush1.bf16.msra.mxu0 0
  %105 = vmatprep.subr.bf16.mxu0 0
  %106 = vmatpush1.bf16.msra.mxu0 0
  %107 = vmatprep.subr.bf16.mxu0 0
  %108 = vmatpush1.bf16.msra.mxu0 0
  %109 = vmatprep.subr.bf16.mxu0 0
  %110 = vmatpush1.bf16.msra.mxu0 0
  %111 = vmatprep.subr.bf16.mxu0 0
  %112 = vmatpush1.bf16.msra.mxu0 0
  %113 = vmatprep.mubr.bf16.mxu0 0
  %114 = vmatmul.mubr.bf16.gmra.mrb[0].mxu0 %v67
  %v115 = vpop.f32.mrb[0].mxu0
  %v116 = vadd.f32 %v32, %v115
  %v117 = vpop.f32.mrb[0].mxu0
  %v118 = vpop.f32.mrb[0].mxu0
  %v119 = vadd.f32 %v32, %v118
  %v120 = vpop.f32.mrb[0].mxu0
  %121 = vmatprep.mubr.bf16.mxu0 0
  %122 = vmatmul.mubr.bf16.gmra.mrb[0].mxu0 %v70
  %v123 = vpop.f32.mrb[0].mxu0
  %v124 = vadd.f32 %v32, %v123
  %v125 = vpop.f32.mrb[0].mxu0
  %v126 = vpop.f32.mrb[0].mxu0
  %v127 = vadd.f32 %v32, %v126
  %v128 = vpop.f32.mrb[0].mxu0
  %129 = vmatprep.mubr.bf16.mxu0 0
  %130 = vmatmul.mubr.bf16.gmra.mrb[0].mxu0 %v73
  %v131 = vpop.f32.mrb[0].mxu0
  %v132 = vadd.f32 %v32, %v131
  %v133 = vpop.f32.mrb[0].mxu0
  %v134 = vpop.f32.mrb[0].mxu0
  %v135 = vadd.f32 %v32, %v134
  %v136 = vpop.f32.mrb[0].mxu0
  %137 = vmatprep.mubr.bf16.mxu0 0
  %138 = vmatmul.mubr.bf16.gmra.mrb[0].mxu0 %v76
  %v139 = vpop.f32.mrb[0].mxu0
  %v140 = vadd.f32 %v32, %v139
  %v141 = vpop.f32.mrb[0].mxu0
  %v142 = vpop.f32.mrb[0].mxu0
  %v143 = vadd.f32 %v32, %v142
  %v144 = vpop.f32.mrb[0].mxu0
  %145 = vmatprep.mubr.bf16.mxu0 0
  %146 = vmatmul.mubr.bf16.gmra.mrb[0].mxu0 %v79
  %v147 = vpop.f32.mrb[0].mxu0
  %v148 = vadd.f32 %v32, %v147
  %v149 = vpop.f32.mrb[0].mxu0
  %v150 = vpop.f32.mrb[0].mxu0
  %v151 = vadd.f32 %v32, %v150
  %v152 = vpop.f32.mrb[0].mxu0
  %153 = vdwg.mxu0
  %v154 = vpack.c.bf16 %v119, %v116
  %v155 = vpack.c.bf16 %v127, %v124
  %v156 = vpack.c.bf16 %v135, %v132
  %v157 = vpack.c.bf16 %v143, %v140
  %v158 = vpack.c.bf16 %v151, %v148
  %v164 = vunpack.c.l.b16 %v154
  %v165 = vunpack.c.h.b16 %v154
  %v166 = vunpack.c.l.b16 %v155
  %v167 = vunpack.c.h.b16 %v155
  %v168 = vunpack.c.l.b16 %v156
  %v169 = vunpack.c.h.b16 %v156
  %v170 = vunpack.c.l.b16 %v157
  %v171 = vunpack.c.h.b16 %v157
  %v172 = vunpack.c.l.b16 %v158
  %v173 = vunpack.c.h.b16 %v158
  %v174 = vpack.c.b16 %v164, %v164
  %v175 = vpack.c.b16 %v165, %v165
  %v176 = vpack.c.b16 %v166, %v166
  %v177 = vpack.c.b16 %v167, %v167
  %v178 = vpack.c.b16 %v168, %v168
  %v179 = vpack.c.b16 %v169, %v169
  %v180 = vpack.c.b16 %v170, %v170
  %v181 = vpack.c.b16 %v171, %v171
  %v182 = vpack.c.b16 %v172, %v172
  %v183 = vpack.c.b16 %v173, %v173
  %vm194 = vcmask 125952
  %195 = vst.msk [vmem:[%s3] sm:$0xf] %vm194, %v174
  %196 = vst.msk [vmem:[%s3 + $0x4] sm:$0xf] %vm194, %v175
  %197 = vst.msk [vmem:[%s3 + $0x8] sm:$0xf] %vm194, %v176
  %198 = vst.msk [vmem:[%s3 + $0xc] sm:$0xf] %vm194, %v177
  %199 = vst.msk [vmem:[%s3 + $0x10] sm:$0xf] %vm194, %v178
  %200 = vst.msk [vmem:[%s3 + $0x14] sm:$0xf] %vm194, %v179
  %201 = vst.msk [vmem:[%s3 + $0x18] sm:$0xf] %vm194, %v180
  %202 = vst.msk [vmem:[%s3 + $0x1c] sm:$0xf] %vm194, %v181
  %203 = vst.msk [vmem:[%s3 + $0x20] sm:$0xf] %vm194, %v182
  %204 = vst.msk [vmem:[%s3 + $0x24] sm:$0xf] %vm194, %v183
  // Predicated region
  $region14: #{down_forward.16} parent=0 // pred_check
    _
  $region15: #{down_forward.16} parent=0 // pred_check_branch
    %206 = sbr.rel (0) target = $region17
  $region16: #{down_forward.16} parent=0 // pred_region
    _
  $region17: #{down_forward.16} parent=0 // pred_fallthru
    _
  // Predicated region
  $region18: #{down_forward.16} parent=0 // pred_check
    _
  $region19: #{down_forward.16} parent=0 // pred_check_branch
    %208 = sbr.rel (0) target = $region21
  $region20: #{down_forward.16} parent=0 // pred_region
    _
  $region21: #{down_forward.16} parent=0 // pred_fallthru
    _

// kernel: reverse.1
$region0: #{reverse.1}
  #allocation0 [shape = 's32[1]{0}', space=sflag, size = 0x4, scoped, tag = 'scoped memory for reverse.1']
  %s0 = inlined_call_operand.vmem [shape: f32[2,8,8,3], index: 0, kind: input, shape index: {}]
  %s1 = inlined_call_operand.vmem [shape: f32[2,8,8,3], index: 1, kind: output, shape index: {}]
  %s2 = scalar_lea.vmem %s0, 16
  %v3 = vld [vmem:[%s2] sm:$0xff]
  %4 = vst [vmem:[%s1] sm:$0xff] %v3
  %s5 = scalar_lea.vmem %s0, 40
  %v6 = vld [vmem:[%s5] sm:$0xff]
  %s7 = scalar_lea.vmem %s1, 24
  %8 = vst [vmem:[%s7] sm:$0xff] %v6
  %s9 = scalar_lea.vmem %s0, 8
  %v10 = vld [vmem:[%s9] sm:$0xff]
  %s11 = scalar_lea.vmem %s1, 8
  %12 = vst [vmem:[%s11] sm:$0xff] %v10
  %s13 = scalar_lea.vmem %s0, 32
  %v14 = vld [vmem:[%s13] sm:$0xff]
  %s15 = scalar_lea.vmem %s1, 32
  %16 = vst [vmem:[%s15] sm:$0xff] %v14
  %v17 = vld [vmem:[%s0] sm:$0xff]
  %s18 = scalar_lea.vmem %s1, 16
  %19 = vst [vmem:[%s18] sm:$0xff] %v17
  %s20 = scalar_lea.vmem %s0, 24
  %v21 = vld [vmem:[%s20] sm:$0xff]
  %s22 = scalar_lea.vmem %s1, 40
  %23 = vst [vmem:[%s22] sm:$0xff] %v21

// kernel: tile.43
$region0: #{tile.43}
  #allocation0 [shape = 's32[1]{0}', space=sflag, size = 0x4, scoped, tag = 'scoped memory for tile.43']
  %s0 = inlined_call_operand.vmem [shape: f32[8], index: 0, kind: input, shape index: {}]
  %s1 = inlined_call_operand.vmem [shape: f32[16,8], index: 1, kind: output, shape index: {}]
  // Predicated region
  $region2: #{tile.43} parent=0 // pred_check
    _
  $region3: #{tile.43} parent=0 // pred_check_branch
    %3 = sbr.rel (0) target = $region5
  $region4: #{tile.43} parent=0 // pred_region
    _
  $region5: #{tile.43} parent=0 // pred_fallthru
    _
  %v4 = vld [vmem:[%s0] ss:$0 sm:$0xff]
  %5 = vst [vmem:[%s1] sm:$0xff] %v4
  %s6 = scalar_lea.vmem %s1, 8
  %7 = vst [vmem:[%s6] sm:$0xff] %v4

// kernel: tile.44
$region0: #{tile.44}
  %s0 = inlined_call_operand.vmem [shape: f32[16,8], index: 0, kind: input, shape index: {}]
  %s1 = inlined_call_operand.vmem [shape: f32[1,128], index: 1, kind: output, shape index: {}]
  $region1: #{tile.44} parent=0
    #allocation0 [shape = 'u8[4096]{0}', space=vmem, size = 0x1000, scoped, tag = 'scoped mem for output reshape']
    %v2 = vld [vmem:[%s0] sm:$0x1]
    %vm3 = vcmask 64512
    %4 = vst.msk [vmem:[#allocation0] sm:$0x1] %vm3, %v2
    %s5 = scalar_lea.vmem %s0, 15
    %v6 = vld [vmem:[%s5] sm:$0x1]
    %7 = vrot.lane.b32.xlu0 %v6, 120
    %v8 = vpop.permute.xlu0 %7
    %vm9 = vcmask 1048512
    %10 = vst.msk [vmem:[#allocation0] sm:$0x1] %vm9, %v8
    %s11 = scalar_lea.vmem %s0, 14
    %v12 = vld [vmem:[%s11] sm:$0x1]
    %13 = vrot.lane.b32.xlu0 %v12, 112
    %v14 = vpop.permute.xlu0 %13
    %vm15 = vcmask 982912
    %16 = vst.msk [vmem:[#allocation0] sm:$0x1] %vm15, %v14
    %s17 = scalar_lea.vmem %s0, 13
    %v18 = vld [vmem:[%s17] sm:$0x1]
    %19 = vrot.lane.b32.xlu0 %v18, 104
    %v20 = vpop.permute.xlu0 %19
    %vm21 = vcmask 917312
    %22 = vst.msk [vmem:[#allocation0] sm:$0x1] %vm21, %v20
    %s23 = scalar_lea.vmem %s0, 12
    %v24 = vld [vmem:[%s23] sm:$0x1]
    %25 = vrot.lane.b32.xlu0 %v24, 96
    %v26 = vpop.permute.xlu0 %25
    %vm27 = vcmask 851712
    %28 = vst.msk [vmem:[#allocation0] sm:$0x1] %vm27, %v26
    %s29 = scalar_lea.vmem %s0, 11
    %v30 = vld [vmem:[%s29] sm:$0x1]
    %31 = vrot.lane.b32.xlu0 %v30, 88
    %v32 = vpop.permute.xlu0 %31
    %vm33 = vcmask 786112
    %34 = vst.msk [vmem:[#allocation0] sm:$0x1] %vm33, %v32
    %s35 = scalar_lea.vmem %s0, 10
    %v36 = vld [vmem:[%s35] sm:$0x1]
    %37 = vrot.lane.b32.xlu0 %v36, 80
    %v38 = vpop.permute.xlu0 %37
    %vm39 = vcmask 720512
    %40 = vst.msk [vmem:[#allocation0] sm:$0x1] %vm39, %v38
    %s41 = scalar_lea.vmem %s0, 9
    %v42 = vld [vmem:[%s41] sm:$0x1]
    %43 = vrot.lane.b32.xlu0 %v42, 72
    %v44 = vpop.permute.xlu0 %43
    %vm45 = vcmask 654912
    %46 = vst.msk [vmem:[#allocation0] sm:$0x1] %vm45, %v44
    %s47 = scalar_lea.vmem %s0, 8
    %v48 = vld [vmem:[%s47] sm:$0x1]
    %49 = vrot.lane.b32.xlu0 %v48, 64
    %v50 = vpop.permute.xlu0 %49
    %vm51 = vcmask 589312
    %52 = vst.msk [vmem:[#allocation0] sm:$0x1] %vm51, %v50
    %s53 = scalar_lea.vmem %s0, 7
    %v54 = vld [vmem:[%s53] sm:$0x1]
    %55 = vrot.lane.b32.xlu0 %v54, 56
    %v56 = vpop.permute.xlu0 %55
    %vm57 = vcmask 523712
    %58 = vst.msk [vmem:[#allocation0] sm:$0x1] %vm57, %v56
    %s59 = scalar_lea.vmem %s0, 6
    %v60 = vld [vmem:[%s59] sm:$0x1]
    %61 = vrot.lane.b32.xlu0 %v60, 48
    %v62 = vpop.permute.xlu0 %61
    %vm63 = vcmask 458112
    %64 = vst.msk [vmem:[#allocation0] sm:$0x1] %vm63, %v62
    %s65 = scalar_lea.vmem %s0, 5
    %v66 = vld [vmem:[%s65] sm:$0x1]
    %67 = vrot.lane.b32.xlu0 %v66, 40
    %v68 = vpop.permute.xlu0 %67
    %vm69 = vcmask 392512
    %70 = vst.msk [vmem:[#allocation0] sm:$0x1] %vm69, %v68
    %s71 = scalar_lea.vmem %s0, 4
    %v72 = vld [vmem:[%s71] sm:$0x1]
    %73 = vrot.lane.b32.xlu0 %v72, 32
    %v74 = vpop.permute.xlu0 %73
    %vm75 = vcmask 326912
    %76 = vst.msk [vmem:[#allocation0] sm:$0x1] %vm75, %v74
    %s77 = scalar_lea.vmem %s0, 3
    %v78 = vld [vmem:[%s77] sm:$0x1]
    %79 = vrot.lane.b32.xlu0 %v78, 24
    %v80 = vpop.permute.xlu0 %79
    %vm81 = vcmask 261312
    %82 = vst.msk [vmem:[#allocation0] sm:$0x1] %vm81, %v80
    %s83 = scalar_lea.vmem %s0, 2
    %v84 = vld [vmem:[%s83] sm:$0x1]
    %85 = vrot.lane.b32.xlu0 %v84, 16
    %v86 = vpop.permute.xlu0 %85
    %vm87 = vcmask 195712
    %88 = vst.msk [vmem:[#allocation0] sm:$0x1] %vm87, %v86
    %s89 = scalar_lea.vmem %s0, 1
    %v90 = vld [vmem:[%s89] sm:$0x1]
    %91 = vrot.lane.b32.xlu0 %v90, 8
    %v92 = vpop.permute.xlu0 %91
    %vm93 = vcmask 130112
    %94 = vst.msk [vmem:[#allocation0] sm:$0x1] %vm93, %v92
    %s96 = sshllo.u32 0, 1
    %v98 = vld [vmem:[#allocation0] sm:%s96]
    %s99 = sshllo.u32 0, 1
    %100 = vst [vmem:[%s1] sm:%s99] %v98

// kernel: down_forward.11
$region0: #{down_forward.11}
  #allocation0 [shape = 'u32[]', space=smem, size = 0x4, offset = 0x4, fixed_abs, tag = 'smem constant byte address 0x4 - core index']
  #allocation1 [shape = 'u32[144,128]{1,0:T(1,128)}', space=vmem, size = 0x12000, scoped, tag = 'internal scratch']
  %s0 = inlined_call_operand.vmem [shape: bf16[8,128], index: 0, kind: input, shape index: {}]
  %s1 = inlined_call_operand.vmem [shape: f32[1,128], index: 1, kind: input, shape index: {}]
  %s2 = inlined_call_operand.vmem [shape: f32[1,128], index: 2, kind: input, shape index: {}]
  %s3 = inlined_call_operand.vmem [shape: bf16[8,128], index: 3, kind: output, shape index: {}]
  %s4 = sld [smem:[#allocation0]]
  $region22: #{down_forward.11} parent=0
    _
  %s6 = ssub.s32 1, %s4
  %s7 = scalar_select 0, %s6, %s4
  // Predicated region
  $region2: #{down_forward.11} parent=0 // pred_check
    _
  $region3: #{down_forward.11} parent=0 // pred_check_branch
    %9 = sbr.rel (0) target = $region5
  $region4: #{down_forward.11} parent=0 // pred_region
    _
  $region5: #{down_forward.11} parent=0 // pred_fallthru
    _
  // Predicated region
  $region6: #{down_forward.11} parent=0 // pred_check
    _
  $region7: #{down_forward.11} parent=0 // pred_check_branch
    %11 = sbr.rel (0) target = $region9
  $region8: #{down_forward.11} parent=0 // pred_region
    _
  $region9: #{down_forward.11} parent=0 // pred_fallthru
    _
  // Predicated region
  $region10: #{down_forward.11} parent=0 // pred_check
    _
  $region11: #{down_forward.11} parent=0 // pred_check_branch
    %13 = sbr.rel (0) target = $region13
  $region12: #{down_forward.11} parent=0 // pred_region
    _
  $region13: #{down_forward.11} parent=0 // pred_fallthru
    _
  %v14 = vld [vmem:[%s0] sm:$0xf]
  %v15 = vunpack.c.l.bf16 %v14
  %v16 = vld [vmem:[%s1] sm:$0x1]
  %v18 = vlaneseq
  %v19 = vshrl.u32 %v18, 7
  %v20 = vsub.s32 0, %v19
  %v21 = vrot.slane %v16, %v20
  %v23 = vmul.f32 %v15, %v21
  %v24 = vld [vmem:[%s2] sm:$0x1]
  %v26 = vlaneseq
  %v27 = vshrl.u32 %v26, 7
  %v28 = vsub.s32 0, %v27
  %v29 = vrot.slane %v24, %v28
  %v31 = vadd.f32 %v23, %v29
  %vm32 = vcmp.gt.f32.partialorder %v31, 0.0
  %v33 = vmul.f32 %v31, 0.01
  %v34 = vsel %vm32, %v31, %v33
  %v35 = vpack.c.bf16 %v34, %v34
  %36 = vst [vmem:[%s3] sm:$0xf] %v35
  // Predicated region
  $region14: #{down_forward.11} parent=0 // pred_check
    _
  $region15: #{down_forward.11} parent=0 // pred_check_branch
    %38 = sbr.rel (0) target = $region17
  $region16: #{down_forward.11} parent=0 // pred_region
    _
  $region17: #{down_forward.11} parent=0 // pred_fallthru
    _
  // Predicated region
  $region18: #{down_forward.11} parent=0 // pred_check
    _
  $region19: #{down_forward.11} parent=0 // pred_check_branch
    %40 = sbr.rel (0) target = $region21
  $region20: #{down_forward.11} parent=0 // pred_region
    _
  $region21: #{down_forward.11} parent=0 // pred_fallthru
    _

// kernel: down_forward.13
$region0: #{down_forward.13}
  #allocation0 [shape = 'u32[]', space=smem, size = 0x4, offset = 0x4, fixed_abs, tag = 'smem constant byte address 0x4 - core index']
  #allocation1 [shape = 'u32[144,128]{1,0:T(1,128)}', space=vmem, size = 0x12000, scoped, tag = 'internal scratch']
  %s0 = inlined_call_operand.vmem [shape: bf16[8,128], index: 0, kind: input, shape index: {}]
  %s1 = inlined_call_operand.vmem [shape: f32[1,128], index: 1, kind: input, shape index: {}]
  %s2 = inlined_call_operand.vmem [shape: f32[1,128], index: 2, kind: input, shape index: {}]
  %s3 = inlined_call_operand.vmem [shape: f32[8,128], index: 3, kind: output, shape index: {}]
  %s4 = sld [smem:[#allocation0]]
  $region22: #{down_forward.13} parent=0
    _
  %s6 = ssub.s32 1, %s4
  %s7 = scalar_select 0, %s6, %s4
  // Predicated region
  $region2: #{down_forward.13} parent=0 // pred_check
    _
  $region3: #{down_forward.13} parent=0 // pred_check_branch
    %9 = sbr.rel (0) target = $region5
  $region4: #{down_forward.13} parent=0 // pred_region
    _
  $region5: #{down_forward.13} parent=0 // pred_fallthru
    _
  // Predicated region
  $region6: #{down_forward.13} parent=0 // pred_check
    _
  $region7: #{down_forward.13} parent=0 // pred_check_branch
    %11 = sbr.rel (0) target = $region9
  $region8: #{down_forward.13} parent=0 // pred_region
    _
  $region9: #{down_forward.13} parent=0 // pred_fallthru
    _
  // Predicated region
  $region10: #{down_forward.13} parent=0 // pred_check
    _
  $region11: #{down_forward.13} parent=0 // pred_check_branch
    %13 = sbr.rel (0) target = $region13
  $region12: #{down_forward.13} parent=0 // pred_region
    _
  $region13: #{down_forward.13} parent=0 // pred_fallthru
    _
  %v14 = vld [vmem:[%s0] sm:$0xf]
  %v15 = vunpack.c.l.bf16 %v14
  %v16 = vld [vmem:[%s1] sm:$0x1]
  %v18 = vlaneseq
  %v19 = vshrl.u32 %v18, 7
  %v20 = vsub.s32 0, %v19
  %v21 = vrot.slane %v16, %v20
  %v23 = vmul.f32 %v15, %v21
  %v24 = vld [vmem:[%s2] sm:$0x1]
  %v26 = vlaneseq
  %v27 = vshrl.u32 %v26, 7
  %v28 = vsub.s32 0, %v27
  %v29 = vrot.slane %v24, %v28
  %v31 = vadd.f32 %v23, %v29
  %vm32 = vcmp.gt.f32.partialorder %v31, 0.0
  %v33 = vmul.f32 %v31, 0.01
  %v34 = vsel %vm32, %v31, %v33
  %35 = vst [vmem:[%s3] sm:$0xff] %v34
  // Predicated region
  $region14: #{down_forward.13} parent=0 // pred_check
    _
  $region15: #{down_forward.13} parent=0 // pred_check_branch
    %37 = sbr.rel (0) target = $region17
  $region16: #{down_forward.13} parent=0 // pred_region
    _
  $region17: #{down_forward.13} parent=0 // pred_fallthru
    _
  // Predicated region
  $region18: #{down_forward.13} parent=0 // pred_check
    _
  $region19: #{down_forward.13} parent=0 // pred_check_branch
    %39 = sbr.rel (0) target = $region21
  $region20: #{down_forward.13} parent=0 // pred_region
    _
  $region21: #{down_forward.13} parent=0 // pred_fallthru
    _

// kernel: down_forward.10
$region0: #{down_forward.10}
  #allocation0 [shape = 'u32[]', space=smem, size = 0x4, offset = 0x4, fixed_abs, tag = 'smem constant byte address 0x4 - core index']
  #allocation1 [shape = 'u32[144,128]{1,0:T(1,128)}', space=vmem, size = 0x12000, scoped, tag = 'internal scratch']
  %s0 = inlined_call_operand.vmem [shape: bf16[2,10,10,4], index: 0, kind: input, shape index: {}]
  %s1 = inlined_call_operand.vmem [shape: bf16[9,4,8], index: 1, kind: input, shape index: {}]
  %s2 = inlined_call_operand.vmem [shape: f32[1,8], index: 2, kind: input, shape index: {}]
  %s3 = inlined_call_operand.vmem [shape: bf16[2,8,8,8], index: 3, kind: output, shape index: {}]
  %s4 = sld [smem:[#allocation0]]
  $region45: #{down_forward.10} parent=0
    _
  %s6 = ssub.s32 1, %s4
  %s7 = scalar_select 0, %s6, %s4
  loop: start=0, step=1, limit=4
  $region2: #{down_forward.10} parent=0 // loop_pre_header
    _
  $region3: #{down_forward.10} parent=0 // loop_header
    %s9 = sphi 0, %s13
    %p10 = scmp.ge.s32.totalorder %s9, 4
    %s19 = sphi 0, %s21
    %s22 = sphi 0, %s19
    %s23 = sphi 0, %s22
    %s39 = sphi 0, %s23
    %s43 = sphi 0, %s43
    %s45 = sphi 0, %s43
    %s46 = sphi 0, %s45
    %s60 = sphi 0, %s46
    %s64 = sphi 0, %s64
    %s66 = sphi 0, %s64
    %s67 = sphi 0, %s66
    %s81 = sphi 0, %s67
    %s87 = sphi 0, %s89
    %s90 = sphi 0, %s87
    %s91 = sphi 0, %s90
    %s107 = sphi 0, %s91
  $region4: #{down_forward.10} parent=0 // loop_header_branch
    %12 = sbr.rel (%p10) target = $region8
  $region5: #{down_forward.10} parent=0 // loop_body
    %s14 = ssub.s32 %s9, 1
    %s15 = ssub.s32 %s9, 2
    %s16 = sadd.s32 %s9, 1
    %s17 = ssub.s32 %s9, %s16
    %p18 = scmp.eq.s32.totalorder %s17, 0
    %s20 = sadd.s32 %s19, 1
    %s21 = scalar_select %p18, %s19, %s20
    %p24 = pneg %p18
    %p25 = scmp.eq.s32.totalorder %s9, 1
    %p26 = por %p24, %p25
    %p27 = scmp.ne.s32.totalorder %s19, %s22
    %p28 = scmp.eq.s32.totalorder %s9, 0
    %p29 = por %p27, %p28
    %p30 = scmp.ne.s32.totalorder %s19, %s22
    %p31 = scmp.eq.s32.totalorder %s14, 1
    %p32 = por %p30, %p31
    %p33 = scmp.ne.s32.totalorder %s22, %s23
    %p34 = scmp.eq.s32.totalorder %s14, 0
    %p35 = por %p33, %p34
    %p36 = scmp.ne.s32.totalorder %s22, %s23
    %p37 = scmp.eq.s32.totalorder %s15, 1
    %p38 = por %p36, %p37
    %p40 = scmp.ne.s32.totalorder %s23, %s39
    %p41 = scmp.eq.s32.totalorder %s15, 0
    %p42 = por %p40, %p41
    %s44 = sadd.s32 %s43, 1
    %p47 = scmp.eq.s32.totalorder %s9, 1
    %p48 = scmp.ne.s32.totalorder %s43, %s45
    %p49 = scmp.eq.s32.totalorder %s9, 0
    %p50 = por %p48, %p49
    %p51 = scmp.ne.s32.totalorder %s43, %s45
    %p52 = scmp.eq.s32.totalorder %s14, 1
    %p53 = por %p51, %p52
    %p54 = scmp.ne.s32.totalorder %s45, %s46
    %p55 = scmp.eq.s32.totalorder %s14, 0
    %p56 = por %p54, %p55
    %p57 = scmp.ne.s32.totalorder %s45, %s46
    %p58 = scmp.eq.s32.totalorder %s15, 1
    %p59 = por %p57, %p58
    %p61 = scmp.ne.s32.totalorder %s46, %s60
    %p62 = scmp.eq.s32.totalorder %s15, 0
    %p63 = por %p61, %p62
    %s65 = sadd.s32 %s64, 1
    %p68 = scmp.eq.s32.totalorder %s9, 1
    %p69 = scmp.ne.s32.totalorder %s64, %s66
    %p70 = scmp.eq.s32.totalorder %s9, 0
    %p71 = por %p69, %p70
    %p72 = scmp.ne.s32.totalorder %s64, %s66
    %p73 = scmp.eq.s32.totalorder %s14, 1
    %p74 = por %p72, %p73
    %p75 = scmp.ne.s32.totalorder %s66, %s67
    %p76 = scmp.eq.s32.totalorder %s14, 0
    %p77 = por %p75, %p76
    %p78 = scmp.ne.s32.totalorder %s66, %s67
    %p79 = scmp.eq.s32.totalorder %s15, 1
    %p80 = por %p78, %p79
    %p82 = scmp.ne.s32.totalorder %s67, %s81
    %p83 = scmp.eq.s32.totalorder %s15, 0
    %p84 = por %p82, %p83
    %s85 = ssub.s32 %s9, %s16
    %p86 = scmp.eq.s32.totalorder %s85, 0
    %s88 = sadd.s32 %s87, 1
    %s89 = scalar_select %p86, %s87, %s88
    %p92 = pneg %p86
    %p93 = scmp.eq.s32.totalorder %s9, 1
    %p94 = por %p92, %p93
    %p95 = scmp.ne.s32.totalorder %s87, %s90
    %p96 = scmp.eq.s32.totalorder %s9, 0
    %p97 = por %p95, %p96
    %p98 = scmp.ne.s32.totalorder %s87, %s90
    %p99 = scmp.eq.s32.totalorder %s14, 1
    %p100 = por %p98, %p99
    %p101 = scmp.ne.s32.totalorder %s90, %s91
    %p102 = scmp.eq.s32.totalorder %s14, 0
    %p103 = por %p101, %p102
    %p104 = scmp.ne.s32.totalorder %s90, %s91
    %p105 = scmp.eq.s32.totalorder %s15, 1
    %p106 = por %p104, %p105
    %p108 = scmp.ne.s32.totalorder %s91, %s107
    %p109 = scmp.eq.s32.totalorder %s15, 0
    %p110 = por %p108, %p109
    %p111 = scmp.le.s32.totalorder 1, %s9
    %p112 = scmp.lt.s32.totalorder %s9, 3
    %p113 = pnand %p111, %p112
    %p114 = pneg %p113
    // Predicated region
    $region9: #{down_forward.10} parent=5 // pred_check
      _
    $region10: #{down_forward.10} parent=5 // pred_check_branch
      %116 = sbr.rel (%p113) target = $region12
    $region11: #{down_forward.10} parent=5 // pred_region
      %s117 = ssub.s32 %s9, 1
      // Predicated region
      $region13: #{down_forward.10} parent=11 // pred_check
        %p118 = pneg %p56
      $region14: #{down_forward.10} parent=11 // pred_check_branch
        %120 = sbr.rel (%p118) target = $region16
      $region15: #{down_forward.10} parent=11 // pred_region
        _
      $region16: #{down_forward.10} parent=11 // pred_fallthru
        _
      // Predicated region
      $region17: #{down_forward.10} parent=11 // pred_check
        %p121 = pneg %p77
      $region18: #{down_forward.10} parent=11 // pred_check_branch
        %123 = sbr.rel (%p121) target = $region20
      $region19: #{down_forward.10} parent=11 // pred_region
        _
      $region20: #{down_forward.10} parent=11 // pred_fallthru
        _
    $region12: #{down_forward.10} parent=5 // pred_fallthru
      _
    %p124 = scmp.lt.s32.totalorder %s9, 2
    // Predicated region
    $region21: #{down_forward.10} parent=5 // pred_check
      %p125 = pneg %p124
    $region22: #{down_forward.10} parent=5 // pred_check_branch
      %127 = sbr.rel (%p125) target = $region24
    $region23: #{down_forward.10} parent=5 // pred_region
      // Predicated region
      $region25: #{down_forward.10} parent=23 // pred_check
        %p128 = pneg %p29
      $region26: #{down_forward.10} parent=23 // pred_check_branch
        %130 = sbr.rel (%p128) target = $region28
      $region27: #{down_forward.10} parent=23 // pred_region
        %p131 = scmp.lt.s32.totalorder %s9, 1
        %s132 = scalar_select %p131, %s9, 1
        %s133 = smul.addr %s132, 20
        %s134 = smul.addr %s133, 4
        %s135 = scalar_lea.vmem %s0, %s134
      $region28: #{down_forward.10} parent=23 // pred_fallthru
        _
    $region24: #{down_forward.10} parent=5 // pred_fallthru
      _
    %p136 = scmp.le.s32.totalorder 1, %s9
    %p137 = scmp.lt.s32.totalorder %s9, 3
    %p138 = pnand %p136, %p137
    %p139 = pneg %p138
    // Predicated region
    $region29: #{down_forward.10} parent=5 // pred_check
      _
    $region30: #{down_forward.10} parent=5 // pred_check_branch
      %141 = sbr.rel (%p138) target = $region32
    $region31: #{down_forward.10} parent=5 // pred_region
      %s142 = ssub.s32 %s9, 1
      %p143 = scmp.lt.s32.totalorder %s14, 1
      %s144 = scalar_select %p143, %s14, 1
      %s145 = smul.addr %s144, 20
      %s146 = smul.addr %s145, 4
      %s147 = scalar_lea.vmem %s0, %s146
      %p148 = pneg %p35
      %p149 = pneg %p32
      %p150 = pneg %p56
      %p151 = pneg %p53
      %p152 = pneg %p77
      %p153 = pneg %p74
      %p154 = pneg %p103
      %p155 = pneg %p100
      %p156 = scmp.lt.s32.totalorder %s14, 1
      %s157 = scalar_select %p156, %s14, 1
      %s158 = smul.addr %s157, 8
      %s159 = smul.addr %s158, 4
      %s160 = scalar_lea.vmem %s3, %s159
      %p161 = scmp.lt.s32.totalorder %s14, 1
      %s162 = scalar_select %p161, %s14, 1
      %s163 = smul.addr %s162, 20
      %s164 = smul.addr %s163, 4
      %s165 = scalar_lea.vmem %s0, %s164
      %p166 = scmp.lt.s32.totalorder %s14, 1
      %s167 = scalar_select %p166, %s14, 1
      %s168 = smul.addr %s167, 8
      %s169 = smul.addr %s168, 4
      %s170 = scalar_lea.vmem %s3, %s169
      %v172 = vld [vmem:[%s165] sm:$0xf]
      %v173 = vld [vmem:[%s165 + $0x8] sm:$0xf]
      %v174 = vld [vmem:[%s165 + $0x10] sm:$0xf]
      %v175 = vld [vmem:[%s165 + $0x18] sm:$0xf]
      %v176 = vld [vmem:[%s165 + $0x20] sm:$0xf]
      %v177 = vld [vmem:[%s165 + $0x28] sm:$0xf]
      %v178 = vld [vmem:[%s165 + $0x30] sm:$0xf]
      %v179 = vld [vmem:[%s165 + $0x38] sm:$0xf]
      %v180 = vld [vmem:[%s1] sm:$0x3]
      %v181 = vld [vmem:[%s165 + $0x4] sm:$0x1]
      %v182 = vld [vmem:[%s165 + $0xc] sm:$0x1]
      %v183 = vld [vmem:[%s165 + $0x14] sm:$0x1]
      %v184 = vld [vmem:[%s165 + $0x1c] sm:$0x1]
      %v185 = vld [vmem:[%s165 + $0x24] sm:$0x1]
      %v186 = vld [vmem:[%s165 + $0x2c] sm:$0x1]
      %v187 = vld [vmem:[%s165 + $0x34] sm:$0x1]
      %v188 = vld [vmem:[%s165 + $0x3c] sm:$0x1]
      %vm189 = vsmask.f32 3328
      %vm190 = vsmask.f32 7440
      %vm191 = vmor %vm189, %vm190
      %v193 = vshrl.u32 %v172, 16
      %v195 = vrot.slane %v193, 4
      %v196 = vshll.u32 %v172, 16
      %v198 = vrot.slane %v196, 5
      %v199 = vor.u32 %v195, %v198
      %v200 = vrot.slane %v199, 4
      %v202 = vshll.u32 %v181, 16
      %v204 = vrot.slane %v202, 5
      %v205 = vsel %vm191, %v200, %v204
      %v207 = vshrl.u32 %v173, 16
      %v209 = vrot.slane %v207, 4
      %v210 = vshll.u32 %v173, 16
      %v212 = vrot.slane %v210, 5
      %v213 = vor.u32 %v209, %v212
      %v214 = vrot.slane %v213, 4
      %v216 = vshll.u32 %v182, 16
      %v218 = vrot.slane %v216, 5
      %v219 = vsel %vm191, %v214, %v218
      %v221 = vshrl.u32 %v174, 16
      %v223 = vrot.slane %v221, 4
      %v224 = vshll.u32 %v174, 16
      %v226 = vrot.slane %v224, 5
      %v227 = vor.u32 %v223, %v226
      %v228 = vrot.slane %v227, 4
      %v230 = vshll.u32 %v183, 16
      %v232 = vrot.slane %v230, 5
      %v233 = vsel %vm191, %v228, %v232
      %v235 = vshrl.u32 %v175, 16
      %v237 = vrot.slane %v235, 4
      %v238 = vshll.u32 %v175, 16
      %v240 = vrot.slane %v238, 5
      %v241 = vor.u32 %v237, %v240
      %v242 = vrot.slane %v241, 4
      %v244 = vshll.u32 %v184, 16
      %v246 = vrot.slane %v244, 5
      %v247 = vsel %vm191, %v242, %v246
      %v249 = vshrl.u32 %v176, 16
      %v251 = vrot.slane %v249, 4
      %v252 = vshll.u32 %v176, 16
      %v254 = vrot.slane %v252, 5
      %v255 = vor.u32 %v251, %v254
      %v256 = vrot.slane %v255, 4
      %v258 = vshll.u32 %v185, 16
      %v260 = vrot.slane %v258, 5
      %v261 = vsel %vm191, %v256, %v260
      %v263 = vshrl.u32 %v177, 16
      %v265 = vrot.slane %v263, 4
      %v266 = vshll.u32 %v177, 16
      %v268 = vrot.slane %v266, 5
      %v269 = vor.u32 %v265, %v268
      %v270 = vrot.slane %v269, 4
      %v272 = vshll.u32 %v186, 16
      %v274 = vrot.slane %v272, 5
      %v275 = vsel %vm191, %v270, %v274
      %v277 = vshrl.u32 %v178, 16
      %v279 = vrot.slane %v277, 4
      %v280 = vshll.u32 %v178, 16
      %v282 = vrot.slane %v280, 5
      %v283 = vor.u32 %v279, %v282
      %v284 = vrot.slane %v283, 4
      %v286 = vshll.u32 %v187, 16
      %v288 = vrot.slane %v286, 5
      %v289 = vsel %vm191, %v284, %v288
      %v291 = vshrl.u32 %v179, 16
      %v293 = vrot.slane %v291, 4
      %v294 = vshll.u32 %v179, 16
      %v296 = vrot.slane %v294, 5
      %v297 = vor.u32 %v293, %v296
      %v298 = vrot.slane %v297, 4
      %v300 = vshll.u32 %v188, 16
      %v302 = vrot.slane %v300, 5
      %v303 = vsel %vm191, %v298, %v302
      %s304 = scalar_lea.vmem %s1, 2
      %v305 = vld [vmem:[%s304] sm:$0x3]
      %v306 = vunpack.c.l.b16 %v205
      %v307 = vunpack.c.l.b16 %v219
      %v308 = vunpack.c.l.b16 %v233
      %v309 = vunpack.c.l.b16 %v247
      %v310 = vunpack.c.l.b16 %v261
      %v311 = vunpack.c.l.b16 %v275
      %v312 = vunpack.c.l.b16 %v289
      %v313 = vunpack.c.l.b16 %v303
      %v314 = vpack.c.b16 %v307, %v306
      %v315 = vpack.c.b16 %v309, %v308
      %v316 = vpack.c.b16 %v311, %v310
      %v317 = vpack.c.b16 %v313, %v312
      %vm318 = vcmask 31744
      %v320 = vsel %vm318, %v314, 0
      %v323 = vsel %vm318, %v315, 0
      %v326 = vsel %vm318, %v316, 0
      %v329 = vsel %vm318, %v317, 0
      %vm331 = vcmask 1041408
      %v333 = vsel %vm331, %v305, 0
      %335 = vmatprep.subr.bf16.mxu0 0
      %336 = vmatpush1.bf16.msra.mxu0 %v333
      %337 = vmatprep.subr.bf16.mxu0 0
      %338 = vmatpush1.bf16.msra.mxu0 0
      %339 = vmatprep.subr.bf16.mxu0 0
      %340 = vmatpush1.bf16.msra.mxu0 0
      %341 = vmatprep.subr.bf16.mxu0 0
      %342 = vmatpush1.bf16.msra.mxu0 0
      %343 = vmatprep.subr.bf16.mxu0 0
      %344 = vmatpush1.bf16.msra.mxu0 0
      %345 = vmatprep.subr.bf16.mxu0 0
      %346 = vmatpush1.bf16.msra.mxu0 0
      %347 = vmatprep.subr.bf16.mxu0 0
      %348 = vmatpush1.bf16.msra.mxu0 0
      %349 = vmatprep.subr.bf16.mxu0 0
      %350 = vmatpush1.bf16.msra.mxu0 0
      %351 = vmatprep.subr.bf16.mxu0 0
      %352 = vmatpush1.bf16.msra.mxu0 0
      %353 = vmatprep.subr.bf16.mxu0 0
      %354 = vmatpush1.bf16.msra.mxu0 0
      %355 = vmatprep.subr.bf16.mxu0 0
      %356 = vmatpush1.bf16.msra.mxu0 0
      %357 = vmatprep.subr.bf16.mxu0 0
      %358 = vmatpush1.bf16.msra.mxu0 0
      %359 = vmatprep.subr.bf16.mxu0 0
      %360 = vmatpush1.bf16.msra.mxu0 0
      %361 = vmatprep.subr.bf16.mxu0 0
      %362 = vmatpush1.bf16.msra.mxu0 0
      %363 = vmatprep.subr.bf16.mxu0 0
      %364 = vmatpush1.bf16.msra.mxu0 0
      %365 = vmatprep.subr.bf16.mxu0 0
      %366 = vmatpush1.bf16.msra.mxu0 0
      %367 = vmatprep.mubr.bf16.mxu0 0
      %368 = vmatmul.mubr.bf16.gmra.mrb[0].mxu0 %v320
      %v369 = vpop.f32.mrb[0].mxu0
      %v370 = vadd.f32 0.0, %v369
      %v371 = vpop.f32.mrb[0].mxu0
      %v372 = vpop.f32.mrb[0].mxu0
      %v373 = vadd.f32 0.0, %v372
      %v374 = vpop.f32.mrb[0].mxu0
      %375 = vmatprep.mubr.bf16.mxu0 0
      %376 = vmatmul.mubr.bf16.gmra.mrb[0].mxu0 %v323
      %v377 = vpop.f32.mrb[0].mxu0
      %v378 = vadd.f32 0.0, %v377
      %v379 = vpop.f32.mrb[0].mxu0
      %v380 = vpop.f32.mrb[0].mxu0
      %v381 = vadd.f32 0.0, %v380
      %v382 = vpop.f32.mrb[0].mxu0
      %383 = vmatprep.mubr.bf16.mxu0 0
      %384 = vmatmul.mubr.bf16.gmra.mrb[0].mxu0 %v326
      %v385 = vpop.f32.mrb[0].mxu0
      %v386 = vadd.f32 0.0, %v385
      %v387 = vpop.f32.mrb[0].mxu0
      %v388 = vpop.f32.mrb[0].mxu0
      %v389 = vadd.f32 0.0, %v388
      %v390 = vpop.f32.mrb[0].mxu0
      %391 = vmatprep.mubr.bf16.mxu0 0
      %392 = vmatmul.mubr.bf16.gmra.mrb[0].mxu0 %v329
      %v393 = vpop.f32.mrb[0].mxu0
      %v394 = vadd.f32 0.0, %v393
      %v395 = vpop.f32.mrb[0].mxu0
      %v396 = vpop.f32.mrb[0].mxu0
      %v397 = vadd.f32 0.0, %v396
      %v398 = vpop.f32.mrb[0].mxu0
      %399 = vdwg.mxu0
      %v408 = vunpack.c.l.b16 %v172
      %v409 = vunpack.c.l.b16 %v173
      %v410 = vunpack.c.l.b16 %v174
      %v411 = vunpack.c.l.b16 %v175
      %v412 = vunpack.c.l.b16 %v176
      %v413 = vunpack.c.l.b16 %v177
      %v414 = vunpack.c.l.b16 %v178
      %v415 = vunpack.c.l.b16 %v179
      %v416 = vpack.c.b16 %v409, %v408
      %v417 = vpack.c.b16 %v411, %v410
      %v418 = vpack.c.b16 %v413, %v412
      %v419 = vpack.c.b16 %v415, %v414
      %v421 = vsel %vm318, %v416, 0
      %v424 = vsel %vm318, %v417, 0
      %v427 = vsel %vm318, %v418, 0
      %v430 = vsel %vm318, %v419, 0
      %v433 = vsel %vm331, %v180, 0
      %435 = vmatprep.subr.bf16.mxu0 0
      %436 = vmatpush1.bf16.msra.mxu0 %v433
      %437 = vmatprep.subr.bf16.mxu0 0
      %438 = vmatpush1.bf16.msra.mxu0 0
      %439 = vmatprep.subr.bf16.mxu0 0
      %440 = vmatpush1.bf16.msra.mxu0 0
      %441 = vmatprep.subr.bf16.mxu0 0
      %442 = vmatpush1.bf16.msra.mxu0 0
      %443 = vmatprep.subr.bf16.mxu0 0
      %444 = vmatpush1.bf16.msra.mxu0 0
      %445 = vmatprep.subr.bf16.mxu0 0
      %446 = vmatpush1.bf16.msra.mxu0 0
      %447 = vmatprep.subr.bf16.mxu0 0
      %448 = vmatpush1.bf16.msra.mxu0 0
      %449 = vmatprep.subr.bf16.mxu0 0
      %450 = vmatpush1.bf16.msra.mxu0 0
      %451 = vmatprep.subr.bf16.mxu0 0
      %452 = vmatpush1.bf16.msra.mxu0 0
      %453 = vmatprep.subr.bf16.mxu0 0
      %454 = vmatpush1.bf16.msra.mxu0 0
      %455 = vmatprep.subr.bf16.mxu0 0
      %456 = vmatpush1.bf16.msra.mxu0 0
      %457 = vmatprep.subr.bf16.mxu0 0
      %458 = vmatpush1.bf16.msra.mxu0 0
      %459 = vmatprep.subr.bf16.mxu0 0
      %460 = vmatpush1.bf16.msra.mxu0 0
      %461 = vmatprep.subr.bf16.mxu0 0
      %462 = vmatpush1.bf16.msra.mxu0 0
      %463 = vmatprep.subr.bf16.mxu0 0
      %464 = vmatpush1.bf16.msra.mxu0 0
      %465 = vmatprep.subr.bf16.mxu0 0
      %466 = vmatpush1.bf16.msra.mxu0 0
      %467 = vmatprep.mubr.bf16.mxu0 0
      %468 = vmatmul.mubr.bf16.gmra.mrb[0].mxu0 %v421
      %v469 = vpop.f32.mrb[0].mxu0
      %v470 = vadd.f32 %v370, %v469
      %v471 = vpop.f32.mrb[0].mxu0
      %v472 = vpop.f32.mrb[0].mxu0
      %v473 = vadd.f32 %v373, %v472
      %v474 = vpop.f32.mrb[0].mxu0
      %475 = vmatprep.mubr.bf16.mxu0 0
      %476 = vmatmul.mubr.bf16.gmra.mrb[0].mxu0 %v424
      %v477 = vpop.f32.mrb[0].mxu0
      %v478 = vadd.f32 %v378, %v477
      %v479 = vpop.f32.mrb[0].mxu0
      %v480 = vpop.f32.mrb[0].mxu0
      %v481 = vadd.f32 %v381, %v480
      %v482 = vpop.f32.mrb[0].mxu0
      %483 = vmatprep.mubr.bf16.mxu0 0
      %484 = vmatmul.mubr.bf16.gmra.mrb[0].mxu0 %v427
      %v485 = vpop.f32.mrb[0].mxu0
      %v486 = vadd.f32 %v386, %v485
      %v487 = vpop.f32.mrb[0].mxu0
      %v488 = vpop.f32.mrb[0].mxu0
      %v489 = vadd.f32 %v389, %v488
      %v490 = vpop.f32.mrb[0].mxu0
      %491 = vmatprep.mubr.bf16.mxu0 0
      %492 = vmatmul.mubr.bf16.gmra.mrb[0].mxu0 %v430
      %v493 = vpop.f32.mrb[0].mxu0
      %v494 = vadd.f32 %v394, %v493
      %v495 = vpop.f32.mrb[0].mxu0
      %v496 = vpop.f32.mrb[0].mxu0
      %v497 = vadd.f32 %v397, %v496
      %v498 = vpop.f32.mrb[0].mxu0
      %499 = vdwg.mxu0
      %v500 = vld [vmem:[%s165] sm:$0xe]
      %v501 = vld [vmem:[%s165 + $0x8] sm:$0xe]
      %v502 = vld [vmem:[%s165 + $0x10] sm:$0xe]
      %v503 = vld [vmem:[%s165 + $0x18] sm:$0xe]
      %v504 = vld [vmem:[%s165 + $0x20] sm:$0xe]
      %v505 = vld [vmem:[%s165 + $0x28] sm:$0xe]
      %v506 = vld [vmem:[%s165 + $0x30] sm:$0xe]
      %v507 = vld [vmem:[%s165 + $0x38] sm:$0xe]
      %vm524 = vcmask 1042432
      %vm525 = vcmask 1046532
      %vm526 = vmor %vm524, %vm525
      %v527 = vrot.slane %v500, 5
      %v528 = vrot.slane %v527, 4
      %v529 = vrot.slane %v181, 5
      %v530 = vsel %vm526, %v528, %v529
      %v531 = vrot.slane %v501, 5
      %v532 = vrot.slane %v531, 4
      %v533 = vrot.slane %v182, 5
      %v534 = vsel %vm526, %v532, %v533
      %v535 = vrot.slane %v502, 5
      %v536 = vrot.slane %v535, 4
      %v537 = vrot.slane %v183, 5
      %v538 = vsel %vm526, %v536, %v537
      %v539 = vrot.slane %v503, 5
      %v540 = vrot.slane %v539, 4
      %v541 = vrot.slane %v184, 5
      %v542 = vsel %vm526, %v540, %v541
      %v543 = vrot.slane %v504, 5
      %v544 = vrot.slane %v543, 4
      %v545 = vrot.slane %v185, 5
      %v546 = vsel %vm526, %v544, %v545
      %v547 = vrot.slane %v505, 5
      %v548 = vrot.slane %v547, 4
      %v549 = vrot.slane %v186, 5
      %v550 = vsel %vm526, %v548, %v549
      %v551 = vrot.slane %v506, 5
      %v552 = vrot.slane %v551, 4
      %v553 = vrot.slane %v187, 5
      %v554 = vsel %vm526, %v552, %v553
      %v555 = vrot.slane %v507, 5
      %v556 = vrot.slane %v555, 4
      %v557 = vrot.slane %v188, 5
      %v558 = vsel %vm526, %v556, %v557
      %s559 = scalar_lea.vmem %s1, 4
      %v560 = vld [vmem:[%s559] sm:$0x3]
      %v561 = vunpack.c.l.b16 %v530
      %v562 = vunpack.c.l.b16 %v534
      %v563 = vunpack.c.l.b16 %v538
      %v564 = vunpack.c.l.b16 %v542
      %v565 = vunpack.c.l.b16 %v546
      %v566 = vunpack.c.l.b16 %v550
      %v567 = vunpack.c.l.b16 %v554
      %v568 = vunpack.c.l.b16 %v558
      %v569 = vpack.c.b16 %v562, %v561
      %v570 = vpack.c.b16 %v564, %v563
      %v571 = vpack.c.b16 %v566, %v565
      %v572 = vpack.c.b16 %v568, %v567
      %v574 = vsel %vm318, %v569, 0
      %v577 = vsel %vm318, %v570, 0
      %v580 = vsel %vm318, %v571, 0
      %v583 = vsel %vm318, %v572, 0
      %v586 = vsel %vm331, %v560, 0
      %588 = vmatprep.subr.bf16.mxu0 0
      %589 = vmatpush1.bf16.msra.mxu0 %v586
      %590 = vmatprep.subr.bf16.mxu0 0
      %591 = vmatpush1.bf16.msra.mxu0 0
      %592 = vmatprep.subr.bf16.mxu0 0
      %593 = vmatpush1.bf16.msra.mxu0 0
      %594 = vmatprep.subr.bf16.mxu0 0
      %595 = vmatpush1.bf16.msra.mxu0 0
      %596 = vmatprep.subr.bf16.mxu0 0
      %597 = vmatpush1.bf16.msra.mxu0 0
      %598 = vmatprep.subr.bf16.mxu0 0
      %599 = vmatpush1.bf16.msra.mxu0 0
      %600 = vmatprep.subr.bf16.mxu0 0
      %601 = vmatpush1.bf16.msra.mxu0 0
      %602 = vmatprep.subr.bf16.mxu0 0
      %603 = vmatpush1.bf16.msra.mxu0 0
      %604 = vmatprep.subr.bf16.mxu0 0
      %605 = vmatpush1.bf16.msra.mxu0 0
      %606 = vmatprep.subr.bf16.mxu0 0
      %607 = vmatpush1.bf16.msra.mxu0 0
      %608 = vmatprep.subr.bf16.mxu0 0
      %609 = vmatpush1.bf16.msra.mxu0 0
      %610 = vmatprep.subr.bf16.mxu0 0
      %611 = vmatpush1.bf16.msra.mxu0 0
      %612 = vmatprep.subr.bf16.mxu0 0
      %613 = vmatpush1.bf16.msra.mxu0 0
      %614 = vmatprep.subr.bf16.mxu0 0
      %615 = vmatpush1.bf16.msra.mxu0 0
      %616 = vmatprep.subr.bf16.mxu0 0
      %617 = vmatpush1.bf16.msra.mxu0 0
      %618 = vmatprep.subr.bf16.mxu0 0
      %619 = vmatpush1.bf16.msra.mxu0 0
      %620 = vmatprep.mubr.bf16.mxu0 0
      %621 = vmatmul.mubr.bf16.gmra.mrb[0].mxu0 %v574
      %v622 = vpop.f32.mrb[0].mxu0
      %v623 = vadd.f32 0.0, %v622
      %v624 = vpop.f32.mrb[0].mxu0
      %v625 = vpop.f32.mrb[0].mxu0
      %v626 = vadd.f32 0.0, %v625
      %v627 = vpop.f32.mrb[0].mxu0
      %628 = vmatprep.mubr.bf16.mxu0 0
      %629 = vmatmul.mubr.bf16.gmra.mrb[0].mxu0 %v577
      %v630 = vpop.f32.mrb[0].mxu0
      %v631 = vadd.f32 0.0, %v630
      %v632 = vpop.f32.mrb[0].mxu0
      %v633 = vpop.f32.mrb[0].mxu0
      %v634 = vadd.f32 0.0, %v633
      %v635 = vpop.f32.mrb[0].mxu0
      %636 = vmatprep.mubr.bf16.mxu0 0
      %637 = vmatmul.mubr.bf16.gmra.mrb[0].mxu0 %v580
      %v638 = vpop.f32.mrb[0].mxu0
      %v639 = vadd.f32 0.0, %v638
      %v640 = vpop.f32.mrb[0].mxu0
      %v641 = vpop.f32.mrb[0].mxu0
      %v642 = vadd.f32 0.0, %v641
      %v643 = vpop.f32.mrb[0].mxu0
      %644 = vmatprep.mubr.bf16.mxu0 0
      %645 = vmatmul.mubr.bf16.gmra.mrb[0].mxu0 %v583
      %v646 = vpop.f32.mrb[0].mxu0
      %v647 = vadd.f32 0.0, %v646
      %v648 = vpop.f32.mrb[0].mxu0
      %v649 = vpop.f32.mrb[0].mxu0
      %v650 = vadd.f32 0.0, %v649
      %v651 = vpop.f32.mrb[0].mxu0
      %652 = vdwg.mxu0
      %v653 = vadd.f32 %v470, %v623
      %v654 = vadd.f32 %v473, %v626
      %v655 = vadd.f32 %v478, %v631
      %v656 = vadd.f32 %v481, %v634
      %v657 = vadd.f32 %v486, %v639
      %v658 = vadd.f32 %v489, %v642
      %v659 = vadd.f32 %v494, %v647
      %v660 = vadd.f32 %v497, %v650
      %s661 = scalar_lea.vmem %s165, 8
      %v662 = vld [vmem:[%s661] sm:$0xf]
      %v663 = vld [vmem:[%s661 + $0x8] sm:$0xf]
      %v664 = vld [vmem:[%s661 + $0x10] sm:$0xf]
      %v665 = vld [vmem:[%s661 + $0x18] sm:$0xf]
      %v666 = vld [vmem:[%s661 + $0x20] sm:$0xf]
      %v667 = vld [vmem:[%s661 + $0x28] sm:$0xf]
      %v668 = vld [vmem:[%s661 + $0x30] sm:$0xf]
      %v669 = vld [vmem:[%s661 + $0x38] sm:$0xf]
      %s670 = scalar_lea.vmem %s1, 6
      %v671 = vld [vmem:[%s670] sm:$0x3]
      %v680 = vunpack.c.l.b16 %v662
      %v681 = vunpack.c.l.b16 %v663
      %v682 = vunpack.c.l.b16 %v664
      %v683 = vunpack.c.l.b16 %v665
      %v684 = vunpack.c.l.b16 %v666
      %v685 = vunpack.c.l.b16 %v667
      %v686 = vunpack.c.l.b16 %v668
      %v687 = vunpack.c.l.b16 %v669
      %v688 = vpack.c.b16 %v681, %v680
      %v689 = vpack.c.b16 %v683, %v682
      %v690 = vpack.c.b16 %v685, %v684
      %v691 = vpack.c.b16 %v687, %v686
      %v693 = vsel %vm318, %v688, 0
      %v696 = vsel %vm318, %v689, 0
      %v699 = vsel %vm318, %v690, 0
      %v702 = vsel %vm318, %v691, 0
      %v705 = vsel %vm331, %v671, 0
      %707 = vmatprep.subr.bf16.mxu0 0
      %708 = vmatpush1.bf16.msra.mxu0 %v705
      %709 = vmatprep.subr.bf16.mxu0 0
      %710 = vmatpush1.bf16.msra.mxu0 0
      %711 = vmatprep.subr.bf16.mxu0 0
      %712 = vmatpush1.bf16.msra.mxu0 0
      %713 = vmatprep.subr.bf16.mxu0 0
      %714 = vmatpush1.bf16.msra.mxu0 0
      %715 = vmatprep.subr.bf16.mxu0 0
      %716 = vmatpush1.bf16.msra.mxu0 0
      %717 = vmatprep.subr.bf16.mxu0 0
      %718 = vmatpush1.bf16.msra.mxu0 0
      %719 = vmatprep.subr.bf16.mxu0 0
      %720 = vmatpush1.bf16.msra.mxu0 0
      %721 = vmatprep.subr.bf16.mxu0 0
      %722 = vmatpush1.bf16.msra.mxu0 0
      %723 = vmatprep.subr.bf16.mxu0 0
      %724 = vmatpush1.bf16.msra.mxu0 0
      %725 = vmatprep.subr.bf16.mxu0 0
      %726 = vmatpush1.bf16.msra.mxu0 0
      %727 = vmatprep.subr.bf16.mxu0 0
      %728 = vmatpush1.bf16.msra.mxu0 0
      %729 = vmatprep.subr.bf16.mxu0 0
      %730 = vmatpush1.bf16.msra.mxu0 0
      %731 = vmatprep.subr.bf16.mxu0 0
      %732 = vmatpush1.bf16.msra.mxu0 0
      %733 = vmatprep.subr.bf16.mxu0 0
      %734 = vmatpush1.bf16.msra.mxu0 0
      %735 = vmatprep.subr.bf16.mxu0 0
      %736 = vmatpush1.bf16.msra.mxu0 0
      %737 = vmatprep.subr.bf16.mxu0 0
      %738 = vmatpush1.bf16.msra.mxu0 0
      %739 = vmatprep.mubr.bf16.mxu0 0
      %740 = vmatmul.mubr.bf16.gmra.mrb[0].mxu0 %v693
      %v741 = vpop.f32.mrb[0].mxu0
      %v742 = vadd.f32 0.0, %v741
      %v743 = vpop.f32.mrb[0].mxu0
      %v744 = vpop.f32.mrb[0].mxu0
      %v745 = vadd.f32 0.0, %v744
      %v746 = vpop.f32.mrb[0].mxu0
      %747 = vmatprep.mubr.bf16.mxu0 0
      %748 = vmatmul.mubr.bf16.gmra.mrb[0].mxu0 %v696
      %v749 = vpop.f32.mrb[0].mxu0
      %v750 = vadd.f32 0.0, %v749
      %v751 = vpop.f32.mrb[0].mxu0
      %v752 = vpop.f32.mrb[0].mxu0
      %v753 = vadd.f32 0.0, %v752
      %v754 = vpop.f32.mrb[0].mxu0
      %755 = vmatprep.mubr.bf16.mxu0 0
      %756 = vmatmul.mubr.bf16.gmra.mrb[0].mxu0 %v699
      %v757 = vpop.f32.mrb[0].mxu0
      %v758 = vadd.f32 0.0, %v757
      %v759 = vpop.f32.mrb[0].mxu0
      %v760 = vpop.f32.mrb[0].mxu0
      %v761 = vadd.f32 0.0, %v760
      %v762 = vpop.f32.mrb[0].mxu0
      %763 = vmatprep.mubr.bf16.mxu0 0
      %764 = vmatmul.mubr.bf16.gmra.mrb[0].mxu0 %v702
      %v765 = vpop.f32.mrb[0].mxu0
      %v766 = vadd.f32 0.0, %v765
      %v767 = vpop.f32.mrb[0].mxu0
      %v768 = vpop.f32.mrb[0].mxu0
      %v769 = vadd.f32 0.0, %v768
      %v770 = vpop.f32.mrb[0].mxu0
      %771 = vdwg.mxu0
      %v772 = vadd.f32 %v653, %v742
      %v773 = vadd.f32 %v654, %v745
      %v774 = vadd.f32 %v655, %v750
      %v775 = vadd.f32 %v656, %v753
      %v776 = vadd.f32 %v657, %v758
      %v777 = vadd.f32 %v658, %v761
      %v778 = vadd.f32 %v659, %v766
      %v779 = vadd.f32 %v660, %v769
      %v780 = vld [vmem:[%s661] sm:$0xf]
      %v781 = vld [vmem:[%s661 + $0x4] sm:$0x1]
      %v782 = vld [vmem:[%s661 + $0x8] sm:$0xf]
      %v783 = vld [vmem:[%s661 + $0xc] sm:$0x1]
      %v784 = vld [vmem:[%s661 + $0x10] sm:$0xf]
      %v785 = vld [vmem:[%s661 + $0x14] sm:$0x1]
      %v786 = vld [vmem:[%s661 + $0x18] sm:$0xf]
      %v787 = vld [vmem:[%s661 + $0x1c] sm:$0x1]
      %v788 = vld [vmem:[%s661 + $0x20] sm:$0xf]
      %v789 = vld [vmem:[%s661 + $0x24] sm:$0x1]
      %v790 = vld [vmem:[%s661 + $0x28] sm:$0xf]
      %v791 = vld [vmem:[%s661 + $0x2c] sm:$0x1]
      %v792 = vld [vmem:[%s661 + $0x30] sm:$0xf]
      %v793 = vld [vmem:[%s661 + $0x34] sm:$0x1]
      %v794 = vld [vmem:[%s661 + $0x38] sm:$0xf]
      %v795 = vld [vmem:[%s661 + $0x3c] sm:$0x1]
      %v797 = vshrl.u32 %v780, 16
      %v799 = vrot.slane %v797, 4
      %v800 = vshll.u32 %v780, 16
      %v802 = vrot.slane %v800, 5
      %v803 = vor.u32 %v799, %v802
      %v804 = vrot.slane %v803, 4
      %v806 = vshll.u32 %v781, 16
      %v808 = vrot.slane %v806, 5
      %v809 = vsel %vm191, %v804, %v808
      %v811 = vshrl.u32 %v782, 16
      %v813 = vrot.slane %v811, 4
      %v814 = vshll.u32 %v782, 16
      %v816 = vrot.slane %v814, 5
      %v817 = vor.u32 %v813, %v816
      %v818 = vrot.slane %v817, 4
      %v820 = vshll.u32 %v783, 16
      %v822 = vrot.slane %v820, 5
      %v823 = vsel %vm191, %v818, %v822
      %v825 = vshrl.u32 %v784, 16
      %v827 = vrot.slane %v825, 4
      %v828 = vshll.u32 %v784, 16
      %v830 = vrot.slane %v828, 5
      %v831 = vor.u32 %v827, %v830
      %v832 = vrot.slane %v831, 4
      %v834 = vshll.u32 %v785, 16
      %v836 = vrot.slane %v834, 5
      %v837 = vsel %vm191, %v832, %v836
      %v839 = vshrl.u32 %v786, 16
      %v841 = vrot.slane %v839, 4
      %v842 = vshll.u32 %v786, 16
      %v844 = vrot.slane %v842, 5
      %v845 = vor.u32 %v841, %v844
      %v846 = vrot.slane %v845, 4
      %v848 = vshll.u32 %v787, 16
      %v850 = vrot.slane %v848, 5
      %v851 = vsel %vm191, %v846, %v850
      %v853 = vshrl.u32 %v788, 16
      %v855 = vrot.slane %v853, 4
      %v856 = vshll.u32 %v788, 16
      %v858 = vrot.slane %v856, 5
      %v859 = vor.u32 %v855, %v858
      %v860 = vrot.slane %v859, 4
      %v862 = vshll.u32 %v789, 16
      %v864 = vrot.slane %v862, 5
      %v865 = vsel %vm191, %v860, %v864
      %v867 = vshrl.u32 %v790, 16
      %v869 = vrot.slane %v867, 4
      %v870 = vshll.u32 %v790, 16
      %v872 = vrot.slane %v870, 5
      %v873 = vor.u32 %v869, %v872
      %v874 = vrot.slane %v873, 4
      %v876 = vshll.u32 %v791, 16
      %v878 = vrot.slane %v876, 5
      %v879 = vsel %vm191, %v874, %v878
      %v881 = vshrl.u32 %v792, 16
      %v883 = vrot.slane %v881, 4
      %v884 = vshll.u32 %v792, 16
      %v886 = vrot.slane %v884, 5
      %v887 = vor.u32 %v883, %v886
      %v888 = vrot.slane %v887, 4
      %v890 = vshll.u32 %v793, 16
      %v892 = vrot.slane %v890, 5
      %v893 = vsel %vm191, %v888, %v892
      %v895 = vshrl.u32 %v794, 16
      %v897 = vrot.slane %v895, 4
      %v898 = vshll.u32 %v794, 16
      %v900 = vrot.slane %v898, 5
      %v901 = vor.u32 %v897, %v900
      %v902 = vrot.slane %v901, 4
      %v904 = vshll.u32 %v795, 16
      %v906 = vrot.slane %v904, 5
      %v907 = vsel %vm191, %v902, %v906
      %s908 = scalar_lea.vmem %s1, 8
      %v909 = vld [vmem:[%s908] sm:$0x3]
      %v910 = vunpack.c.l.b16 %v809
      %v911 = vunpack.c.l.b16 %v823
      %v912 = vunpack.c.l.b16 %v837
      %v913 = vunpack.c.l.b16 %v851
      %v914 = vunpack.c.l.b16 %v865
      %v915 = vunpack.c.l.b16 %v879
      %v916 = vunpack.c.l.b16 %v893
      %v917 = vunpack.c.l.b16 %v907
      %v918 = vpack.c.b16 %v911, %v910
      %v919 = vpack.c.b16 %v913, %v912
      %v920 = vpack.c.b16 %v915, %v914
      %v921 = vpack.c.b16 %v917, %v916
      %v923 = vsel %vm318, %v918, 0
      %v926 = vsel %vm318, %v919, 0
      %v929 = vsel %vm318, %v920, 0
      %v932 = vsel %vm318, %v921, 0
      %v935 = vsel %vm331, %v909, 0
      %937 = vmatprep.subr.bf16.mxu0 0
      %938 = vmatpush1.bf16.msra.mxu0 %v935
      %939 = vmatprep.subr.bf16.mxu0 0
      %940 = vmatpush1.bf16.msra.mxu0 0
      %941 = vmatprep.subr.bf16.mxu0 0
      %942 = vmatpush1.bf16.msra.mxu0 0
      %943 = vmatprep.subr.bf16.mxu0 0
      %944 = vmatpush1.bf16.msra.mxu0 0
      %945 = vmatprep.subr.bf16.mxu0 0
      %946 = vmatpush1.bf16.msra.mxu0 0
      %947 = vmatprep.subr.bf16.mxu0 0
      %948 = vmatpush1.bf16.msra.mxu0 0
      %949 = vmatprep.subr.bf16.mxu0 0
      %950 = vmatpush1.bf16.msra.mxu0 0
      %951 = vmatprep.subr.bf16.mxu0 0
      %952 = vmatpush1.bf16.msra.mxu0 0
      %953 = vmatprep.subr.bf16.mxu0 0
      %954 = vmatpush1.bf16.msra.mxu0 0
      %955 = vmatprep.subr.bf16.mxu0 0
      %956 = vmatpush1.bf16.msra.mxu0 0
      %957 = vmatprep.subr.bf16.mxu0 0
      %958 = vmatpush1.bf16.msra.mxu0 0
      %959 = vmatprep.subr.bf16.mxu0 0
      %960 = vmatpush1.bf16.msra.mxu0 0
      %961 = vmatprep.subr.bf16.mxu0 0
      %962 = vmatpush1.bf16.msra.mxu0 0
      %963 = vmatprep.subr.bf16.mxu0 0
      %964 = vmatpush1.bf16.msra.mxu0 0
      %965 = vmatprep.subr.bf16.mxu0 0
      %966 = vmatpush1.bf16.msra.mxu0 0
      %967 = vmatprep.subr.bf16.mxu0 0
      %968 = vmatpush1.bf16.msra.mxu0 0
      %969 = vmatprep.mubr.bf16.mxu0 0
      %970 = vmatmul.mubr.bf16.gmra.mrb[0].mxu0 %v923
      %v971 = vpop.f32.mrb[0].mxu0
      %v972 = vadd.f32 0.0, %v971
      %v973 = vpop.f32.mrb[0].mxu0
      %v974 = vpop.f32.mrb[0].mxu0
      %v975 = vadd.f32 0.0, %v974
      %v976 = vpop.f32.mrb[0].mxu0
      %977 = vmatprep.mubr.bf16.mxu0 0
      %978 = vmatmul.mubr.bf16.gmra.mrb[0].mxu0 %v926
      %v979 = vpop.f32.mrb[0].mxu0
      %v980 = vadd.f32 0.0, %v979
      %v981 = vpop.f32.mrb[0].mxu0
      %v982 = vpop.f32.mrb[0].mxu0
      %v983 = vadd.f32 0.0, %v982
      %v984 = vpop.f32.mrb[0].mxu0
      %985 = vmatprep.mubr.bf16.mxu0 0
      %986 = vmatmul.mubr.bf16.gmra.mrb[0].mxu0 %v929
      %v987 = vpop.f32.mrb[0].mxu0
      %v988 = vadd.f32 0.0, %v987
      %v989 = vpop.f32.mrb[0].mxu0
      %v990 = vpop.f32.mrb[0].mxu0
      %v991 = vadd.f32 0.0, %v990
      %v992 = vpop.f32.mrb[0].mxu0
      %993 = vmatprep.mubr.bf16.mxu0 0
      %994 = vmatmul.mubr.bf16.gmra.mrb[0].mxu0 %v932
      %v995 = vpop.f32.mrb[0].mxu0
      %v996 = vadd.f32 0.0, %v995
      %v997 = vpop.f32.mrb[0].mxu0
      %v998 = vpop.f32.mrb[0].mxu0
      %v999 = vadd.f32 0.0, %v998
      %v1000 = vpop.f32.mrb[0].mxu0
      %1001 = vdwg.mxu0
      %v1002 = vadd.f32 %v772, %v972
      %v1003 = vadd.f32 %v773, %v975
      %v1004 = vadd.f32 %v774, %v980
      %v1005 = vadd.f32 %v775, %v983
      %v1006 = vadd.f32 %v776, %v988
      %v1007 = vadd.f32 %v777, %v991
      %v1008 = vadd.f32 %v778, %v996
      %v1009 = vadd.f32 %v779, %v999
      %v1010 = vld [vmem:[%s661] sm:$0xe]
      %v1011 = vld [vmem:[%s661 + $0x8] sm:$0xe]
      %v1012 = vld [vmem:[%s661 + $0x10] sm:$0xe]
      %v1013 = vld [vmem:[%s661 + $0x18] sm:$0xe]
      %v1014 = vld [vmem:[%s661 + $0x20] sm:$0xe]
      %v1015 = vld [vmem:[%s661 + $0x28] sm:$0xe]
      %v1016 = vld [vmem:[%s661 + $0x30] sm:$0xe]
      %v1017 = vld [vmem:[%s661 + $0x38] sm:$0xe]
      %v1034 = vrot.slane %v1010, 5
      %v1035 = vrot.slane %v1034, 4
      %v1036 = vrot.slane %v781, 5
      %v1037 = vsel %vm526, %v1035, %v1036
      %v1038 = vrot.slane %v1011, 5
      %v1039 = vrot.slane %v1038, 4
      %v1040 = vrot.slane %v783, 5
      %v1041 = vsel %vm526, %v1039, %v1040
      %v1042 = vrot.slane %v1012, 5
      %v1043 = vrot.slane %v1042, 4
      %v1044 = vrot.slane %v785, 5
      %v1045 = vsel %vm526, %v1043, %v1044
      %v1046 = vrot.slane %v1013, 5
      %v1047 = vrot.slane %v1046, 4
      %v1048 = vrot.slane %v787, 5
      %v1049 = vsel %vm526, %v1047, %v1048
      %v1050 = vrot.slane %v1014, 5
      %v1051 = vrot.slane %v1050, 4
      %v1052 = vrot.slane %v789, 5
      %v1053 = vsel %vm526, %v1051, %v1052
      %v1054 = vrot.slane %v1015, 5
      %v1055 = vrot.slane %v1054, 4
      %v1056 = vrot.slane %v791, 5
      %v1057 = vsel %vm526, %v1055, %v1056
      %v1058 = vrot.slane %v1016, 5
      %v1059 = vrot.slane %v1058, 4
      %v1060 = vrot.slane %v793, 5
      %v1061 = vsel %vm526, %v1059, %v1060
      %v1062 = vrot.slane %v1017, 5
      %v1063 = vrot.slane %v1062, 4
      %v1064 = vrot.slane %v795, 5
      %v1065 = vsel %vm526, %v1063, %v1064
      %s1066 = scalar_lea.vmem %s1, 10
      %v1067 = vld [vmem:[%s1066] sm:$0x3]
      %v1068 = vunpack.c.l.b16 %v1037
      %v1069 = vunpack.c.l.b16 %v1041
      %v1070 = vunpack.c.l.b16 %v1045
      %v1071 = vunpack.c.l.b16 %v1049
      %v1072 = vunpack.c.l.b16 %v1053
      %v1073 = vunpack.c.l.b16 %v1057
      %v1074 = vunpack.c.l.b16 %v1061
      %v1075 = vunpack.c.l.b16 %v1065
      %v1076 = vpack.c.b16 %v1069, %v1068
      %v1077 = vpack.c.b16 %v1071, %v1070
      %v1078 = vpack.c.b16 %v1073, %v1072
      %v1079 = vpack.c.b16 %v1075, %v1074
      %v1081 = vsel %vm318, %v1076, 0
      %v1084 = vsel %vm318, %v1077, 0
      %v1087 = vsel %vm318, %v1078, 0
      %v1090 = vsel %vm318, %v1079, 0
      %v1093 = vsel %vm331, %v1067, 0
      %1095 = vmatprep.subr.bf16.mxu0 0
      %1096 = vmatpush1.bf16.msra.mxu0 %v1093
      %1097 = vmatprep.subr.bf16.mxu0 0
      %1098 = vmatpush1.bf16.msra.mxu0 0
      %1099 = vmatprep.subr.bf16.mxu0 0
      %1100 = vmatpush1.bf16.msra.mxu0 0
      %1101 = vmatprep.subr.bf16.mxu0 0
      %1102 = vmatpush1.bf16.msra.mxu0 0
      %1103 = vmatprep.subr.bf16.mxu0 0
      %1104 = vmatpush1.bf16.msra.mxu0 0
      %1105 = vmatprep.subr.bf16.mxu0 0
      %1106 = vmatpush1.bf16.msra.mxu0 0
      %1107 = vmatprep.subr.bf16.mxu0 0
      %1108 = vmatpush1.bf16.msra.mxu0 0
      %1109 = vmatprep.subr.bf16.mxu0 0
      %1110 = vmatpush1.bf16.msra.mxu0 0
      %1111 = vmatprep.subr.bf16.mxu0 0
      %1112 = vmatpush1.bf16.msra.mxu0 0
      %1113 = vmatprep.subr.bf16.mxu0 0
      %1114 = vmatpush1.bf16.msra.mxu0 0
      %1115 = vmatprep.subr.bf16.mxu0 0
      %1116 = vmatpush1.bf16.msra.mxu0 0
      %1117 = vmatprep.subr.bf16.mxu0 0
      %1118 = vmatpush1.bf16.msra.mxu0 0
      %1119 = vmatprep.subr.bf16.mxu0 0
      %1120 = vmatpush1.bf16.msra.mxu0 0
      %1121 = vmatprep.subr.bf16.mxu0 0
      %1122 = vmatpush1.bf16.msra.mxu0 0
      %1123 = vmatprep.subr.bf16.mxu0 0
      %1124 = vmatpush1.bf16.msra.mxu0 0
      %1125 = vmatprep.subr.bf16.mxu0 0
      %1126 = vmatpush1.bf16.msra.mxu0 0
      %1127 = vmatprep.mubr.bf16.mxu0 0
      %1128 = vmatmul.mubr.bf16.gmra.mrb[0].mxu0 %v1081
      %v1129 = vpop.f32.mrb[0].mxu0
      %v1130 = vadd.f32 0.0, %v1129
      %v1131 = vpop.f32.mrb[0].mxu0
      %v1132 = vpop.f32.mrb[0].mxu0
      %v1133 = vadd.f32 0.0, %v1132
      %v1134 = vpop.f32.mrb[0].mxu0
      %1135 = vmatprep.mubr.bf16.mxu0 0
      %1136 = vmatmul.mubr.bf16.gmra.mrb[0].mxu0 %v1084
      %v1137 = vpop.f32.mrb[0].mxu0
      %v1138 = vadd.f32 0.0, %v1137
      %v1139 = vpop.f32.mrb[0].mxu0
      %v1140 = vpop.f32.mrb[0].mxu0
      %v1141 = vadd.f32 0.0, %v1140
      %v1142 = vpop.f32.mrb[0].mxu0
      %1143 = vmatprep.mubr.bf16.mxu0 0
      %1144 = vmatmul.mubr.bf16.gmra.mrb[0].mxu0 %v1087
      %v1145 = vpop.f32.mrb[0].mxu0
      %v1146 = vadd.f32 0.0, %v1145
      %v1147 = vpop.f32.mrb[0].mxu0
      %v1148 = vpop.f32.mrb[0].mxu0
      %v1149 = vadd.f32 0.0, %v1148
      %v1150 = vpop.f32.mrb[0].mxu0
      %1151 = vmatprep.mubr.bf16.mxu0 0
      %1152 = vmatmul.mubr.bf16.gmra.mrb[0].mxu0 %v1090
      %v1153 = vpop.f32.mrb[0].mxu0
      %v1154 = vadd.f32 0.0, %v1153
      %v1155 = vpop.f32.mrb[0].mxu0
      %v1156 = vpop.f32.mrb[0].mxu0
      %v1157 = vadd.f32 0.0, %v1156
      %v1158 = vpop.f32.mrb[0].mxu0
      %1159 = vdwg.mxu0
      %v1160 = vadd.f32 %v1002, %v1130
      %v1161 = vadd.f32 %v1003, %v1133
      %v1162 = vadd.f32 %v1004, %v1138
      %v1163 = vadd.f32 %v1005, %v1141
      %v1164 = vadd.f32 %v1006, %v1146
      %v1165 = vadd.f32 %v1007, %v1149
      %v1166 = vadd.f32 %v1008, %v1154
      %v1167 = vadd.f32 %v1009, %v1157
      %s1168 = scalar_lea.vmem %s165, 16
      %v1169 = vld [vmem:[%s1168] sm:$0xf]
      %v1170 = vld [vmem:[%s1168 + $0x8] sm:$0xf]
      %v1171 = vld [vmem:[%s1168 + $0x10] sm:$0xf]
      %v1172 = vld [vmem:[%s1168 + $0x18] sm:$0xf]
      %v1173 = vld [vmem:[%s1168 + $0x20] sm:$0xf]
      %v1174 = vld [vmem:[%s1168 + $0x28] sm:$0xf]
      %v1175 = vld [vmem:[%s1168 + $0x30] sm:$0xf]
      %v1176 = vld [vmem:[%s1168 + $0x38] sm:$0xf]
      %s1177 = scalar_lea.vmem %s1, 12
      %v1178 = vld [vmem:[%s1177] sm:$0x3]
      %v1187 = vunpack.c.l.b16 %v1169
      %v1188 = vunpack.c.l.b16 %v1170
      %v1189 = vunpack.c.l.b16 %v1171
      %v1190 = vunpack.c.l.b16 %v1172
      %v1191 = vunpack.c.l.b16 %v1173
      %v1192 = vunpack.c.l.b16 %v1174
      %v1193 = vunpack.c.l.b16 %v1175
      %v1194 = vunpack.c.l.b16 %v1176
      %v1195 = vpack.c.b16 %v1188, %v1187
      %v1196 = vpack.c.b16 %v1190, %v1189
      %v1197 = vpack.c.b16 %v1192, %v1191
      %v1198 = vpack.c.b16 %v1194, %v1193
      %v1200 = vsel %vm318, %v1195, 0
      %v1203 = vsel %vm318, %v1196, 0
      %v1206 = vsel %vm318, %v1197, 0
      %v1209 = vsel %vm318, %v1198, 0
      %v1212 = vsel %vm331, %v1178, 0
      %1214 = vmatprep.subr.bf16.mxu0 0
      %1215 = vmatpush1.bf16.msra.mxu0 %v1212
      %1216 = vmatprep.subr.bf16.mxu0 0
      %1217 = vmatpush1.bf16.msra.mxu0 0
      %1218 = vmatprep.subr.bf16.mxu0 0
      %1219 = vmatpush1.bf16.msra.mxu0 0
      %1220 = vmatprep.subr.bf16.mxu0 0
      %1221 = vmatpush1.bf16.msra.mxu0 0
      %1222 = vmatprep.subr.bf16.mxu0 0
      %1223 = vmatpush1.bf16.msra.mxu0 0
      %1224 = vmatprep.subr.bf16.mxu0 0
      %1225 = vmatpush1.bf16.msra.mxu0 0
      %1226 = vmatprep.subr.bf16.mxu0 0
      %1227 = vmatpush1.bf16.msra.mxu0 0
      %1228 = vmatprep.subr.bf16.mxu0 0
      %1229 = vmatpush1.bf16.msra.mxu0 0
      %1230 = vmatprep.subr.bf16.mxu0 0
      %1231 = vmatpush1.bf16.msra.mxu0 0
      %1232 = vmatprep.subr.bf16.mxu0 0
      %1233 = vmatpush1.bf16.msra.mxu0 0
      %1234 = vmatprep.subr.bf16.mxu0 0
      %1235 = vmatpush1.bf16.msra.mxu0 0
      %1236 = vmatprep.subr.bf16.mxu0 0
      %1237 = vmatpush1.bf16.msra.mxu0 0
      %1238 = vmatprep.subr.bf16.mxu0 0
      %1239 = vmatpush1.bf16.msra.mxu0 0
      %1240 = vmatprep.subr.bf16.mxu0 0
      %1241 = vmatpush1.bf16.msra.mxu0 0
      %1242 = vmatprep.subr.bf16.mxu0 0
      %1243 = vmatpush1.bf16.msra.mxu0 0
      %1244 = vmatprep.subr.bf16.mxu0 0
      %1245 = vmatpush1.bf16.msra.mxu0 0
      %1246 = vmatprep.mubr.bf16.mxu0 0
      %1247 = vmatmul.mubr.bf16.gmra.mrb[0].mxu0 %v1200
      %v1248 = vpop.f32.mrb[0].mxu0
      %v1249 = vadd.f32 0.0, %v1248
      %v1250 = vpop.f32.mrb[0].mxu0
      %v1251 = vpop.f32.mrb[0].mxu0
      %v1252 = vadd.f32 0.0, %v1251
      %v1253 = vpop.f32.mrb[0].mxu0
      %1254 = vmatprep.mubr.bf16.mxu0 0
      %1255 = vmatmul.mubr.bf16.gmra.mrb[0].mxu0 %v1203
      %v1256 = vpop.f32.mrb[0].mxu0
      %v1257 = vadd.f32 0.0, %v1256
      %v1258 = vpop.f32.mrb[0].mxu0
      %v1259 = vpop.f32.mrb[0].mxu0
      %v1260 = vadd.f32 0.0, %v1259
      %v1261 = vpop.f32.mrb[0].mxu0
      %1262 = vmatprep.mubr.bf16.mxu0 0
      %1263 = vmatmul.mubr.bf16.gmra.mrb[0].mxu0 %v1206
      %v1264 = vpop.f32.mrb[0].mxu0
      %v1265 = vadd.f32 0.0, %v1264
      %v1266 = vpop.f32.mrb[0].mxu0
      %v1267 = vpop.f32.mrb[0].mxu0
      %v1268 = vadd.f32 0.0, %v1267
      %v1269 = vpop.f32.mrb[0].mxu0
      %1270 = vmatprep.mubr.bf16.mxu0 0
      %1271 = vmatmul.mubr.bf16.gmra.mrb[0].mxu0 %v1209
      %v1272 = vpop.f32.mrb[0].mxu0
      %v1273 = vadd.f32 0.0, %v1272
      %v1274 = vpop.f32.mrb[0].mxu0
      %v1275 = vpop.f32.mrb[0].mxu0
      %v1276 = vadd.f32 0.0, %v1275
      %v1277 = vpop.f32.mrb[0].mxu0
      %1278 = vdwg.mxu0
      %v1279 = vadd.f32 %v1160, %v1249
      %v1280 = vadd.f32 %v1161, %v1252
      %v1281 = vadd.f32 %v1162, %v1257
      %v1282 = vadd.f32 %v1163, %v1260
      %v1283 = vadd.f32 %v1164, %v1265
      %v1284 = vadd.f32 %v1165, %v1268
      %v1285 = vadd.f32 %v1166, %v1273
      %v1286 = vadd.f32 %v1167, %v1276
      %v1287 = vld [vmem:[%s1168] sm:$0xf]
      %v1288 = vld [vmem:[%s1168 + $0x4] sm:$0x1]
      %v1289 = vld [vmem:[%s1168 + $0x8] sm:$0xf]
      %v1290 = vld [vmem:[%s1168 + $0xc] sm:$0x1]
      %v1291 = vld [vmem:[%s1168 + $0x10] sm:$0xf]
      %v1292 = vld [vmem:[%s1168 + $0x14] sm:$0x1]
      %v1293 = vld [vmem:[%s1168 + $0x18] sm:$0xf]
      %v1294 = vld [vmem:[%s1168 + $0x1c] sm:$0x1]
      %v1295 = vld [vmem:[%s1168 + $0x20] sm:$0xf]
      %v1296 = vld [vmem:[%s1168 + $0x24] sm:$0x1]
      %v1297 = vld [vmem:[%s1168 + $0x28] sm:$0xf]
      %v1298 = vld [vmem:[%s1168 + $0x2c] sm:$0x1]
      %v1299 = vld [vmem:[%s1168 + $0x30] sm:$0xf]
      %v1300 = vld [vmem:[%s1168 + $0x34] sm:$0x1]
      %v1301 = vld [vmem:[%s1168 + $0x38] sm:$0xf]
      %v1302 = vld [vmem:[%s1168 + $0x3c] sm:$0x1]
      %v1304 = vshrl.u32 %v1287, 16
      %v1306 = vrot.slane %v1304, 4
      %v1307 = vshll.u32 %v1287, 16
      %v1309 = vrot.slane %v1307, 5
      %v1310 = vor.u32 %v1306, %v1309
      %v1311 = vrot.slane %v1310, 4
      %v1313 = vshll.u32 %v1288, 16
      %v1315 = vrot.slane %v1313, 5
      %v1316 = vsel %vm191, %v1311, %v1315
      %v1318 = vshrl.u32 %v1289, 16
      %v1320 = vrot.slane %v1318, 4
      %v1321 = vshll.u32 %v1289, 16
      %v1323 = vrot.slane %v1321, 5
      %v1324 = vor.u32 %v1320, %v1323
      %v1325 = vrot.slane %v1324, 4
      %v1327 = vshll.u32 %v1290, 16
      %v1329 = vrot.slane %v1327, 5
      %v1330 = vsel %vm191, %v1325, %v1329
      %v1332 = vshrl.u32 %v1291, 16
      %v1334 = vrot.slane %v1332, 4
      %v1335 = vshll.u32 %v1291, 16
      %v1337 = vrot.slane %v1335, 5
      %v1338 = vor.u32 %v1334, %v1337
      %v1339 = vrot.slane %v1338, 4
      %v1341 = vshll.u32 %v1292, 16
      %v1343 = vrot.slane %v1341, 5
      %v1344 = vsel %vm191, %v1339, %v1343
      %v1346 = vshrl.u32 %v1293, 16
      %v1348 = vrot.slane %v1346, 4
      %v1349 = vshll.u32 %v1293, 16
      %v1351 = vrot.slane %v1349, 5
      %v1352 = vor.u32 %v1348, %v1351
      %v1353 = vrot.slane %v1352, 4
      %v1355 = vshll.u32 %v1294, 16
      %v1357 = vrot.slane %v1355, 5
      %v1358 = vsel %vm191, %v1353, %v1357
      %v1360 = vshrl.u32 %v1295, 16
      %v1362 = vrot.slane %v1360, 4
      %v1363 = vshll.u32 %v1295, 16
      %v1365 = vrot.slane %v1363, 5
      %v1366 = vor.u32 %v1362, %v1365
      %v1367 = vrot.slane %v1366, 4
      %v1369 = vshll.u32 %v1296, 16
      %v1371 = vrot.slane %v1369, 5
      %v1372 = vsel %vm191, %v1367, %v1371
      %v1374 = vshrl.u32 %v1297, 16
      %v1376 = vrot.slane %v1374, 4
      %v1377 = vshll.u32 %v1297, 16
      %v1379 = vrot.slane %v1377, 5
      %v1380 = vor.u32 %v1376, %v1379
      %v1381 = vrot.slane %v1380, 4
      %v1383 = vshll.u32 %v1298, 16
      %v1385 = vrot.slane %v1383, 5
      %v1386 = vsel %vm191, %v1381, %v1385
      %v1388 = vshrl.u32 %v1299, 16
      %v1390 = vrot.slane %v1388, 4
      %v1391 = vshll.u32 %v1299, 16
      %v1393 = vrot.slane %v1391, 5
      %v1394 = vor.u32 %v1390, %v1393
      %v1395 = vrot.slane %v1394, 4
      %v1397 = vshll.u32 %v1300, 16
      %v1399 = vrot.slane %v1397, 5
      %v1400 = vsel %vm191, %v1395, %v1399
      %v1402 = vshrl.u32 %v1301, 16
      %v1404 = vrot.slane %v1402, 4
      %v1405 = vshll.u32 %v1301, 16
      %v1407 = vrot.slane %v1405, 5
      %v1408 = vor.u32 %v1404, %v1407
      %v1409 = vrot.slane %v1408, 4
      %v1411 = vshll.u32 %v1302, 16
      %v1413 = vrot.slane %v1411, 5
      %v1414 = vsel %vm191, %v1409, %v1413
      %s1415 = scalar_lea.vmem %s1, 14
      %v1416 = vld [vmem:[%s1415] sm:$0x3]
      %v1417 = vunpack.c.l.b16 %v1316
      %v1418 = vunpack.c.l.b16 %v1330
      %v1419 = vunpack.c.l.b16 %v1344
      %v1420 = vunpack.c.l.b16 %v1358
      %v1421 = vunpack.c.l.b16 %v1372
      %v1422 = vunpack.c.l.b16 %v1386
      %v1423 = vunpack.c.l.b16 %v1400
      %v1424 = vunpack.c.l.b16 %v1414
      %v1425 = vpack.c.b16 %v1418, %v1417
      %v1426 = vpack.c.b16 %v1420, %v1419
      %v1427 = vpack.c.b16 %v1422, %v1421
      %v1428 = vpack.c.b16 %v1424, %v1423
      %v1430 = vsel %vm318, %v1425, 0
      %v1433 = vsel %vm318, %v1426, 0
      %v1436 = vsel %vm318, %v1427, 0
      %v1439 = vsel %vm318, %v1428, 0
      %v1442 = vsel %vm331, %v1416, 0
      %1444 = vmatprep.subr.bf16.mxu0 0
      %1445 = vmatpush1.bf16.msra.mxu0 %v1442
      %1446 = vmatprep.subr.bf16.mxu0 0
      %1447 = vmatpush1.bf16.msra.mxu0 0
      %1448 = vmatprep.subr.bf16.mxu0 0
      %1449 = vmatpush1.bf16.msra.mxu0 0
      %1450 = vmatprep.subr.bf16.mxu0 0
      %1451 = vmatpush1.bf16.msra.mxu0 0
      %1452 = vmatprep.subr.bf16.mxu0 0
      %1453 = vmatpush1.bf16.msra.mxu0 0
      %1454 = vmatprep.subr.bf16.mxu0 0
      %1455 = vmatpush1.bf16.msra.mxu0 0
      %1456 = vmatprep.subr.bf16.mxu0 0
      %1457 = vmatpush1.bf16.msra.mxu0 0
      %1458 = vmatprep.subr.bf16.mxu0 0
      %1459 = vmatpush1.bf16.msra.mxu0 0
      %1460 = vmatprep.subr.bf16.mxu0 0
      %1461 = vmatpush1.bf16.msra.mxu0 0
      %1462 = vmatprep.subr.bf16.mxu0 0
      %1463 = vmatpush1.bf16.msra.mxu0 0
      %1464 = vmatprep.subr.bf16.mxu0 0
      %1465 = vmatpush1.bf16.msra.mxu0 0
      %1466 = vmatprep.subr.bf16.mxu0 0
      %1467 = vmatpush1.bf16.msra.mxu0 0
      %1468 = vmatprep.subr.bf16.mxu0 0
      %1469 = vmatpush1.bf16.msra.mxu0 0
      %1470 = vmatprep.subr.bf16.mxu0 0
      %1471 = vmatpush1.bf16.msra.mxu0 0
      %1472 = vmatprep.subr.bf16.mxu0 0
      %1473 = vmatpush1.bf16.msra.mxu0 0
      %1474 = vmatprep.subr.bf16.mxu0 0
      %1475 = vmatpush1.bf16.msra.mxu0 0
      %1476 = vmatprep.mubr.bf16.mxu0 0
      %1477 = vmatmul.mubr.bf16.gmra.mrb[0].mxu0 %v1430
      %v1478 = vpop.f32.mrb[0].mxu0
      %v1479 = vadd.f32 0.0, %v1478
      %v1480 = vpop.f32.mrb[0].mxu0
      %v1481 = vpop.f32.mrb[0].mxu0
      %v1482 = vadd.f32 0.0, %v1481
      %v1483 = vpop.f32.mrb[0].mxu0
      %1484 = vmatprep.mubr.bf16.mxu0 0
      %1485 = vmatmul.mubr.bf16.gmra.mrb[0].mxu0 %v1433
      %v1486 = vpop.f32.mrb[0].mxu0
      %v1487 = vadd.f32 0.0, %v1486
      %v1488 = vpop.f32.mrb[0].mxu0
      %v1489 = vpop.f32.mrb[0].mxu0
      %v1490 = vadd.f32 0.0, %v1489
      %v1491 = vpop.f32.mrb[0].mxu0
      %1492 = vmatprep.mubr.bf16.mxu0 0
      %1493 = vmatmul.mubr.bf16.gmra.mrb[0].mxu0 %v1436
      %v1494 = vpop.f32.mrb[0].mxu0
      %v1495 = vadd.f32 0.0, %v1494
      %v1496 = vpop.f32.mrb[0].mxu0
      %v1497 = vpop.f32.mrb[0].mxu0
      %v1498 = vadd.f32 0.0, %v1497
      %v1499 = vpop.f32.mrb[0].mxu0
      %1500 = vmatprep.mubr.bf16.mxu0 0
      %1501 = vmatmul.mubr.bf16.gmra.mrb[0].mxu0 %v1439
      %v1502 = vpop.f32.mrb[0].mxu0
      %v1503 = vadd.f32 0.0, %v1502
      %v1504 = vpop.f32.mrb[0].mxu0
      %v1505 = vpop.f32.mrb[0].mxu0
      %v1506 = vadd.f32 0.0, %v1505
      %v1507 = vpop.f32.mrb[0].mxu0
      %1508 = vdwg.mxu0
      %v1509 = vadd.f32 %v1279, %v1479
      %v1510 = vadd.f32 %v1280, %v1482
      %v1511 = vadd.f32 %v1281, %v1487
      %v1512 = vadd.f32 %v1282, %v1490
      %v1513 = vadd.f32 %v1283, %v1495
      %v1514 = vadd.f32 %v1284, %v1498
      %v1515 = vadd.f32 %v1285, %v1503
      %v1516 = vadd.f32 %v1286, %v1506
      %v1517 = vld [vmem:[%s1168] sm:$0xe]
      %v1518 = vld [vmem:[%s1168 + $0x8] sm:$0xe]
      %v1519 = vld [vmem:[%s1168 + $0x10] sm:$0xe]
      %v1520 = vld [vmem:[%s1168 + $0x18] sm:$0xe]
      %v1521 = vld [vmem:[%s1168 + $0x20] sm:$0xe]
      %v1522 = vld [vmem:[%s1168 + $0x28] sm:$0xe]
      %v1523 = vld [vmem:[%s1168 + $0x30] sm:$0xe]
      %v1524 = vld [vmem:[%s1168 + $0x38] sm:$0xe]
      %v1541 = vrot.slane %v1517, 5
      %v1542 = vrot.slane %v1541, 4
      %v1543 = vrot.slane %v1288, 5
      %v1544 = vsel %vm526, %v1542, %v1543
      %v1545 = vrot.slane %v1518, 5
      %v1546 = vrot.slane %v1545, 4
      %v1547 = vrot.slane %v1290, 5
      %v1548 = vsel %vm526, %v1546, %v1547
      %v1549 = vrot.slane %v1519, 5
      %v1550 = vrot.slane %v1549, 4
      %v1551 = vrot.slane %v1292, 5
      %v1552 = vsel %vm526, %v1550, %v1551
      %v1553 = vrot.slane %v1520, 5
      %v1554 = vrot.slane %v1553, 4
      %v1555 = vrot.slane %v1294, 5
      %v1556 = vsel %vm526, %v1554, %v1555
      %v1557 = vrot.slane %v1521, 5
      %v1558 = vrot.slane %v1557, 4
      %v1559 = vrot.slane %v1296, 5
      %v1560 = vsel %vm526, %v1558, %v1559
      %v1561 = vrot.slane %v1522, 5
      %v1562 = vrot.slane %v1561, 4
      %v1563 = vrot.slane %v1298, 5
      %v1564 = vsel %vm526, %v1562, %v1563
      %v1565 = vrot.slane %v1523, 5
      %v1566 = vrot.slane %v1565, 4
      %v1567 = vrot.slane %v1300, 5
      %v1568 = vsel %vm526, %v1566, %v1567
      %v1569 = vrot.slane %v1524, 5
      %v1570 = vrot.slane %v1569, 4
      %v1571 = vrot.slane %v1302, 5
      %v1572 = vsel %vm526, %v1570, %v1571
      %s1573 = scalar_lea.vmem %s1, 16
      %v1574 = vld [vmem:[%s1573] sm:$0x3]
      %v1575 = vunpack.c.l.b16 %v1544
      %v1576 = vunpack.c.l.b16 %v1548
      %v1577 = vunpack.c.l.b16 %v1552
      %v1578 = vunpack.c.l.b16 %v1556
      %v1579 = vunpack.c.l.b16 %v1560
      %v1580 = vunpack.c.l.b16 %v1564
      %v1581 = vunpack.c.l.b16 %v1568
      %v1582 = vunpack.c.l.b16 %v1572
      %v1583 = vpack.c.b16 %v1576, %v1575
      %v1584 = vpack.c.b16 %v1578, %v1577
      %v1585 = vpack.c.b16 %v1580, %v1579
      %v1586 = vpack.c.b16 %v1582, %v1581
      %v1588 = vsel %vm318, %v1583, 0
      %v1591 = vsel %vm318, %v1584, 0
      %v1594 = vsel %vm318, %v1585, 0
      %v1597 = vsel %vm318, %v1586, 0
      %v1600 = vsel %vm331, %v1574, 0
      %1602 = vmatprep.subr.bf16.mxu0 0
      %1603 = vmatpush1.bf16.msra.mxu0 %v1600
      %1604 = vmatprep.subr.bf16.mxu0 0
      %1605 = vmatpush1.bf16.msra.mxu0 0
      %1606 = vmatprep.subr.bf16.mxu0 0
      %1607 = vmatpush1.bf16.msra.mxu0 0
      %1608 = vmatprep.subr.bf16.mxu0 0
      %1609 = vmatpush1.bf16.msra.mxu0 0
      %1610 = vmatprep.subr.bf16.mxu0 0
      %1611 = vmatpush1.bf16.msra.mxu0 0
      %1612 = vmatprep.subr.bf16.mxu0 0
      %1613 = vmatpush1.bf16.msra.mxu0 0
      %1614 = vmatprep.subr.bf16.mxu0 0
      %1615 = vmatpush1.bf16.msra.mxu0 0
      %1616 = vmatprep.subr.bf16.mxu0 0
      %1617 = vmatpush1.bf16.msra.mxu0 0
      %1618 = vmatprep.subr.bf16.mxu0 0
      %1619 = vmatpush1.bf16.msra.mxu0 0
      %1620 = vmatprep.subr.bf16.mxu0 0
      %1621 = vmatpush1.bf16.msra.mxu0 0
      %1622 = vmatprep.subr.bf16.mxu0 0
      %1623 = vmatpush1.bf16.msra.mxu0 0
      %1624 = vmatprep.subr.bf16.mxu0 0
      %1625 = vmatpush1.bf16.msra.mxu0 0
      %1626 = vmatprep.subr.bf16.mxu0 0
      %1627 = vmatpush1.bf16.msra.mxu0 0
      %1628 = vmatprep.subr.bf16.mxu0 0
      %1629 = vmatpush1.bf16.msra.mxu0 0
      %1630 = vmatprep.subr.bf16.mxu0 0
      %1631 = vmatpush1.bf16.msra.mxu0 0
      %1632 = vmatprep.subr.bf16.mxu0 0
      %1633 = vmatpush1.bf16.msra.mxu0 0
      %1634 = vmatprep.mubr.bf16.mxu0 0
      %1635 = vmatmul.mubr.bf16.gmra.mrb[0].mxu0 %v1588
      %v1636 = vpop.f32.mrb[0].mxu0
      %v1637 = vadd.f32 0.0, %v1636
      %v1638 = vpop.f32.mrb[0].mxu0
      %v1639 = vpop.f32.mrb[0].mxu0
      %v1640 = vadd.f32 0.0, %v1639
      %v1641 = vpop.f32.mrb[0].mxu0
      %1642 = vmatprep.mubr.bf16.mxu0 0
      %1643 = vmatmul.mubr.bf16.gmra.mrb[0].mxu0 %v1591
      %v1644 = vpop.f32.mrb[0].mxu0
      %v1645 = vadd.f32 0.0, %v1644
      %v1646 = vpop.f32.mrb[0].mxu0
      %v1647 = vpop.f32.mrb[0].mxu0
      %v1648 = vadd.f32 0.0, %v1647
      %v1649 = vpop.f32.mrb[0].mxu0
      %1650 = vmatprep.mubr.bf16.mxu0 0
      %1651 = vmatmul.mubr.bf16.gmra.mrb[0].mxu0 %v1594
      %v1652 = vpop.f32.mrb[0].mxu0
      %v1653 = vadd.f32 0.0, %v1652
      %v1654 = vpop.f32.mrb[0].mxu0
      %v1655 = vpop.f32.mrb[0].mxu0
      %v1656 = vadd.f32 0.0, %v1655
      %v1657 = vpop.f32.mrb[0].mxu0
      %1658 = vmatprep.mubr.bf16.mxu0 0
      %1659 = vmatmul.mubr.bf16.gmra.mrb[0].mxu0 %v1597
      %v1660 = vpop.f32.mrb[0].mxu0
      %v1661 = vadd.f32 0.0, %v1660
      %v1662 = vpop.f32.mrb[0].mxu0
      %v1663 = vpop.f32.mrb[0].mxu0
      %v1664 = vadd.f32 0.0, %v1663
      %v1665 = vpop.f32.mrb[0].mxu0
      %1666 = vdwg.mxu0
      %v1667 = vadd.f32 %v1509, %v1637
      %v1668 = vadd.f32 %v1510, %v1640
      %v1669 = vadd.f32 %v1511, %v1645
      %v1670 = vadd.f32 %v1512, %v1648
      %v1671 = vadd.f32 %v1513, %v1653
      %v1672 = vadd.f32 %v1514, %v1656
      %v1673 = vadd.f32 %v1515, %v1661
      %v1674 = vadd.f32 %v1516, %v1664
      %v1675 = vld [vmem:[%s2] sm:$0x1]
      %v1677 = vlaneseq
      %v1678 = vshrl.u32 %v1677, 7
      %v1679 = vsub.s32 0, %v1678
      %v1680 = vrot.slane %v1675, %v1679
      %v1682 = vadd.f32 %v1667, %v1680
      %v1683 = vadd.f32 %v1668, %v1680
      %v1684 = vadd.f32 %v1669, %v1680
      %v1685 = vadd.f32 %v1670, %v1680
      %v1686 = vadd.f32 %v1671, %v1680
      %v1687 = vadd.f32 %v1672, %v1680
      %v1688 = vadd.f32 %v1673, %v1680
      %v1689 = vadd.f32 %v1674, %v1680
      %v1690 = vpack.c.bf16 %v1682, %v1682
      %v1691 = vpack.c.bf16 %v1683, %v1683
      %v1692 = vpack.c.bf16 %v1684, %v1684
      %v1693 = vpack.c.bf16 %v1685, %v1685
      %v1694 = vpack.c.bf16 %v1686, %v1686
      %v1695 = vpack.c.bf16 %v1687, %v1687
      %v1696 = vpack.c.bf16 %v1688, %v1688
      %v1697 = vpack.c.bf16 %v1689, %v1689
      %vm1698 = vcmask 60416
      %1699 = vst.msk [vmem:[%s170] sm:$0xf] %vm1698, %v1690
      %1700 = vst.msk [vmem:[%s170 + $0x4] sm:$0xf] %vm1698, %v1691
      %1701 = vst.msk [vmem:[%s170 + $0x8] sm:$0xf] %vm1698, %v1692
      %1702 = vst.msk [vmem:[%s170 + $0xc] sm:$0xf] %vm1698, %v1693
      %1703 = vst.msk [vmem:[%s170 + $0x10] sm:$0xf] %vm1698, %v1694
      %1704 = vst.msk [vmem:[%s170 + $0x14] sm:$0xf] %vm1698, %v1695
      %1705 = vst.msk [vmem:[%s170 + $0x18] sm:$0xf] %vm1698, %v1696
      %1706 = vst.msk [vmem:[%s170 + $0x1c] sm:$0xf] %vm1698, %v1697
      %p1707 = scmp.lt.s32.totalorder %s14, 1
      %s1708 = scalar_select %p1707, %s14, 1
      %s1709 = smul.addr %s1708, 8
      %s1710 = smul.addr %s1709, 4
      %s1711 = scalar_lea.vmem %s3, %s1710
      // Predicated region
      $region33: #{down_forward.10} parent=31 // pred_check
        %p1712 = pneg %p100
      $region34: #{down_forward.10} parent=31 // pred_check_branch
        %1714 = sbr.rel (%p1712) target = $region36
      $region35: #{down_forward.10} parent=31 // pred_region
        _
      $region36: #{down_forward.10} parent=31 // pred_fallthru
        _
    $region32: #{down_forward.10} parent=5 // pred_fallthru
      _
    %p1715 = scmp.le.s32.totalorder 2, %s9
    // Predicated region
    $region37: #{down_forward.10} parent=5 // pred_check
      %p1716 = pneg %p1715
    $region38: #{down_forward.10} parent=5 // pred_check_branch
      %1718 = sbr.rel (%p1716) target = $region40
    $region39: #{down_forward.10} parent=5 // pred_region
      %s1719 = ssub.s32 %s9, 2
      // Predicated region
      $region41: #{down_forward.10} parent=39 // pred_check
        %p1720 = pneg %p106
      $region42: #{down_forward.10} parent=39 // pred_check_branch
        %1722 = sbr.rel (%p1720) target = $region44
      $region43: #{down_forward.10} parent=39 // pred_region
        %p1723 = scmp.lt.s32.totalorder %s15, 1
        %s1724 = scalar_select %p1723, %s15, 1
        %s1725 = smul.addr %s1724, 8
        %s1726 = smul.addr %s1725, 4
        %s1727 = scalar_lea.vmem %s3, %s1726
      $region44: #{down_forward.10} parent=39 // pred_fallthru
        _
    $region40: #{down_forward.10} parent=5 // pred_fallthru
      _
  $region6: #{down_forward.10} parent=0 // loop_footer
    %s13 = sadd.s32 1, %s9
  $region7: #{down_forward.10} parent=0 // loop_footer_branch
    %8 = sbr.rel target = $region3
  $region8: #{down_forward.10} parent=0 // loop_exit
    _

// kernel: down_forward.12
$region0: #{down_forward.12}
  #allocation0 [shape = 'u32[]', space=smem, size = 0x4, offset = 0x4, fixed_abs, tag = 'smem constant byte address 0x4 - core index']
  #allocation1 [shape = 'u32[144,128]{1,0:T(1,128)}', space=vmem, size = 0x12000, scoped, tag = 'internal scratch']
  %s0 = inlined_call_operand.vmem [shape: bf16[2,10,10,8], index: 0, kind: input, shape index: {}]
  %s1 = inlined_call_operand.vmem [shape: bf16[9,8,8], index: 1, kind: input, shape index: {}]
  %s2 = inlined_call_operand.vmem [shape: f32[1,8], index: 2, kind: input, shape index: {}]
  %s3 = inlined_call_operand.vmem [shape: bf16[2,8,8,8], index: 3, kind: output, shape index: {}]
  %s4 = sld [smem:[#allocation0]]
  $region45: #{down_forward.12} parent=0
    _
  %s6 = ssub.s32 1, %s4
  %s7 = scalar_select 0, %s6, %s4
  loop: start=0, step=1, limit=4
  $region2: #{down_forward.12} parent=0 // loop_pre_header
    _
  $region3: #{down_forward.12} parent=0 // loop_header
    %s9 = sphi 0, %s13
    %p10 = scmp.ge.s32.totalorder %s9, 4
    %s19 = sphi 0, %s21
    %s22 = sphi 0, %s19
    %s23 = sphi 0, %s22
    %s39 = sphi 0, %s23
    %s43 = sphi 0, %s43
    %s45 = sphi 0, %s43
    %s46 = sphi 0, %s45
    %s60 = sphi 0, %s46
    %s64 = sphi 0, %s64
    %s66 = sphi 0, %s64
    %s67 = sphi 0, %s66
    %s81 = sphi 0, %s67
    %s87 = sphi 0, %s89
    %s90 = sphi 0, %s87
    %s91 = sphi 0, %s90
    %s107 = sphi 0, %s91
  $region4: #{down_forward.12} parent=0 // loop_header_branch
    %12 = sbr.rel (%p10) target = $region8
  $region5: #{down_forward.12} parent=0 // loop_body
    %s14 = ssub.s32 %s9, 1
    %s15 = ssub.s32 %s9, 2
    %s16 = sadd.s32 %s9, 1
    %s17 = ssub.s32 %s9, %s16
    %p18 = scmp.eq.s32.totalorder %s17, 0
    %s20 = sadd.s32 %s19, 1
    %s21 = scalar_select %p18, %s19, %s20
    %p24 = pneg %p18
    %p25 = scmp.eq.s32.totalorder %s9, 1
    %p26 = por %p24, %p25
    %p27 = scmp.ne.s32.totalorder %s19, %s22
    %p28 = scmp.eq.s32.totalorder %s9, 0
    %p29 = por %p27, %p28
    %p30 = scmp.ne.s32.totalorder %s19, %s22
    %p31 = scmp.eq.s32.totalorder %s14, 1
    %p32 = por %p30, %p31
    %p33 = scmp.ne.s32.totalorder %s22, %s23
    %p34 = scmp.eq.s32.totalorder %s14, 0
    %p35 = por %p33, %p34
    %p36 = scmp.ne.s32.totalorder %s22, %s23
    %p37 = scmp.eq.s32.totalorder %s15, 1
    %p38 = por %p36, %p37
    %p40 = scmp.ne.s32.totalorder %s23, %s39
    %p41 = scmp.eq.s32.totalorder %s15, 0
    %p42 = por %p40, %p41
    %s44 = sadd.s32 %s43, 1
    %p47 = scmp.eq.s32.totalorder %s9, 1
    %p48 = scmp.ne.s32.totalorder %s43, %s45
    %p49 = scmp.eq.s32.totalorder %s9, 0
    %p50 = por %p48, %p49
    %p51 = scmp.ne.s32.totalorder %s43, %s45
    %p52 = scmp.eq.s32.totalorder %s14, 1
    %p53 = por %p51, %p52
    %p54 = scmp.ne.s32.totalorder %s45, %s46
    %p55 = scmp.eq.s32.totalorder %s14, 0
    %p56 = por %p54, %p55
    %p57 = scmp.ne.s32.totalorder %s45, %s46
    %p58 = scmp.eq.s32.totalorder %s15, 1
    %p59 = por %p57, %p58
    %p61 = scmp.ne.s32.totalorder %s46, %s60
    %p62 = scmp.eq.s32.totalorder %s15, 0
    %p63 = por %p61, %p62
    %s65 = sadd.s32 %s64, 1
    %p68 = scmp.eq.s32.totalorder %s9, 1
    %p69 = scmp.ne.s32.totalorder %s64, %s66
    %p70 = scmp.eq.s32.totalorder %s9, 0
    %p71 = por %p69, %p70
    %p72 = scmp.ne.s32.totalorder %s64, %s66
    %p73 = scmp.eq.s32.totalorder %s14, 1
    %p74 = por %p72, %p73
    %p75 = scmp.ne.s32.totalorder %s66, %s67
    %p76 = scmp.eq.s32.totalorder %s14, 0
    %p77 = por %p75, %p76
    %p78 = scmp.ne.s32.totalorder %s66, %s67
    %p79 = scmp.eq.s32.totalorder %s15, 1
    %p80 = por %p78, %p79
    %p82 = scmp.ne.s32.totalorder %s67, %s81
    %p83 = scmp.eq.s32.totalorder %s15, 0
    %p84 = por %p82, %p83
    %s85 = ssub.s32 %s9, %s16
    %p86 = scmp.eq.s32.totalorder %s85, 0
    %s88 = sadd.s32 %s87, 1
    %s89 = scalar_select %p86, %s87, %s88
    %p92 = pneg %p86
    %p93 = scmp.eq.s32.totalorder %s9, 1
    %p94 = por %p92, %p93
    %p95 = scmp.ne.s32.totalorder %s87, %s90
    %p96 = scmp.eq.s32.totalorder %s9, 0
    %p97 = por %p95, %p96
    %p98 = scmp.ne.s32.totalorder %s87, %s90
    %p99 = scmp.eq.s32.totalorder %s14, 1
    %p100 = por %p98, %p99
    %p101 = scmp.ne.s32.totalorder %s90, %s91
    %p102 = scmp.eq.s32.totalorder %s14, 0
    %p103 = por %p101, %p102
    %p104 = scmp.ne.s32.totalorder %s90, %s91
    %p105 = scmp.eq.s32.totalorder %s15, 1
    %p106 = por %p104, %p105
    %p108 = scmp.ne.s32.totalorder %s91, %s107
    %p109 = scmp.eq.s32.totalorder %s15, 0
    %p110 = por %p108, %p109
    %p111 = scmp.le.s32.totalorder 1, %s9
    %p112 = scmp.lt.s32.totalorder %s9, 3
    %p113 = pnand %p111, %p112
    %p114 = pneg %p113
    // Predicated region
    $region9: #{down_forward.12} parent=5 // pred_check
      _
    $region10: #{down_forward.12} parent=5 // pred_check_branch
      %116 = sbr.rel (%p113) target = $region12
    $region11: #{down_forward.12} parent=5 // pred_region
      %s117 = ssub.s32 %s9, 1
      // Predicated region
      $region13: #{down_forward.12} parent=11 // pred_check
        %p118 = pneg %p56
      $region14: #{down_forward.12} parent=11 // pred_check_branch
        %120 = sbr.rel (%p118) target = $region16
      $region15: #{down_forward.12} parent=11 // pred_region
        _
      $region16: #{down_forward.12} parent=11 // pred_fallthru
        _
      // Predicated region
      $region17: #{down_forward.12} parent=11 // pred_check
        %p121 = pneg %p77
      $region18: #{down_forward.12} parent=11 // pred_check_branch
        %123 = sbr.rel (%p121) target = $region20
      $region19: #{down_forward.12} parent=11 // pred_region
        _
      $region20: #{down_forward.12} parent=11 // pred_fallthru
        _
    $region12: #{down_forward.12} parent=5 // pred_fallthru
      _
    %p124 = scmp.lt.s32.totalorder %s9, 2
    // Predicated region
    $region21: #{down_forward.12} parent=5 // pred_check
      %p125 = pneg %p124
    $region22: #{down_forward.12} parent=5 // pred_check_branch
      %127 = sbr.rel (%p125) target = $region24
    $region23: #{down_forward.12} parent=5 // pred_region
      // Predicated region
      $region25: #{down_forward.12} parent=23 // pred_check
        %p128 = pneg %p29
      $region26: #{down_forward.12} parent=23 // pred_check_branch
        %130 = sbr.rel (%p128) target = $region28
      $region27: #{down_forward.12} parent=23 // pred_region
        %p131 = scmp.lt.s32.totalorder %s9, 1
        %s132 = scalar_select %p131, %s9, 1
        %s133 = smul.addr %s132, 20
        %s134 = smul.addr %s133, 4
        %s135 = scalar_lea.vmem %s0, %s134
      $region28: #{down_forward.12} parent=23 // pred_fallthru
        _
    $region24: #{down_forward.12} parent=5 // pred_fallthru
      _
    %p136 = scmp.le.s32.totalorder 1, %s9
    %p137 = scmp.lt.s32.totalorder %s9, 3
    %p138 = pnand %p136, %p137
    %p139 = pneg %p138
    // Predicated region
    $region29: #{down_forward.12} parent=5 // pred_check
      _
    $region30: #{down_forward.12} parent=5 // pred_check_branch
      %141 = sbr.rel (%p138) target = $region32
    $region31: #{down_forward.12} parent=5 // pred_region
      %s142 = ssub.s32 %s9, 1
      %p143 = scmp.lt.s32.totalorder %s14, 1
      %s144 = scalar_select %p143, %s14, 1
      %s145 = smul.addr %s144, 20
      %s146 = smul.addr %s145, 4
      %s147 = scalar_lea.vmem %s0, %s146
      %p148 = pneg %p35
      %p149 = pneg %p32
      %p150 = pneg %p56
      %p151 = pneg %p53
      %p152 = pneg %p77
      %p153 = pneg %p74
      %p154 = pneg %p103
      %p155 = pneg %p100
      %p156 = scmp.lt.s32.totalorder %s14, 1
      %s157 = scalar_select %p156, %s14, 1
      %s158 = smul.addr %s157, 8
      %s159 = smul.addr %s158, 4
      %s160 = scalar_lea.vmem %s3, %s159
      %p161 = scmp.lt.s32.totalorder %s14, 1
      %s162 = scalar_select %p161, %s14, 1
      %s163 = smul.addr %s162, 20
      %s164 = smul.addr %s163, 4
      %s165 = scalar_lea.vmem %s0, %s164
      %p166 = scmp.lt.s32.totalorder %s14, 1
      %s167 = scalar_select %p166, %s14, 1
      %s168 = smul.addr %s167, 8
      %s169 = smul.addr %s168, 4
      %s170 = scalar_lea.vmem %s3, %s169
      %v172 = vld [vmem:[%s165] sm:$0xf]
      %v173 = vld [vmem:[%s165 + $0x8] sm:$0xf]
      %v174 = vld [vmem:[%s165 + $0x10] sm:$0xf]
      %v175 = vld [vmem:[%s165 + $0x18] sm:$0xf]
      %v176 = vld [vmem:[%s165 + $0x20] sm:$0xf]
      %v177 = vld [vmem:[%s165 + $0x28] sm:$0xf]
      %v178 = vld [vmem:[%s165 + $0x30] sm:$0xf]
      %v179 = vld [vmem:[%s165 + $0x38] sm:$0xf]
      %v180 = vld [vmem:[%s1] sm:$0xf]
      %v181 = vld [vmem:[%s165 + $0x4] sm:$0x1]
      %v182 = vld [vmem:[%s165 + $0xc] sm:$0x1]
      %v183 = vld [vmem:[%s165 + $0x14] sm:$0x1]
      %v184 = vld [vmem:[%s165 + $0x1c] sm:$0x1]
      %v185 = vld [vmem:[%s165 + $0x24] sm:$0x1]
      %v186 = vld [vmem:[%s165 + $0x2c] sm:$0x1]
      %v187 = vld [vmem:[%s165 + $0x34] sm:$0x1]
      %v188 = vld [vmem:[%s165 + $0x3c] sm:$0x1]
      %vm189 = vsmask.f32 3328
      %vm190 = vsmask.f32 7440
      %vm191 = vmor %vm189, %vm190
      %v193 = vshrl.u32 %v172, 16
      %v195 = vrot.slane %v193, 4
      %v196 = vshll.u32 %v172, 16
      %v198 = vrot.slane %v196, 5
      %v199 = vor.u32 %v195, %v198
      %v200 = vrot.slane %v199, 4
      %v202 = vshll.u32 %v181, 16
      %v204 = vrot.slane %v202, 5
      %v205 = vsel %vm191, %v200, %v204
      %v207 = vshrl.u32 %v173, 16
      %v209 = vrot.slane %v207, 4
      %v210 = vshll.u32 %v173, 16
      %v212 = vrot.slane %v210, 5
      %v213 = vor.u32 %v209, %v212
      %v214 = vrot.slane %v213, 4
      %v216 = vshll.u32 %v182, 16
      %v218 = vrot.slane %v216, 5
      %v219 = vsel %vm191, %v214, %v218
      %v221 = vshrl.u32 %v174, 16
      %v223 = vrot.slane %v221, 4
      %v224 = vshll.u32 %v174, 16
      %v226 = vrot.slane %v224, 5
      %v227 = vor.u32 %v223, %v226
      %v228 = vrot.slane %v227, 4
      %v230 = vshll.u32 %v183, 16
      %v232 = vrot.slane %v230, 5
      %v233 = vsel %vm191, %v228, %v232
      %v235 = vshrl.u32 %v175, 16
      %v237 = vrot.slane %v235, 4
      %v238 = vshll.u32 %v175, 16
      %v240 = vrot.slane %v238, 5
      %v241 = vor.u32 %v237, %v240
      %v242 = vrot.slane %v241, 4
      %v244 = vshll.u32 %v184, 16
      %v246 = vrot.slane %v244, 5
      %v247 = vsel %vm191, %v242, %v246
      %v249 = vshrl.u32 %v176, 16
      %v251 = vrot.slane %v249, 4
      %v252 = vshll.u32 %v176, 16
      %v254 = vrot.slane %v252, 5
      %v255 = vor.u32 %v251, %v254
      %v256 = vrot.slane %v255, 4
      %v258 = vshll.u32 %v185, 16
      %v260 = vrot.slane %v258, 5
      %v261 = vsel %vm191, %v256, %v260
      %v263 = vshrl.u32 %v177, 16
      %v265 = vrot.slane %v263, 4
      %v266 = vshll.u32 %v177, 16
      %v268 = vrot.slane %v266, 5
      %v269 = vor.u32 %v265, %v268
      %v270 = vrot.slane %v269, 4
      %v272 = vshll.u32 %v186, 16
      %v274 = vrot.slane %v272, 5
      %v275 = vsel %vm191, %v270, %v274
      %v277 = vshrl.u32 %v178, 16
      %v279 = vrot.slane %v277, 4
      %v280 = vshll.u32 %v178, 16
      %v282 = vrot.slane %v280, 5
      %v283 = vor.u32 %v279, %v282
      %v284 = vrot.slane %v283, 4
      %v286 = vshll.u32 %v187, 16
      %v288 = vrot.slane %v286, 5
      %v289 = vsel %vm191, %v284, %v288
      %v291 = vshrl.u32 %v179, 16
      %v293 = vrot.slane %v291, 4
      %v294 = vshll.u32 %v179, 16
      %v296 = vrot.slane %v294, 5
      %v297 = vor.u32 %v293, %v296
      %v298 = vrot.slane %v297, 4
      %v300 = vshll.u32 %v188, 16
      %v302 = vrot.slane %v300, 5
      %v303 = vsel %vm191, %v298, %v302
      %s304 = scalar_lea.vmem %s1, 4
      %v305 = vld [vmem:[%s304] sm:$0xf]
      %v306 = vunpack.c.l.b16 %v205
      %v307 = vunpack.c.l.b16 %v219
      %v308 = vunpack.c.l.b16 %v233
      %v309 = vunpack.c.l.b16 %v247
      %v310 = vunpack.c.l.b16 %v261
      %v311 = vunpack.c.l.b16 %v275
      %v312 = vunpack.c.l.b16 %v289
      %v313 = vunpack.c.l.b16 %v303
      %v314 = vpack.c.b16 %v307, %v306
      %v315 = vpack.c.b16 %v309, %v308
      %v316 = vpack.c.b16 %v311, %v310
      %v317 = vpack.c.b16 %v313, %v312
      %vm318 = vcmask 64512
      %v320 = vsel %vm318, %v314, 0
      %v323 = vsel %vm318, %v315, 0
      %v326 = vsel %vm318, %v316, 0
      %v329 = vsel %vm318, %v317, 0
      %vm331 = vcmask 1043456
      %v333 = vsel %vm331, %v305, 0
      %335 = vmatprep.subr.bf16.mxu0 0
      %336 = vmatpush1.bf16.msra.mxu0 %v333
      %337 = vmatprep.subr.bf16.mxu0 0
      %338 = vmatpush1.bf16.msra.mxu0 0
      %339 = vmatprep.subr.bf16.mxu0 0
      %340 = vmatpush1.bf16.msra.mxu0 0
      %341 = vmatprep.subr.bf16.mxu0 0
      %342 = vmatpush1.bf16.msra.mxu0 0
      %343 = vmatprep.subr.bf16.mxu0 0
      %344 = vmatpush1.bf16.msra.mxu0 0
      %345 = vmatprep.subr.bf16.mxu0 0
      %346 = vmatpush1.bf16.msra.mxu0 0
      %347 = vmatprep.subr.bf16.mxu0 0
      %348 = vmatpush1.bf16.msra.mxu0 0
      %349 = vmatprep.subr.bf16.mxu0 0
      %350 = vmatpush1.bf16.msra.mxu0 0
      %351 = vmatprep.subr.bf16.mxu0 0
      %352 = vmatpush1.bf16.msra.mxu0 0
      %353 = vmatprep.subr.bf16.mxu0 0
      %354 = vmatpush1.bf16.msra.mxu0 0
      %355 = vmatprep.subr.bf16.mxu0 0
      %356 = vmatpush1.bf16.msra.mxu0 0
      %357 = vmatprep.subr.bf16.mxu0 0
      %358 = vmatpush1.bf16.msra.mxu0 0
      %359 = vmatprep.subr.bf16.mxu0 0
      %360 = vmatpush1.bf16.msra.mxu0 0
      %361 = vmatprep.subr.bf16.mxu0 0
      %362 = vmatpush1.bf16.msra.mxu0 0
      %363 = vmatprep.subr.bf16.mxu0 0
      %364 = vmatpush1.bf16.msra.mxu0 0
      %365 = vmatprep.subr.bf16.mxu0 0
      %366 = vmatpush1.bf16.msra.mxu0 0
      %367 = vmatprep.mubr.bf16.mxu0 0
      %368 = vmatmul.mubr.bf16.gmra.mrb[0].mxu0 %v320
      %v369 = vpop.f32.mrb[0].mxu0
      %v370 = vadd.f32 0.0, %v369
      %v371 = vpop.f32.mrb[0].mxu0
      %v372 = vpop.f32.mrb[0].mxu0
      %v373 = vadd.f32 0.0, %v372
      %v374 = vpop.f32.mrb[0].mxu0
      %375 = vmatprep.mubr.bf16.mxu0 0
      %376 = vmatmul.mubr.bf16.gmra.mrb[0].mxu0 %v323
      %v377 = vpop.f32.mrb[0].mxu0
      %v378 = vadd.f32 0.0, %v377
      %v379 = vpop.f32.mrb[0].mxu0
      %v380 = vpop.f32.mrb[0].mxu0
      %v381 = vadd.f32 0.0, %v380
      %v382 = vpop.f32.mrb[0].mxu0
      %383 = vmatprep.mubr.bf16.mxu0 0
      %384 = vmatmul.mubr.bf16.gmra.mrb[0].mxu0 %v326
      %v385 = vpop.f32.mrb[0].mxu0
      %v386 = vadd.f32 0.0, %v385
      %v387 = vpop.f32.mrb[0].mxu0
      %v388 = vpop.f32.mrb[0].mxu0
      %v389 = vadd.f32 0.0, %v388
      %v390 = vpop.f32.mrb[0].mxu0
      %391 = vmatprep.mubr.bf16.mxu0 0
      %392 = vmatmul.mubr.bf16.gmra.mrb[0].mxu0 %v329
      %v393 = vpop.f32.mrb[0].mxu0
      %v394 = vadd.f32 0.0, %v393
      %v395 = vpop.f32.mrb[0].mxu0
      %v396 = vpop.f32.mrb[0].mxu0
      %v397 = vadd.f32 0.0, %v396
      %v398 = vpop.f32.mrb[0].mxu0
      %399 = vdwg.mxu0
      %v408 = vunpack.c.l.b16 %v172
      %v409 = vunpack.c.l.b16 %v173
      %v410 = vunpack.c.l.b16 %v174
      %v411 = vunpack.c.l.b16 %v175
      %v412 = vunpack.c.l.b16 %v176
      %v413 = vunpack.c.l.b16 %v177
      %v414 = vunpack.c.l.b16 %v178
      %v415 = vunpack.c.l.b16 %v179
      %v416 = vpack.c.b16 %v409, %v408
      %v417 = vpack.c.b16 %v411, %v410
      %v418 = vpack.c.b16 %v413, %v412
      %v419 = vpack.c.b16 %v415, %v414
      %v421 = vsel %vm318, %v416, 0
      %v424 = vsel %vm318, %v417, 0
      %v427 = vsel %vm318, %v418, 0
      %v430 = vsel %vm318, %v419, 0
      %v433 = vsel %vm331, %v180, 0
      %435 = vmatprep.subr.bf16.mxu0 0
      %436 = vmatpush1.bf16.msra.mxu0 %v433
      %437 = vmatprep.subr.bf16.mxu0 0
      %438 = vmatpush1.bf16.msra.mxu0 0
      %439 = vmatprep.subr.bf16.mxu0 0
      %440 = vmatpush1.bf16.msra.mxu0 0
      %441 = vmatprep.subr.bf16.mxu0 0
      %442 = vmatpush1.bf16.msra.mxu0 0
      %443 = vmatprep.subr.bf16.mxu0 0
      %444 = vmatpush1.bf16.msra.mxu0 0
      %445 = vmatprep.subr.bf16.mxu0 0
      %446 = vmatpush1.bf16.msra.mxu0 0
      %447 = vmatprep.subr.bf16.mxu0 0
      %448 = vmatpush1.bf16.msra.mxu0 0
      %449 = vmatprep.subr.bf16.mxu0 0
      %450 = vmatpush1.bf16.msra.mxu0 0
      %451 = vmatprep.subr.bf16.mxu0 0
      %452 = vmatpush1.bf16.msra.mxu0 0
      %453 = vmatprep.subr.bf16.mxu0 0
      %454 = vmatpush1.bf16.msra.mxu0 0
      %455 = vmatprep.subr.bf16.mxu0 0
      %456 = vmatpush1.bf16.msra.mxu0 0
      %457 = vmatprep.subr.bf16.mxu0 0
      %458 = vmatpush1.bf16.msra.mxu0 0
      %459 = vmatprep.subr.bf16.mxu0 0
      %460 = vmatpush1.bf16.msra.mxu0 0
      %461 = vmatprep.subr.bf16.mxu0 0
      %462 = vmatpush1.bf16.msra.mxu0 0
      %463 = vmatprep.subr.bf16.mxu0 0
      %464 = vmatpush1.bf16.msra.mxu0 0
      %465 = vmatprep.subr.bf16.mxu0 0
      %466 = vmatpush1.bf16.msra.mxu0 0
      %467 = vmatprep.mubr.bf16.mxu0 0
      %468 = vmatmul.mubr.bf16.gmra.mrb[0].mxu0 %v421
      %v469 = vpop.f32.mrb[0].mxu0
      %v470 = vadd.f32 %v370, %v469
      %v471 = vpop.f32.mrb[0].mxu0
      %v472 = vpop.f32.mrb[0].mxu0
      %v473 = vadd.f32 %v373, %v472
      %v474 = vpop.f32.mrb[0].mxu0
      %475 = vmatprep.mubr.bf16.mxu0 0
      %476 = vmatmul.mubr.bf16.gmra.mrb[0].mxu0 %v424
      %v477 = vpop.f32.mrb[0].mxu0
      %v478 = vadd.f32 %v378, %v477
      %v479 = vpop.f32.mrb[0].mxu0
      %v480 = vpop.f32.mrb[0].mxu0
      %v481 = vadd.f32 %v381, %v480
      %v482 = vpop.f32.mrb[0].mxu0
      %483 = vmatprep.mubr.bf16.mxu0 0
      %484 = vmatmul.mubr.bf16.gmra.mrb[0].mxu0 %v427
      %v485 = vpop.f32.mrb[0].mxu0
      %v486 = vadd.f32 %v386, %v485
      %v487 = vpop.f32.mrb[0].mxu0
      %v488 = vpop.f32.mrb[0].mxu0
      %v489 = vadd.f32 %v389, %v488
      %v490 = vpop.f32.mrb[0].mxu0
      %491 = vmatprep.mubr.bf16.mxu0 0
      %492 = vmatmul.mubr.bf16.gmra.mrb[0].mxu0 %v430
      %v493 = vpop.f32.mrb[0].mxu0
      %v494 = vadd.f32 %v394, %v493
      %v495 = vpop.f32.mrb[0].mxu0
      %v496 = vpop.f32.mrb[0].mxu0
      %v497 = vadd.f32 %v397, %v496
      %v498 = vpop.f32.mrb[0].mxu0
      %499 = vdwg.mxu0
      %v500 = vld [vmem:[%s165] sm:$0xe]
      %v501 = vld [vmem:[%s165 + $0x8] sm:$0xe]
      %v502 = vld [vmem:[%s165 + $0x10] sm:$0xe]
      %v503 = vld [vmem:[%s165 + $0x18] sm:$0xe]
      %v504 = vld [vmem:[%s165 + $0x20] sm:$0xe]
      %v505 = vld [vmem:[%s165 + $0x28] sm:$0xe]
      %v506 = vld [vmem:[%s165 + $0x30] sm:$0xe]
      %v507 = vld [vmem:[%s165 + $0x38] sm:$0xe]
      %vm524 = vcmask 1042432
      %vm525 = vcmask 1046532
      %vm526 = vmor %vm524, %vm525
      %v527 = vrot.slane %v500, 5
      %v528 = vrot.slane %v527, 4
      %v529 = vrot.slane %v181, 5
      %v530 = vsel %vm526, %v528, %v529
      %v531 = vrot.slane %v501, 5
      %v532 = vrot.slane %v531, 4
      %v533 = vrot.slane %v182, 5
      %v534 = vsel %vm526, %v532, %v533
      %v535 = vrot.slane %v502, 5
      %v536 = vrot.slane %v535, 4
      %v537 = vrot.slane %v183, 5
      %v538 = vsel %vm526, %v536, %v537
      %v539 = vrot.slane %v503, 5
      %v540 = vrot.slane %v539, 4
      %v541 = vrot.slane %v184, 5
      %v542 = vsel %vm526, %v540, %v541
      %v543 = vrot.slane %v504, 5
      %v544 = vrot.slane %v543, 4
      %v545 = vrot.slane %v185, 5
      %v546 = vsel %vm526, %v544, %v545
      %v547 = vrot.slane %v505, 5
      %v548 = vrot.slane %v547, 4
      %v549 = vrot.slane %v186, 5
      %v550 = vsel %vm526, %v548, %v549
      %v551 = vrot.slane %v506, 5
      %v552 = vrot.slane %v551, 4
      %v553 = vrot.slane %v187, 5
      %v554 = vsel %vm526, %v552, %v553
      %v555 = vrot.slane %v507, 5
      %v556 = vrot.slane %v555, 4
      %v557 = vrot.slane %v188, 5
      %v558 = vsel %vm526, %v556, %v557
      %s559 = scalar_lea.vmem %s1, 8
      %v560 = vld [vmem:[%s559] sm:$0xf]
      %v561 = vunpack.c.l.b16 %v530
      %v562 = vunpack.c.l.b16 %v534
      %v563 = vunpack.c.l.b16 %v538
      %v564 = vunpack.c.l.b16 %v542
      %v565 = vunpack.c.l.b16 %v546
      %v566 = vunpack.c.l.b16 %v550
      %v567 = vunpack.c.l.b16 %v554
      %v568 = vunpack.c.l.b16 %v558
      %v569 = vpack.c.b16 %v562, %v561
      %v570 = vpack.c.b16 %v564, %v563
      %v571 = vpack.c.b16 %v566, %v565
      %v572 = vpack.c.b16 %v568, %v567
      %v574 = vsel %vm318, %v569, 0
      %v577 = vsel %vm318, %v570, 0
      %v580 = vsel %vm318, %v571, 0
      %v583 = vsel %vm318, %v572, 0
      %v586 = vsel %vm331, %v560, 0
      %588 = vmatprep.subr.bf16.mxu0 0
      %589 = vmatpush1.bf16.msra.mxu0 %v586
      %590 = vmatprep.subr.bf16.mxu0 0
      %591 = vmatpush1.bf16.msra.mxu0 0
      %592 = vmatprep.subr.bf16.mxu0 0
      %593 = vmatpush1.bf16.msra.mxu0 0
      %594 = vmatprep.subr.bf16.mxu0 0
      %595 = vmatpush1.bf16.msra.mxu0 0
      %596 = vmatprep.subr.bf16.mxu0 0
      %597 = vmatpush1.bf16.msra.mxu0 0
      %598 = vmatprep.subr.bf16.mxu0 0
      %599 = vmatpush1.bf16.msra.mxu0 0
      %600 = vmatprep.subr.bf16.mxu0 0
      %601 = vmatpush1.bf16.msra.mxu0 0
      %602 = vmatprep.subr.bf16.mxu0 0
      %603 = vmatpush1.bf16.msra.mxu0 0
      %604 = vmatprep.subr.bf16.mxu0 0
      %605 = vmatpush1.bf16.msra.mxu0 0
      %606 = vmatprep.subr.bf16.mxu0 0
      %607 = vmatpush1.bf16.msra.mxu0 0
      %608 = vmatprep.subr.bf16.mxu0 0
      %609 = vmatpush1.bf16.msra.mxu0 0
      %610 = vmatprep.subr.bf16.mxu0 0
      %611 = vmatpush1.bf16.msra.mxu0 0
      %612 = vmatprep.subr.bf16.mxu0 0
      %613 = vmatpush1.bf16.msra.mxu0 0
      %614 = vmatprep.subr.bf16.mxu0 0
      %615 = vmatpush1.bf16.msra.mxu0 0
      %616 = vmatprep.subr.bf16.mxu0 0
      %617 = vmatpush1.bf16.msra.mxu0 0
      %618 = vmatprep.subr.bf16.mxu0 0
      %619 = vmatpush1.bf16.msra.mxu0 0
      %620 = vmatprep.mubr.bf16.mxu0 0
      %621 = vmatmul.mubr.bf16.gmra.mrb[0].mxu0 %v574
      %v622 = vpop.f32.mrb[0].mxu0
      %v623 = vadd.f32 0.0, %v622
      %v624 = vpop.f32.mrb[0].mxu0
      %v625 = vpop.f32.mrb[0].mxu0
      %v626 = vadd.f32 0.0, %v625
      %v627 = vpop.f32.mrb[0].mxu0
      %628 = vmatprep.mubr.bf16.mxu0 0
      %629 = vmatmul.mubr.bf16.gmra.mrb[0].mxu0 %v577
      %v630 = vpop.f32.mrb[0].mxu0
      %v631 = vadd.f32 0.0, %v630
      %v632 = vpop.f32.mrb[0].mxu0
      %v633 = vpop.f32.mrb[0].mxu0
      %v634 = vadd.f32 0.0, %v633
      %v635 = vpop.f32.mrb[0].mxu0
      %636 = vmatprep.mubr.bf16.mxu0 0
      %637 = vmatmul.mubr.bf16.gmra.mrb[0].mxu0 %v580
      %v638 = vpop.f32.mrb[0].mxu0
      %v639 = vadd.f32 0.0, %v638
      %v640 = vpop.f32.mrb[0].mxu0
      %v641 = vpop.f32.mrb[0].mxu0
      %v642 = vadd.f32 0.0, %v641
      %v643 = vpop.f32.mrb[0].mxu0
      %644 = vmatprep.mubr.bf16.mxu0 0
      %645 = vmatmul.mubr.bf16.gmra.mrb[0].mxu0 %v583
      %v646 = vpop.f32.mrb[0].mxu0
      %v647 = vadd.f32 0.0, %v646
      %v648 = vpop.f32.mrb[0].mxu0
      %v649 = vpop.f32.mrb[0].mxu0
      %v650 = vadd.f32 0.0, %v649
      %v651 = vpop.f32.mrb[0].mxu0
      %652 = vdwg.mxu0
      %v653 = vadd.f32 %v470, %v623
      %v654 = vadd.f32 %v473, %v626
      %v655 = vadd.f32 %v478, %v631
      %v656 = vadd.f32 %v481, %v634
      %v657 = vadd.f32 %v486, %v639
      %v658 = vadd.f32 %v489, %v642
      %v659 = vadd.f32 %v494, %v647
      %v660 = vadd.f32 %v497, %v650
      %s661 = scalar_lea.vmem %s165, 8
      %v662 = vld [vmem:[%s661] sm:$0xf]
      %v663 = vld [vmem:[%s661 + $0x8] sm:$0xf]
      %v664 = vld [vmem:[%s661 + $0x10] sm:$0xf]
      %v665 = vld [vmem:[%s661 + $0x18] sm:$0xf]
      %v666 = vld [vmem:[%s661 + $0x20] sm:$0xf]
      %v667 = vld [vmem:[%s661 + $0x28] sm:$0xf]
      %v668 = vld [vmem:[%s661 + $0x30] sm:$0xf]
      %v669 = vld [vmem:[%s661 + $0x38] sm:$0xf]
      %s670 = scalar_lea.vmem %s1, 12
      %v671 = vld [vmem:[%s670] sm:$0xf]
      %v680 = vunpack.c.l.b16 %v662
      %v681 = vunpack.c.l.b16 %v663
      %v682 = vunpack.c.l.b16 %v664
      %v683 = vunpack.c.l.b16 %v665
      %v684 = vunpack.c.l.b16 %v666
      %v685 = vunpack.c.l.b16 %v667
      %v686 = vunpack.c.l.b16 %v668
      %v687 = vunpack.c.l.b16 %v669
      %v688 = vpack.c.b16 %v681, %v680
      %v689 = vpack.c.b16 %v683, %v682
      %v690 = vpack.c.b16 %v685, %v684
      %v691 = vpack.c.b16 %v687, %v686
      %v693 = vsel %vm318, %v688, 0
      %v696 = vsel %vm318, %v689, 0
      %v699 = vsel %vm318, %v690, 0
      %v702 = vsel %vm318, %v691, 0
      %v705 = vsel %vm331, %v671, 0
      %707 = vmatprep.subr.bf16.mxu0 0
      %708 = vmatpush1.bf16.msra.mxu0 %v705
      %709 = vmatprep.subr.bf16.mxu0 0
      %710 = vmatpush1.bf16.msra.mxu0 0
      %711 = vmatprep.subr.bf16.mxu0 0
      %712 = vmatpush1.bf16.msra.mxu0 0
      %713 = vmatprep.subr.bf16.mxu0 0
      %714 = vmatpush1.bf16.msra.mxu0 0
      %715 = vmatprep.subr.bf16.mxu0 0
      %716 = vmatpush1.bf16.msra.mxu0 0
      %717 = vmatprep.subr.bf16.mxu0 0
      %718 = vmatpush1.bf16.msra.mxu0 0
      %719 = vmatprep.subr.bf16.mxu0 0
      %720 = vmatpush1.bf16.msra.mxu0 0
      %721 = vmatprep.subr.bf16.mxu0 0
      %722 = vmatpush1.bf16.msra.mxu0 0
      %723 = vmatprep.subr.bf16.mxu0 0
      %724 = vmatpush1.bf16.msra.mxu0 0
      %725 = vmatprep.subr.bf16.mxu0 0
      %726 = vmatpush1.bf16.msra.mxu0 0
      %727 = vmatprep.subr.bf16.mxu0 0
      %728 = vmatpush1.bf16.msra.mxu0 0
      %729 = vmatprep.subr.bf16.mxu0 0
      %730 = vmatpush1.bf16.msra.mxu0 0
      %731 = vmatprep.subr.bf16.mxu0 0
      %732 = vmatpush1.bf16.msra.mxu0 0
      %733 = vmatprep.subr.bf16.mxu0 0
      %734 = vmatpush1.bf16.msra.mxu0 0
      %735 = vmatprep.subr.bf16.mxu0 0
      %736 = vmatpush1.bf16.msra.mxu0 0
      %737 = vmatprep.subr.bf16.mxu0 0
      %738 = vmatpush1.bf16.msra.mxu0 0
      %739 = vmatprep.mubr.bf16.mxu0 0
      %740 = vmatmul.mubr.bf16.gmra.mrb[0].mxu0 %v693
      %v741 = vpop.f32.mrb[0].mxu0
      %v742 = vadd.f32 0.0, %v741
      %v743 = vpop.f32.mrb[0].mxu0
      %v744 = vpop.f32.mrb[0].mxu0
      %v745 = vadd.f32 0.0, %v744
      %v746 = vpop.f32.mrb[0].mxu0
      %747 = vmatprep.mubr.bf16.mxu0 0
      %748 = vmatmul.mubr.bf16.gmra.mrb[0].mxu0 %v696
      %v749 = vpop.f32.mrb[0].mxu0
      %v750 = vadd.f32 0.0, %v749
      %v751 = vpop.f32.mrb[0].mxu0
      %v752 = vpop.f32.mrb[0].mxu0
      %v753 = vadd.f32 0.0, %v752
      %v754 = vpop.f32.mrb[0].mxu0
      %755 = vmatprep.mubr.bf16.mxu0 0
      %756 = vmatmul.mubr.bf16.gmra.mrb[0].mxu0 %v699
      %v757 = vpop.f32.mrb[0].mxu0
      %v758 = vadd.f32 0.0, %v757
      %v759 = vpop.f32.mrb[0].mxu0
      %v760 = vpop.f32.mrb[0].mxu0
      %v761 = vadd.f32 0.0, %v760
      %v762 = vpop.f32.mrb[0].mxu0
      %763 = vmatprep.mubr.bf16.mxu0 0
      %764 = vmatmul.mubr.bf16.gmra.mrb[0].mxu0 %v702
      %v765 = vpop.f32.mrb[0].mxu0
      %v766 = vadd.f32 0.0, %v765
      %v767 = vpop.f32.mrb[0].mxu0
      %v768 = vpop.f32.mrb[0].mxu0
      %v769 = vadd.f32 0.0, %v768
      %v770 = vpop.f32.mrb[0].mxu0
      %771 = vdwg.mxu0
      %v772 = vadd.f32 %v653, %v742
      %v773 = vadd.f32 %v654, %v745
      %v774 = vadd.f32 %v655, %v750
      %v775 = vadd.f32 %v656, %v753
      %v776 = vadd.f32 %v657, %v758
      %v777 = vadd.f32 %v658, %v761
      %v778 = vadd.f32 %v659, %v766
      %v779 = vadd.f32 %v660, %v769
      %v780 = vld [vmem:[%s661] sm:$0xf]
      %v781 = vld [vmem:[%s661 + $0x4] sm:$0x1]
      %v782 = vld [vmem:[%s661 + $0x8] sm:$0xf]
      %v783 = vld [vmem:[%s661 + $0xc] sm:$0x1]
      %v784 = vld [vmem:[%s661 + $0x10] sm:$0xf]
      %v785 = vld [vmem:[%s661 + $0x14] sm:$0x1]
      %v786 = vld [vmem:[%s661 + $0x18] sm:$0xf]
      %v787 = vld [vmem:[%s661 + $0x1c] sm:$0x1]
      %v788 = vld [vmem:[%s661 + $0x20] sm:$0xf]
      %v789 = vld [vmem:[%s661 + $0x24] sm:$0x1]
      %v790 = vld [vmem:[%s661 + $0x28] sm:$0xf]
      %v791 = vld [vmem:[%s661 + $0x2c] sm:$0x1]
      %v792 = vld [vmem:[%s661 + $0x30] sm:$0xf]
      %v793 = vld [vmem:[%s661 + $0x34] sm:$0x1]
      %v794 = vld [vmem:[%s661 + $0x38] sm:$0xf]
      %v795 = vld [vmem:[%s661 + $0x3c] sm:$0x1]
      %v797 = vshrl.u32 %v780, 16
      %v799 = vrot.slane %v797, 4
      %v800 = vshll.u32 %v780, 16
      %v802 = vrot.slane %v800, 5
      %v803 = vor.u32 %v799, %v802
      %v804 = vrot.slane %v803, 4
      %v806 = vshll.u32 %v781, 16
      %v808 = vrot.slane %v806, 5
      %v809 = vsel %vm191, %v804, %v808
      %v811 = vshrl.u32 %v782, 16
      %v813 = vrot.slane %v811, 4
      %v814 = vshll.u32 %v782, 16
      %v816 = vrot.slane %v814, 5
      %v817 = vor.u32 %v813, %v816
      %v818 = vrot.slane %v817, 4
      %v820 = vshll.u32 %v783, 16
      %v822 = vrot.slane %v820, 5
      %v823 = vsel %vm191, %v818, %v822
      %v825 = vshrl.u32 %v784, 16
      %v827 = vrot.slane %v825, 4
      %v828 = vshll.u32 %v784, 16
      %v830 = vrot.slane %v828, 5
      %v831 = vor.u32 %v827, %v830
      %v832 = vrot.slane %v831, 4
      %v834 = vshll.u32 %v785, 16
      %v836 = vrot.slane %v834, 5
      %v837 = vsel %vm191, %v832, %v836
      %v839 = vshrl.u32 %v786, 16
      %v841 = vrot.slane %v839, 4
      %v842 = vshll.u32 %v786, 16
      %v844 = vrot.slane %v842, 5
      %v845 = vor.u32 %v841, %v844
      %v846 = vrot.slane %v845, 4
      %v848 = vshll.u32 %v787, 16
      %v850 = vrot.slane %v848, 5
      %v851 = vsel %vm191, %v846, %v850
      %v853 = vshrl.u32 %v788, 16
      %v855 = vrot.slane %v853, 4
      %v856 = vshll.u32 %v788, 16
      %v858 = vrot.slane %v856, 5
      %v859 = vor.u32 %v855, %v858
      %v860 = vrot.slane %v859, 4
      %v862 = vshll.u32 %v789, 16
      %v864 = vrot.slane %v862, 5
      %v865 = vsel %vm191, %v860, %v864
      %v867 = vshrl.u32 %v790, 16
      %v869 = vrot.slane %v867, 4
      %v870 = vshll.u32 %v790, 16
      %v872 = vrot.slane %v870, 5
      %v873 = vor.u32 %v869, %v872
      %v874 = vrot.slane %v873, 4
      %v876 = vshll.u32 %v791, 16
      %v878 = vrot.slane %v876, 5
      %v879 = vsel %vm191, %v874, %v878
      %v881 = vshrl.u32 %v792, 16
      %v883 = vrot.slane %v881, 4
      %v884 = vshll.u32 %v792, 16
      %v886 = vrot.slane %v884, 5
      %v887 = vor.u32 %v883, %v886
      %v888 = vrot.slane %v887, 4
      %v890 = vshll.u32 %v793, 16
      %v892 = vrot.slane %v890, 5
      %v893 = vsel %vm191, %v888, %v892
      %v895 = vshrl.u32 %v794, 16
      %v897 = vrot.slane %v895, 4
      %v898 = vshll.u32 %v794, 16
      %v900 = vrot.slane %v898, 5
      %v901 = vor.u32 %v897, %v900
      %v902 = vrot.slane %v901, 4
      %v904 = vshll.u32 %v795, 16
      %v906 = vrot.slane %v904, 5
      %v907 = vsel %vm191, %v902, %v906
      %s908 = scalar_lea.vmem %s1, 16
      %v909 = vld [vmem:[%s908] sm:$0xf]
      %v910 = vunpack.c.l.b16 %v809
      %v911 = vunpack.c.l.b16 %v823
      %v912 = vunpack.c.l.b16 %v837
      %v913 = vunpack.c.l.b16 %v851
      %v914 = vunpack.c.l.b16 %v865
      %v915 = vunpack.c.l.b16 %v879
      %v916 = vunpack.c.l.b16 %v893
      %v917 = vunpack.c.l.b16 %v907
      %v918 = vpack.c.b16 %v911, %v910
      %v919 = vpack.c.b16 %v913, %v912
      %v920 = vpack.c.b16 %v915, %v914
      %v921 = vpack.c.b16 %v917, %v916
      %v923 = vsel %vm318, %v918, 0
      %v926 = vsel %vm318, %v919, 0
      %v929 = vsel %vm318, %v920, 0
      %v932 = vsel %vm318, %v921, 0
      %v935 = vsel %vm331, %v909, 0
      %937 = vmatprep.subr.bf16.mxu0 0
      %938 = vmatpush1.bf16.msra.mxu0 %v935
      %939 = vmatprep.subr.bf16.mxu0 0
      %940 = vmatpush1.bf16.msra.mxu0 0
      %941 = vmatprep.subr.bf16.mxu0 0
      %942 = vmatpush1.bf16.msra.mxu0 0
      %943 = vmatprep.subr.bf16.mxu0 0
      %944 = vmatpush1.bf16.msra.mxu0 0
      %945 = vmatprep.subr.bf16.mxu0 0
      %946 = vmatpush1.bf16.msra.mxu0 0
      %947 = vmatprep.subr.bf16.mxu0 0
      %948 = vmatpush1.bf16.msra.mxu0 0
      %949 = vmatprep.subr.bf16.mxu0 0
      %950 = vmatpush1.bf16.msra.mxu0 0
      %951 = vmatprep.subr.bf16.mxu0 0
      %952 = vmatpush1.bf16.msra.mxu0 0
      %953 = vmatprep.subr.bf16.mxu0 0
      %954 = vmatpush1.bf16.msra.mxu0 0
      %955 = vmatprep.subr.bf16.mxu0 0
      %956 = vmatpush1.bf16.msra.mxu0 0
      %957 = vmatprep.subr.bf16.mxu0 0
      %958 = vmatpush1.bf16.msra.mxu0 0
      %959 = vmatprep.subr.bf16.mxu0 0
      %960 = vmatpush1.bf16.msra.mxu0 0
      %961 = vmatprep.subr.bf16.mxu0 0
      %962 = vmatpush1.bf16.msra.mxu0 0
      %963 = vmatprep.subr.bf16.mxu0 0
      %964 = vmatpush1.bf16.msra.mxu0 0
      %965 = vmatprep.subr.bf16.mxu0 0
      %966 = vmatpush1.bf16.msra.mxu0 0
      %967 = vmatprep.subr.bf16.mxu0 0
      %968 = vmatpush1.bf16.msra.mxu0 0
      %969 = vmatprep.mubr.bf16.mxu0 0
      %970 = vmatmul.mubr.bf16.gmra.mrb[0].mxu0 %v923
      %v971 = vpop.f32.mrb[0].mxu0
      %v972 = vadd.f32 0.0, %v971
      %v973 = vpop.f32.mrb[0].mxu0
      %v974 = vpop.f32.mrb[0].mxu0
      %v975 = vadd.f32 0.0, %v974
      %v976 = vpop.f32.mrb[0].mxu0
      %977 = vmatprep.mubr.bf16.mxu0 0
      %978 = vmatmul.mubr.bf16.gmra.mrb[0].mxu0 %v926
      %v979 = vpop.f32.mrb[0].mxu0
      %v980 = vadd.f32 0.0, %v979
      %v981 = vpop.f32.mrb[0].mxu0
      %v982 = vpop.f32.mrb[0].mxu0
      %v983 = vadd.f32 0.0, %v982
      %v984 = vpop.f32.mrb[0].mxu0
      %985 = vmatprep.mubr.bf16.mxu0 0
      %986 = vmatmul.mubr.bf16.gmra.mrb[0].mxu0 %v929
      %v987 = vpop.f32.mrb[0].mxu0
      %v988 = vadd.f32 0.0, %v987
      %v989 = vpop.f32.mrb[0].mxu0
      %v990 = vpop.f32.mrb[0].mxu0
      %v991 = vadd.f32 0.0, %v990
      %v992 = vpop.f32.mrb[0].mxu0
      %993 = vmatprep.mubr.bf16.mxu0 0
      %994 = vmatmul.mubr.bf16.gmra.mrb[0].mxu0 %v932
      %v995 = vpop.f32.mrb[0].mxu0
      %v996 = vadd.f32 0.0, %v995
      %v997 = vpop.f32.mrb[0].mxu0
      %v998 = vpop.f32.mrb[0].mxu0
      %v999 = vadd.f32 0.0, %v998
      %v1000 = vpop.f32.mrb[0].mxu0
      %1001 = vdwg.mxu0
      %v1002 = vadd.f32 %v772, %v972
      %v1003 = vadd.f32 %v773, %v975
      %v1004 = vadd.f32 %v774, %v980
      %v1005 = vadd.f32 %v775, %v983
      %v1006 = vadd.f32 %v776, %v988
      %v1007 = vadd.f32 %v777, %v991
      %v1008 = vadd.f32 %v778, %v996
      %v1009 = vadd.f32 %v779, %v999
      %v1010 = vld [vmem:[%s661] sm:$0xe]
      %v1011 = vld [vmem:[%s661 + $0x8] sm:$0xe]
      %v1012 = vld [vmem:[%s661 + $0x10] sm:$0xe]
      %v1013 = vld [vmem:[%s661 + $0x18] sm:$0xe]
      %v1014 = vld [vmem:[%s661 + $0x20] sm:$0xe]
      %v1015 = vld [vmem:[%s661 + $0x28] sm:$0xe]
      %v1016 = vld [vmem:[%s661 + $0x30] sm:$0xe]
      %v1017 = vld [vmem:[%s661 + $0x38] sm:$0xe]
      %v1034 = vrot.slane %v1010, 5
      %v1035 = vrot.slane %v1034, 4
      %v1036 = vrot.slane %v781, 5
      %v1037 = vsel %vm526, %v1035, %v1036
      %v1038 = vrot.slane %v1011, 5
      %v1039 = vrot.slane %v1038, 4
      %v1040 = vrot.slane %v783, 5
      %v1041 = vsel %vm526, %v1039, %v1040
      %v1042 = vrot.slane %v1012, 5
      %v1043 = vrot.slane %v1042, 4
      %v1044 = vrot.slane %v785, 5
      %v1045 = vsel %vm526, %v1043, %v1044
      %v1046 = vrot.slane %v1013, 5
      %v1047 = vrot.slane %v1046, 4
      %v1048 = vrot.slane %v787, 5
      %v1049 = vsel %vm526, %v1047, %v1048
      %v1050 = vrot.slane %v1014, 5
      %v1051 = vrot.slane %v1050, 4
      %v1052 = vrot.slane %v789, 5
      %v1053 = vsel %vm526, %v1051, %v1052
      %v1054 = vrot.slane %v1015, 5
      %v1055 = vrot.slane %v1054, 4
      %v1056 = vrot.slane %v791, 5
      %v1057 = vsel %vm526, %v1055, %v1056
      %v1058 = vrot.slane %v1016, 5
      %v1059 = vrot.slane %v1058, 4
      %v1060 = vrot.slane %v793, 5
      %v1061 = vsel %vm526, %v1059, %v1060
      %v1062 = vrot.slane %v1017, 5
      %v1063 = vrot.slane %v1062, 4
      %v1064 = vrot.slane %v795, 5
      %v1065 = vsel %vm526, %v1063, %v1064
      %s1066 = scalar_lea.vmem %s1, 20
      %v1067 = vld [vmem:[%s1066] sm:$0xf]
      %v1068 = vunpack.c.l.b16 %v1037
      %v1069 = vunpack.c.l.b16 %v1041
      %v1070 = vunpack.c.l.b16 %v1045
      %v1071 = vunpack.c.l.b16 %v1049
      %v1072 = vunpack.c.l.b16 %v1053
      %v1073 = vunpack.c.l.b16 %v1057
      %v1074 = vunpack.c.l.b16 %v1061
      %v1075 = vunpack.c.l.b16 %v1065
      %v1076 = vpack.c.b16 %v1069, %v1068
      %v1077 = vpack.c.b16 %v1071, %v1070
      %v1078 = vpack.c.b16 %v1073, %v1072
      %v1079 = vpack.c.b16 %v1075, %v1074
      %v1081 = vsel %vm318, %v1076, 0
      %v1084 = vsel %vm318, %v1077, 0
      %v1087 = vsel %vm318, %v1078, 0
      %v1090 = vsel %vm318, %v1079, 0
      %v1093 = vsel %vm331, %v1067, 0
      %1095 = vmatprep.subr.bf16.mxu0 0
      %1096 = vmatpush1.bf16.msra.mxu0 %v1093
      %1097 = vmatprep.subr.bf16.mxu0 0
      %1098 = vmatpush1.bf16.msra.mxu0 0
      %1099 = vmatprep.subr.bf16.mxu0 0
      %1100 = vmatpush1.bf16.msra.mxu0 0
      %1101 = vmatprep.subr.bf16.mxu0 0
      %1102 = vmatpush1.bf16.msra.mxu0 0
      %1103 = vmatprep.subr.bf16.mxu0 0
      %1104 = vmatpush1.bf16.msra.mxu0 0
      %1105 = vmatprep.subr.bf16.mxu0 0
      %1106 = vmatpush1.bf16.msra.mxu0 0
      %1107 = vmatprep.subr.bf16.mxu0 0
      %1108 = vmatpush1.bf16.msra.mxu0 0
      %1109 = vmatprep.subr.bf16.mxu0 0
      %1110 = vmatpush1.bf16.msra.mxu0 0
      %1111 = vmatprep.subr.bf16.mxu0 0
      %1112 = vmatpush1.bf16.msra.mxu0 0
      %1113 = vmatprep.subr.bf16.mxu0 0
      %1114 = vmatpush1.bf16.msra.mxu0 0
      %1115 = vmatprep.subr.bf16.mxu0 0
      %1116 = vmatpush1.bf16.msra.mxu0 0
      %1117 = vmatprep.subr.bf16.mxu0 0
      %1118 = vmatpush1.bf16.msra.mxu0 0
      %1119 = vmatprep.subr.bf16.mxu0 0
      %1120 = vmatpush1.bf16.msra.mxu0 0
      %1121 = vmatprep.subr.bf16.mxu0 0
      %1122 = vmatpush1.bf16.msra.mxu0 0
      %1123 = vmatprep.subr.bf16.mxu0 0
      %1124 = vmatpush1.bf16.msra.mxu0 0
      %1125 = vmatprep.subr.bf16.mxu0 0
      %1126 = vmatpush1.bf16.msra.mxu0 0
      %1127 = vmatprep.mubr.bf16.mxu0 0
      %1128 = vmatmul.mubr.bf16.gmra.mrb[0].mxu0 %v1081
      %v1129 = vpop.f32.mrb[0].mxu0
      %v1130 = vadd.f32 0.0, %v1129
      %v1131 = vpop.f32.mrb[0].mxu0
      %v1132 = vpop.f32.mrb[0].mxu0
      %v1133 = vadd.f32 0.0, %v1132
      %v1134 = vpop.f32.mrb[0].mxu0
      %1135 = vmatprep.mubr.bf16.mxu0 0
      %1136 = vmatmul.mubr.bf16.gmra.mrb[0].mxu0 %v1084
      %v1137 = vpop.f32.mrb[0].mxu0
      %v1138 = vadd.f32 0.0, %v1137
      %v1139 = vpop.f32.mrb[0].mxu0
      %v1140 = vpop.f32.mrb[0].mxu0
      %v1141 = vadd.f32 0.0, %v1140
      %v1142 = vpop.f32.mrb[0].mxu0
      %1143 = vmatprep.mubr.bf16.mxu0 0
      %1144 = vmatmul.mubr.bf16.gmra.mrb[0].mxu0 %v1087
      %v1145 = vpop.f32.mrb[0].mxu0
      %v1146 = vadd.f32 0.0, %v1145
      %v1147 = vpop.f32.mrb[0].mxu0
      %v1148 = vpop.f32.mrb[0].mxu0
      %v1149 = vadd.f32 0.0, %v1148
      %v1150 = vpop.f32.mrb[0].mxu0
      %1151 = vmatprep.mubr.bf16.mxu0 0
      %1152 = vmatmul.mubr.bf16.gmra.mrb[0].mxu0 %v1090
      %v1153 = vpop.f32.mrb[0].mxu0
      %v1154 = vadd.f32 0.0, %v1153
      %v1155 = vpop.f32.mrb[0].mxu0
      %v1156 = vpop.f32.mrb[0].mxu0
      %v1157 = vadd.f32 0.0, %v1156
      %v1158 = vpop.f32.mrb[0].mxu0
      %1159 = vdwg.mxu0
      %v1160 = vadd.f32 %v1002, %v1130
      %v1161 = vadd.f32 %v1003, %v1133
      %v1162 = vadd.f32 %v1004, %v1138
      %v1163 = vadd.f32 %v1005, %v1141
      %v1164 = vadd.f32 %v1006, %v1146
      %v1165 = vadd.f32 %v1007, %v1149
      %v1166 = vadd.f32 %v1008, %v1154
      %v1167 = vadd.f32 %v1009, %v1157
      %s1168 = scalar_lea.vmem %s165, 16
      %v1169 = vld [vmem:[%s1168] sm:$0xf]
      %v1170 = vld [vmem:[%s1168 + $0x8] sm:$0xf]
      %v1171 = vld [vmem:[%s1168 + $0x10] sm:$0xf]
      %v1172 = vld [vmem:[%s1168 + $0x18] sm:$0xf]
      %v1173 = vld [vmem:[%s1168 + $0x20] sm:$0xf]
      %v1174 = vld [vmem:[%s1168 + $0x28] sm:$0xf]
      %v1175 = vld [vmem:[%s1168 + $0x30] sm:$0xf]
      %v1176 = vld [vmem:[%s1168 + $0x38] sm:$0xf]
      %s1177 = scalar_lea.vmem %s1, 24
      %v1178 = vld [vmem:[%s1177] sm:$0xf]
      %v1187 = vunpack.c.l.b16 %v1169
      %v1188 = vunpack.c.l.b16 %v1170
      %v1189 = vunpack.c.l.b16 %v1171
      %v1190 = vunpack.c.l.b16 %v1172
      %v1191 = vunpack.c.l.b16 %v1173
      %v1192 = vunpack.c.l.b16 %v1174
      %v1193 = vunpack.c.l.b16 %v1175
      %v1194 = vunpack.c.l.b16 %v1176
      %v1195 = vpack.c.b16 %v1188, %v1187
      %v1196 = vpack.c.b16 %v1190, %v1189
      %v1197 = vpack.c.b16 %v1192, %v1191
      %v1198 = vpack.c.b16 %v1194, %v1193
      %v1200 = vsel %vm318, %v1195, 0
      %v1203 = vsel %vm318, %v1196, 0
      %v1206 = vsel %vm318, %v1197, 0
      %v1209 = vsel %vm318, %v1198, 0
      %v1212 = vsel %vm331, %v1178, 0
      %1214 = vmatprep.subr.bf16.mxu0 0
      %1215 = vmatpush1.bf16.msra.mxu0 %v1212
      %1216 = vmatprep.subr.bf16.mxu0 0
      %1217 = vmatpush1.bf16.msra.mxu0 0
      %1218 = vmatprep.subr.bf16.mxu0 0
      %1219 = vmatpush1.bf16.msra.mxu0 0
      %1220 = vmatprep.subr.bf16.mxu0 0
      %1221 = vmatpush1.bf16.msra.mxu0 0
      %1222 = vmatprep.subr.bf16.mxu0 0
      %1223 = vmatpush1.bf16.msra.mxu0 0
      %1224 = vmatprep.subr.bf16.mxu0 0
      %1225 = vmatpush1.bf16.msra.mxu0 0
      %1226 = vmatprep.subr.bf16.mxu0 0
      %1227 = vmatpush1.bf16.msra.mxu0 0
      %1228 = vmatprep.subr.bf16.mxu0 0
      %1229 = vmatpush1.bf16.msra.mxu0 0
      %1230 = vmatprep.subr.bf16.mxu0 0
      %1231 = vmatpush1.bf16.msra.mxu0 0
      %1232 = vmatprep.subr.bf16.mxu0 0
      %1233 = vmatpush1.bf16.msra.mxu0 0
      %1234 = vmatprep.subr.bf16.mxu0 0
      %1235 = vmatpush1.bf16.msra.mxu0 0
      %1236 = vmatprep.subr.bf16.mxu0 0
      %1237 = vmatpush1.bf16.msra.mxu0 0
      %1238 = vmatprep.subr.bf16.mxu0 0
      %1239 = vmatpush1.bf16.msra.mxu0 0
      %1240 = vmatprep.subr.bf16.mxu0 0
      %1241 = vmatpush1.bf16.msra.mxu0 0
      %1242 = vmatprep.subr.bf16.mxu0 0
      %1243 = vmatpush1.bf16.msra.mxu0 0
      %1244 = vmatprep.subr.bf16.mxu0 0
      %1245 = vmatpush1.bf16.msra.mxu0 0
      %1246 = vmatprep.mubr.bf16.mxu0 0
      %1247 = vmatmul.mubr.bf16.gmra.mrb[0].mxu0 %v1200
      %v1248 = vpop.f32.mrb[0].mxu0
      %v1249 = vadd.f32 0.0, %v1248
      %v1250 = vpop.f32.mrb[0].mxu0
      %v1251 = vpop.f32.mrb[0].mxu0
      %v1252 = vadd.f32 0.0, %v1251
      %v1253 = vpop.f32.mrb[0].mxu0
      %1254 = vmatprep.mubr.bf16.mxu0 0
      %1255 = vmatmul.mubr.bf16.gmra.mrb[0].mxu0 %v1203
      %v1256 = vpop.f32.mrb[0].mxu0
      %v1257 = vadd.f32 0.0, %v1256
      %v1258 = vpop.f32.mrb[0].mxu0
      %v1259 = vpop.f32.mrb[0].mxu0
      %v1260 = vadd.f32 0.0, %v1259
      %v1261 = vpop.f32.mrb[0].mxu0
      %1262 = vmatprep.mubr.bf16.mxu0 0
      %1263 = vmatmul.mubr.bf16.gmra.mrb[0].mxu0 %v1206
      %v1264 = vpop.f32.mrb[0].mxu0
      %v1265 = vadd.f32 0.0, %v1264
      %v1266 = vpop.f32.mrb[0].mxu0
      %v1267 = vpop.f32.mrb[0].mxu0
      %v1268 = vadd.f32 0.0, %v1267
      %v1269 = vpop.f32.mrb[0].mxu0
      %1270 = vmatprep.mubr.bf16.mxu0 0
      %1271 = vmatmul.mubr.bf16.gmra.mrb[0].mxu0 %v1209
      %v1272 = vpop.f32.mrb[0].mxu0
      %v1273 = vadd.f32 0.0, %v1272
      %v1274 = vpop.f32.mrb[0].mxu0
      %v1275 = vpop.f32.mrb[0].mxu0
      %v1276 = vadd.f32 0.0, %v1275
      %v1277 = vpop.f32.mrb[0].mxu0
      %1278 = vdwg.mxu0
      %v1279 = vadd.f32 %v1160, %v1249
      %v1280 = vadd.f32 %v1161, %v1252
      %v1281 = vadd.f32 %v1162, %v1257
      %v1282 = vadd.f32 %v1163, %v1260
      %v1283 = vadd.f32 %v1164, %v1265
      %v1284 = vadd.f32 %v1165, %v1268
      %v1285 = vadd.f32 %v1166, %v1273
      %v1286 = vadd.f32 %v1167, %v1276
      %v1287 = vld [vmem:[%s1168] sm:$0xf]
      %v1288 = vld [vmem:[%s1168 + $0x4] sm:$0x1]
      %v1289 = vld [vmem:[%s1168 + $0x8] sm:$0xf]
      %v1290 = vld [vmem:[%s1168 + $0xc] sm:$0x1]
      %v1291 = vld [vmem:[%s1168 + $0x10] sm:$0xf]
      %v1292 = vld [vmem:[%s1168 + $0x14] sm:$0x1]
      %v1293 = vld [vmem:[%s1168 + $0x18] sm:$0xf]
      %v1294 = vld [vmem:[%s1168 + $0x1c] sm:$0x1]
      %v1295 = vld [vmem:[%s1168 + $0x20] sm:$0xf]
      %v1296 = vld [vmem:[%s1168 + $0x24] sm:$0x1]
      %v1297 = vld [vmem:[%s1168 + $0x28] sm:$0xf]
      %v1298 = vld [vmem:[%s1168 + $0x2c] sm:$0x1]
      %v1299 = vld [vmem:[%s1168 + $0x30] sm:$0xf]
      %v1300 = vld [vmem:[%s1168 + $0x34] sm:$0x1]
      %v1301 = vld [vmem:[%s1168 + $0x38] sm:$0xf]
      %v1302 = vld [vmem:[%s1168 + $0x3c] sm:$0x1]
      %v1304 = vshrl.u32 %v1287, 16
      %v1306 = vrot.slane %v1304, 4
      %v1307 = vshll.u32 %v1287, 16
      %v1309 = vrot.slane %v1307, 5
      %v1310 = vor.u32 %v1306, %v1309
      %v1311 = vrot.slane %v1310, 4
      %v1313 = vshll.u32 %v1288, 16
      %v1315 = vrot.slane %v1313, 5
      %v1316 = vsel %vm191, %v1311, %v1315
      %v1318 = vshrl.u32 %v1289, 16
      %v1320 = vrot.slane %v1318, 4
      %v1321 = vshll.u32 %v1289, 16
      %v1323 = vrot.slane %v1321, 5
      %v1324 = vor.u32 %v1320, %v1323
      %v1325 = vrot.slane %v1324, 4
      %v1327 = vshll.u32 %v1290, 16
      %v1329 = vrot.slane %v1327, 5
      %v1330 = vsel %vm191, %v1325, %v1329
      %v1332 = vshrl.u32 %v1291, 16
      %v1334 = vrot.slane %v1332, 4
      %v1335 = vshll.u32 %v1291, 16
      %v1337 = vrot.slane %v1335, 5
      %v1338 = vor.u32 %v1334, %v1337
      %v1339 = vrot.slane %v1338, 4
      %v1341 = vshll.u32 %v1292, 16
      %v1343 = vrot.slane %v1341, 5
      %v1344 = vsel %vm191, %v1339, %v1343
      %v1346 = vshrl.u32 %v1293, 16
      %v1348 = vrot.slane %v1346, 4
      %v1349 = vshll.u32 %v1293, 16
      %v1351 = vrot.slane %v1349, 5
      %v1352 = vor.u32 %v1348, %v1351
      %v1353 = vrot.slane %v1352, 4
      %v1355 = vshll.u32 %v1294, 16
      %v1357 = vrot.slane %v1355, 5
      %v1358 = vsel %vm191, %v1353, %v1357
      %v1360 = vshrl.u32 %v1295, 16
      %v1362 = vrot.slane %v1360, 4
      %v1363 = vshll.u32 %v1295, 16
      %v1365 = vrot.slane %v1363, 5
      %v1366 = vor.u32 %v1362, %v1365
      %v1367 = vrot.slane %v1366, 4
      %v1369 = vshll.u32 %v1296, 16
      %v1371 = vrot.slane %v1369, 5
      %v1372 = vsel %vm191, %v1367, %v1371
      %v1374 = vshrl.u32 %v1297, 16
      %v1376 = vrot.slane %v1374, 4
      %v1377 = vshll.u32 %v1297, 16
      %v1379 = vrot.slane %v1377, 5
      %v1380 = vor.u32 %v1376, %v1379
      %v1381 = vrot.slane %v1380, 4
      %v1383 = vshll.u32 %v1298, 16
      %v1385 = vrot.slane %v1383, 5
      %v1386 = vsel %vm191, %v1381, %v1385
      %v1388 = vshrl.u32 %v1299, 16
      %v1390 = vrot.slane %v1388, 4
      %v1391 = vshll.u32 %v1299, 16
      %v1393 = vrot.slane %v1391, 5
      %v1394 = vor.u32 %v1390, %v1393
      %v1395 = vrot.slane %v1394, 4
      %v1397 = vshll.u32 %v1300, 16
      %v1399 = vrot.slane %v1397, 5
      %v1400 = vsel %vm191, %v1395, %v1399
      %v1402 = vshrl.u32 %v1301, 16
      %v1404 = vrot.slane %v1402, 4
      %v1405 = vshll.u32 %v1301, 16
      %v1407 = vrot.slane %v1405, 5
      %v1408 = vor.u32 %v1404, %v1407
      %v1409 = vrot.slane %v1408, 4
      %v1411 = vshll.u32 %v1302, 16
      %v1413 = vrot.slane %v1411, 5
      %v1414 = vsel %vm191, %v1409, %v1413
      %s1415 = scalar_lea.vmem %s1, 28
      %v1416 = vld [vmem:[%s1415] sm:$0xf]
      %v1417 = vunpack.c.l.b16 %v1316
      %v1418 = vunpack.c.l.b16 %v1330
      %v1419 = vunpack.c.l.b16 %v1344
      %v1420 = vunpack.c.l.b16 %v1358
      %v1421 = vunpack.c.l.b16 %v1372
      %v1422 = vunpack.c.l.b16 %v1386
      %v1423 = vunpack.c.l.b16 %v1400
      %v1424 = vunpack.c.l.b16 %v1414
      %v1425 = vpack.c.b16 %v1418, %v1417
      %v1426 = vpack.c.b16 %v1420, %v1419
      %v1427 = vpack.c.b16 %v1422, %v1421
      %v1428 = vpack.c.b16 %v1424, %v1423
      %v1430 = vsel %vm318, %v1425, 0
      %v1433 = vsel %vm318, %v1426, 0
      %v1436 = vsel %vm318, %v1427, 0
      %v1439 = vsel %vm318, %v1428, 0
      %v1442 = vsel %vm331, %v1416, 0
      %1444 = vmatprep.subr.bf16.mxu0 0
      %1445 = vmatpush1.bf16.msra.mxu0 %v1442
      %1446 = vmatprep.subr.bf16.mxu0 0
      %1447 = vmatpush1.bf16.msra.mxu0 0
      %1448 = vmatprep.subr.bf16.mxu0 0
      %1449 = vmatpush1.bf16.msra.mxu0 0
      %1450 = vmatprep.subr.bf16.mxu0 0
      %1451 = vmatpush1.bf16.msra.mxu0 0
      %1452 = vmatprep.subr.bf16.mxu0 0
      %1453 = vmatpush1.bf16.msra.mxu0 0
      %1454 = vmatprep.subr.bf16.mxu0 0
      %1455 = vmatpush1.bf16.msra.mxu0 0
      %1456 = vmatprep.subr.bf16.mxu0 0
      %1457 = vmatpush1.bf16.msra.mxu0 0
      %1458 = vmatprep.subr.bf16.mxu0 0
      %1459 = vmatpush1.bf16.msra.mxu0 0
      %1460 = vmatprep.subr.bf16.mxu0 0
      %1461 = vmatpush1.bf16.msra.mxu0 0
      %1462 = vmatprep.subr.bf16.mxu0 0
      %1463 = vmatpush1.bf16.msra.mxu0 0
      %1464 = vmatprep.subr.bf16.mxu0 0
      %1465 = vmatpush1.bf16.msra.mxu0 0
      %1466 = vmatprep.subr.bf16.mxu0 0
      %1467 = vmatpush1.bf16.msra.mxu0 0
      %1468 = vmatprep.subr.bf16.mxu0 0
      %1469 = vmatpush1.bf16.msra.mxu0 0
      %1470 = vmatprep.subr.bf16.mxu0 0
      %1471 = vmatpush1.bf16.msra.mxu0 0
      %1472 = vmatprep.subr.bf16.mxu0 0
      %1473 = vmatpush1.bf16.msra.mxu0 0
      %1474 = vmatprep.subr.bf16.mxu0 0
      %1475 = vmatpush1.bf16.msra.mxu0 0
      %1476 = vmatprep.mubr.bf16.mxu0 0
      %1477 = vmatmul.mubr.bf16.gmra.mrb[0].mxu0 %v1430
      %v1478 = vpop.f32.mrb[0].mxu0
      %v1479 = vadd.f32 0.0, %v1478
      %v1480 = vpop.f32.mrb[0].mxu0
      %v1481 = vpop.f32.mrb[0].mxu0
      %v1482 = vadd.f32 0.0, %v1481
      %v1483 = vpop.f32.mrb[0].mxu0
      %1484 = vmatprep.mubr.bf16.mxu0 0
      %1485 = vmatmul.mubr.bf16.gmra.mrb[0].mxu0 %v1433
      %v1486 = vpop.f32.mrb[0].mxu0
      %v1487 = vadd.f32 0.0, %v1486
      %v1488 = vpop.f32.mrb[0].mxu0
      %v1489 = vpop.f32.mrb[0].mxu0
      %v1490 = vadd.f32 0.0, %v1489
      %v1491 = vpop.f32.mrb[0].mxu0
      %1492 = vmatprep.mubr.bf16.mxu0 0
      %1493 = vmatmul.mubr.bf16.gmra.mrb[0].mxu0 %v1436
      %v1494 = vpop.f32.mrb[0].mxu0
      %v1495 = vadd.f32 0.0, %v1494
      %v1496 = vpop.f32.mrb[0].mxu0
      %v1497 = vpop.f32.mrb[0].mxu0
      %v1498 = vadd.f32 0.0, %v1497
      %v1499 = vpop.f32.mrb[0].mxu0
      %1500 = vmatprep.mubr.bf16.mxu0 0
      %1501 = vmatmul.mubr.bf16.gmra.mrb[0].mxu0 %v1439
      %v1502 = vpop.f32.mrb[0].mxu0
      %v1503 = vadd.f32 0.0, %v1502
      %v1504 = vpop.f32.mrb[0].mxu0
      %v1505 = vpop.f32.mrb[0].mxu0
      %v1506 = vadd.f32 0.0, %v1505
      %v1507 = vpop.f32.mrb[0].mxu0
      %1508 = vdwg.mxu0
      %v1509 = vadd.f32 %v1279, %v1479
      %v1510 = vadd.f32 %v1280, %v1482
      %v1511 = vadd.f32 %v1281, %v1487
      %v1512 = vadd.f32 %v1282, %v1490
      %v1513 = vadd.f32 %v1283, %v1495
      %v1514 = vadd.f32 %v1284, %v1498
      %v1515 = vadd.f32 %v1285, %v1503
      %v1516 = vadd.f32 %v1286, %v1506
      %v1517 = vld [vmem:[%s1168] sm:$0xe]
      %v1518 = vld [vmem:[%s1168 + $0x8] sm:$0xe]
      %v1519 = vld [vmem:[%s1168 + $0x10] sm:$0xe]
      %v1520 = vld [vmem:[%s1168 + $0x18] sm:$0xe]
      %v1521 = vld [vmem:[%s1168 + $0x20] sm:$0xe]
      %v1522 = vld [vmem:[%s1168 + $0x28] sm:$0xe]
      %v1523 = vld [vmem:[%s1168 + $0x30] sm:$0xe]
      %v1524 = vld [vmem:[%s1168 + $0x38] sm:$0xe]
      %v1541 = vrot.slane %v1517, 5
      %v1542 = vrot.slane %v1541, 4
      %v1543 = vrot.slane %v1288, 5
      %v1544 = vsel %vm526, %v1542, %v1543
      %v1545 = vrot.slane %v1518, 5
      %v1546 = vrot.slane %v1545, 4
      %v1547 = vrot.slane %v1290, 5
      %v1548 = vsel %vm526, %v1546, %v1547
      %v1549 = vrot.slane %v1519, 5
      %v1550 = vrot.slane %v1549, 4
      %v1551 = vrot.slane %v1292, 5
      %v1552 = vsel %vm526, %v1550, %v1551
      %v1553 = vrot.slane %v1520, 5
      %v1554 = vrot.slane %v1553, 4
      %v1555 = vrot.slane %v1294, 5
      %v1556 = vsel %vm526, %v1554, %v1555
      %v1557 = vrot.slane %v1521, 5
      %v1558 = vrot.slane %v1557, 4
      %v1559 = vrot.slane %v1296, 5
      %v1560 = vsel %vm526, %v1558, %v1559
      %v1561 = vrot.slane %v1522, 5
      %v1562 = vrot.slane %v1561, 4
      %v1563 = vrot.slane %v1298, 5
      %v1564 = vsel %vm526, %v1562, %v1563
      %v1565 = vrot.slane %v1523, 5
      %v1566 = vrot.slane %v1565, 4
      %v1567 = vrot.slane %v1300, 5
      %v1568 = vsel %vm526, %v1566, %v1567
      %v1569 = vrot.slane %v1524, 5
      %v1570 = vrot.slane %v1569, 4
      %v1571 = vrot.slane %v1302, 5
      %v1572 = vsel %vm526, %v1570, %v1571
      %s1573 = scalar_lea.vmem %s1, 32
      %v1574 = vld [vmem:[%s1573] sm:$0xf]
      %v1575 = vunpack.c.l.b16 %v1544
      %v1576 = vunpack.c.l.b16 %v1548
      %v1577 = vunpack.c.l.b16 %v1552
      %v1578 = vunpack.c.l.b16 %v1556
      %v1579 = vunpack.c.l.b16 %v1560
      %v1580 = vunpack.c.l.b16 %v1564
      %v1581 = vunpack.c.l.b16 %v1568
      %v1582 = vunpack.c.l.b16 %v1572
      %v1583 = vpack.c.b16 %v1576, %v1575
      %v1584 = vpack.c.b16 %v1578, %v1577
      %v1585 = vpack.c.b16 %v1580, %v1579
      %v1586 = vpack.c.b16 %v1582, %v1581
      %v1588 = vsel %vm318, %v1583, 0
      %v1591 = vsel %vm318, %v1584, 0
      %v1594 = vsel %vm318, %v1585, 0
      %v1597 = vsel %vm318, %v1586, 0
      %v1600 = vsel %vm331, %v1574, 0
      %1602 = vmatprep.subr.bf16.mxu0 0
      %1603 = vmatpush1.bf16.msra.mxu0 %v1600
      %1604 = vmatprep.subr.bf16.mxu0 0
      %1605 = vmatpush1.bf16.msra.mxu0 0
      %1606 = vmatprep.subr.bf16.mxu0 0
      %1607 = vmatpush1.bf16.msra.mxu0 0
      %1608 = vmatprep.subr.bf16.mxu0 0
      %1609 = vmatpush1.bf16.msra.mxu0 0
      %1610 = vmatprep.subr.bf16.mxu0 0
      %1611 = vmatpush1.bf16.msra.mxu0 0
      %1612 = vmatprep.subr.bf16.mxu0 0
      %1613 = vmatpush1.bf16.msra.mxu0 0
      %1614 = vmatprep.subr.bf16.mxu0 0
      %1615 = vmatpush1.bf16.msra.mxu0 0
      %1616 = vmatprep.subr.bf16.mxu0 0
      %1617 = vmatpush1.bf16.msra.mxu0 0
      %1618 = vmatprep.subr.bf16.mxu0 0
      %1619 = vmatpush1.bf16.msra.mxu0 0
      %1620 = vmatprep.subr.bf16.mxu0 0
      %1621 = vmatpush1.bf16.msra.mxu0 0
      %1622 = vmatprep.subr.bf16.mxu0 0
      %1623 = vmatpush1.bf16.msra.mxu0 0
      %1624 = vmatprep.subr.bf16.mxu0 0
      %1625 = vmatpush1.bf16.msra.mxu0 0
      %1626 = vmatprep.subr.bf16.mxu0 0
      %1627 = vmatpush1.bf16.msra.mxu0 0
      %1628 = vmatprep.subr.bf16.mxu0 0
      %1629 = vmatpush1.bf16.msra.mxu0 0
      %1630 = vmatprep.subr.bf16.mxu0 0
      %1631 = vmatpush1.bf16.msra.mxu0 0
      %1632 = vmatprep.subr.bf16.mxu0 0
      %1633 = vmatpush1.bf16.msra.mxu0 0
      %1634 = vmatprep.mubr.bf16.mxu0 0
      %1635 = vmatmul.mubr.bf16.gmra.mrb[0].mxu0 %v1588
      %v1636 = vpop.f32.mrb[0].mxu0
      %v1637 = vadd.f32 0.0, %v1636
      %v1638 = vpop.f32.mrb[0].mxu0
      %v1639 = vpop.f32.mrb[0].mxu0
      %v1640 = vadd.f32 0.0, %v1639
      %v1641 = vpop.f32.mrb[0].mxu0
      %1642 = vmatprep.mubr.bf16.mxu0 0
      %1643 = vmatmul.mubr.bf16.gmra.mrb[0].mxu0 %v1591
      %v1644 = vpop.f32.mrb[0].mxu0
      %v1645 = vadd.f32 0.0, %v1644
      %v1646 = vpop.f32.mrb[0].mxu0
      %v1647 = vpop.f32.mrb[0].mxu0
      %v1648 = vadd.f32 0.0, %v1647
      %v1649 = vpop.f32.mrb[0].mxu0
      %1650 = vmatprep.mubr.bf16.mxu0 0
      %1651 = vmatmul.mubr.bf16.gmra.mrb[0].mxu0 %v1594
      %v1652 = vpop.f32.mrb[0].mxu0
      %v1653 = vadd.f32 0.0, %v1652
      %v1654 = vpop.f32.mrb[0].mxu0
      %v1655 = vpop.f32.mrb[0].mxu0
      %v1656 = vadd.f32 0.0, %v1655
      %v1657 = vpop.f32.mrb[0].mxu0
      %1658 = vmatprep.mubr.bf16.mxu0 0
      %1659 = vmatmul.mubr.bf16.gmra.mrb[0].mxu0 %v1597
      %v1660 = vpop.f32.mrb[0].mxu0
      %v1661 = vadd.f32 0.0, %v1660
      %v1662 = vpop.f32.mrb[0].mxu0
      %v1663 = vpop.f32.mrb[0].mxu0
      %v1664 = vadd.f32 0.0, %v1663
      %v1665 = vpop.f32.mrb[0].mxu0
      %1666 = vdwg.mxu0
      %v1667 = vadd.f32 %v1509, %v1637
      %v1668 = vadd.f32 %v1510, %v1640
      %v1669 = vadd.f32 %v1511, %v1645
      %v1670 = vadd.f32 %v1512, %v1648
      %v1671 = vadd.f32 %v1513, %v1653
      %v1672 = vadd.f32 %v1514, %v1656
      %v1673 = vadd.f32 %v1515, %v1661
      %v1674 = vadd.f32 %v1516, %v1664
      %v1675 = vld [vmem:[%s2] sm:$0x1]
      %v1677 = vlaneseq
      %v1678 = vshrl.u32 %v1677, 7
      %v1679 = vsub.s32 0, %v1678
      %v1680 = vrot.slane %v1675, %v1679
      %v1682 = vadd.f32 %v1667, %v1680
      %v1683 = vadd.f32 %v1668, %v1680
      %v1684 = vadd.f32 %v1669, %v1680
      %v1685 = vadd.f32 %v1670, %v1680
      %v1686 = vadd.f32 %v1671, %v1680
      %v1687 = vadd.f32 %v1672, %v1680
      %v1688 = vadd.f32 %v1673, %v1680
      %v1689 = vadd.f32 %v1674, %v1680
      %v1690 = vpack.c.bf16 %v1682, %v1682
      %v1691 = vpack.c.bf16 %v1683, %v1683
      %v1692 = vpack.c.bf16 %v1684, %v1684
      %v1693 = vpack.c.bf16 %v1685, %v1685
      %v1694 = vpack.c.bf16 %v1686, %v1686
      %v1695 = vpack.c.bf16 %v1687, %v1687
      %v1696 = vpack.c.bf16 %v1688, %v1688
      %v1697 = vpack.c.bf16 %v1689, %v1689
      %vm1698 = vcmask 60416
      %1699 = vst.msk [vmem:[%s170] sm:$0xf] %vm1698, %v1690
      %1700 = vst.msk [vmem:[%s170 + $0x4] sm:$0xf] %vm1698, %v1691
      %1701 = vst.msk [vmem:[%s170 + $0x8] sm:$0xf] %vm1698, %v1692
      %1702 = vst.msk [vmem:[%s170 + $0xc] sm:$0xf] %vm1698, %v1693
      %1703 = vst.msk [vmem:[%s170 + $0x10] sm:$0xf] %vm1698, %v1694
      %1704 = vst.msk [vmem:[%s170 + $0x14] sm:$0xf] %vm1698, %v1695
      %1705 = vst.msk [vmem:[%s170 + $0x18] sm:$0xf] %vm1698, %v1696
      %1706 = vst.msk [vmem:[%s170 + $0x1c] sm:$0xf] %vm1698, %v1697
      %p1707 = scmp.lt.s32.totalorder %s14, 1
      %s1708 = scalar_select %p1707, %s14, 1
      %s1709 = smul.addr %s1708, 8
      %s1710 = smul.addr %s1709, 4
      %s1711 = scalar_lea.vmem %s3, %s1710
      // Predicated region
      $region33: #{down_forward.12} parent=31 // pred_check
        %p1712 = pneg %p100
      $region34: #{down_forward.12} parent=31 // pred_check_branch
        %1714 = sbr.rel (%p1712) target = $region36
      $region35: #{down_forward.12} parent=31 // pred_region
        _
      $region36: #{down_forward.12} parent=31 // pred_fallthru
        _
    $region32: #{down_forward.12} parent=5 // pred_fallthru
      _
    %p1715 = scmp.le.s32.totalorder 2, %s9
    // Predicated region
    $region37: #{down_forward.12} parent=5 // pred_check
      %p1716 = pneg %p1715
    $region38: #{down_forward.12} parent=5 // pred_check_branch
      %1718 = sbr.rel (%p1716) target = $region40
    $region39: #{down_forward.12} parent=5 // pred_region
      %s1719 = ssub.s32 %s9, 2
      // Predicated region
      $region41: #{down_forward.12} parent=39 // pred_check
        %p1720 = pneg %p106
      $region42: #{down_forward.12} parent=39 // pred_check_branch
        %1722 = sbr.rel (%p1720) target = $region44
      $region43: #{down_forward.12} parent=39 // pred_region
        %p1723 = scmp.lt.s32.totalorder %s15, 1
        %s1724 = scalar_select %p1723, %s15, 1
        %s1725 = smul.addr %s1724, 8
        %s1726 = smul.addr %s1725, 4
        %s1727 = scalar_lea.vmem %s3, %s1726
      $region44: #{down_forward.12} parent=39 // pred_fallthru
        _
    $region40: #{down_forward.12} parent=5 // pred_fallthru
      _
  $region6: #{down_forward.12} parent=0 // loop_footer
    %s13 = sadd.s32 1, %s9
  $region7: #{down_forward.12} parent=0 // loop_footer_branch
    %8 = sbr.rel target = $region3
  $region8: #{down_forward.12} parent=0 // loop_exit
    _

</llo_original>
